<compile_context>
chip_gen: v5e
topology: v5e:2x2
jax: 0.10.0
libtpu: 0.0.40
codegen_flags: <defaults>
</compile_context>

<pallas_src>
import jax
import jax.numpy as jnp
import numpy as np
from jax.experimental import pallas as pl


# ------------------------------ fused kernel --------------------------------

def _dcnn_fused_kernel(emb_ref, nx_ref,
                       we1_ref, be1_ref, we2_ref, be2_ref,
                       whd_ref, bhd_ref, simg_ref, timg_ref, wall_ref,
                       w1e_ref, w1i_ref, b1_ref, w2_ref, b2_ref, w3_ref, b3_ref,
                       o_ref):
    f32 = jnp.float32
    B = emb_ref.shape[0]
    L = 16 * B                      # rows of the im2col matrix, ordered (l, b)

    # ---- embed_ids tail: Linear(32,64) [BN(64) folded] -> SiLU -> Linear(64,64)
    e = jnp.dot(emb_ref[...], we1_ref[...], preferred_element_type=f32) + be1_ref[...]
    e = e * pl.reciprocal(1.0 + jnp.exp(-e), approx=True)       # SiLU via EUP recip
    e = jnp.dot(e, we2_ref[...], preferred_element_type=f32) + be2_ref[...]

    # ---- high_dim_map: [BN(300) folded into weight] Linear(300,1024) -> ReLU
    # whd columns are pre-permuted so h[b, l*64 + c] == img[b, c, l]  (length-major)
    h = jnp.dot(nx_ref[...], whd_ref[...], preferred_element_type=f32) + bhd_ref[...]
    h = jnp.maximum(h, 0.0)
    # image_map_1 BN(64): per-channel scale/shift tiled to the length-major layout
    h = h * simg_ref[...] + timg_ref[...]

    # ---- im2col: H[(l*B + b), c] = img_bn[b, c, l]   (built from lane slices)
    H = jnp.concatenate([h[:, l * 64:(l + 1) * 64] for l in range(16)], axis=0)  # (16B, 64)

    # one MXU matmul covering all 5 conv taps: G[:, k*128+o] = sum_c H[:,c] W[o,c,k]
    G = jnp.dot(H, wall_ref[...], preferred_element_type=f32)                    # (16B, 640)

    # combine taps with sublane-aligned shifts; zeros reproduce Conv1d padding=2
    conv = G[:, 2 * 128:3 * 128]                                                  # k=2, d=0
    for k, d in ((0, -2), (1, -1), (3, 1), (4, 2)):
        blk = G[:, k * 128:(k + 1) * 128]
        if d > 0:
            shifted = jnp.concatenate(
                [blk[d * B:, :], jnp.zeros((d * B, 128), f32)], axis=0)
        else:
            shifted = jnp.concatenate(
                [jnp.zeros((-d * B, 128), f32), blk[:L + d * B, :]], axis=0)
        conv = conv + shifted
    conv = jnp.maximum(conv, 0.0)                                                 # ReLU

    # AdaptiveAvgPool1d(8): average adjacent length pairs; lane-concat into a
    # lane-dense (B, 1024) block whose columns are (j*128 + o) — matches w1i rows.
    pooled = jnp.concatenate(
        [0.5 * (conv[(2 * j) * B:(2 * j + 1) * B, :] +
                conv[(2 * j + 1) * B:(2 * j + 2) * B, :]) for j in range(8)],
        axis=1)                                                                   # (B, 1024)

    # ---- final_mlp (all BNs folded offline); concat removed via split w_f1
    z = (jnp.dot(e, w1e_ref[...], preferred_element_type=f32) +
         jnp.dot(pooled, w1i_ref[...], preferred_element_type=f32) + b1_ref[...])
    z = jnp.maximum(z, 0.0)
    z = jnp.maximum(jnp.dot(z, w2_ref[...], preferred_element_type=f32) + b2_ref[...], 0.0)
    o_ref[...] = jnp.dot(z, w3_ref[...], preferred_element_type=f32) + b3_ref[...]


# --------------------------------- wrapper ----------------------------------

def dcnn_forward(x, q):
    """x: (B, 301); q: prepared (folded/permuted) params from prepare_params."""
    B = x.shape[0]
    ids = x[:, 0].astype(jnp.int32)
    nx = x[:, 1:]
    # TODO(synk): embedding lookup is a data-dependent row gather; kept as plain-JAX
    # glue (an in-kernel version would need a manual DMA gather / scalar prefetch).
    emb_x = jnp.take(q["emb_table"], ids, axis=0)                      # (B, 32)

    out = pl.pallas_call(
        _dcnn_fused_kernel,
        out_shape=jax.ShapeDtypeStruct((B, 1), jnp.float32),
    )(emb_x, nx,
      q["we1"], q["be1"], q["we2"], q["be2"],
      q["whd"], q["bhd"], q["s_img"], q["t_img"], q["w_all"],
      q["w1e"], q["w1i"], q["b1"], q["w2"], q["b2"], q["w3"], q["b3"])
    return out[:, 0]                                                   # .squeeze(-1)


# ------------------------- parameter init (torch layout) --------------------

EPS = 1e-5


def _folded_bn(key, n):
    k1, k2, k3, k4 = jax.random.split(key, 4)
    gamma = 1.0 + 0.1 * jax.random.normal(k1, (n,), jnp.float32)
    beta = 0.1 * jax.random.normal(k2, (n,), jnp.float32)
    mean = 0.1 * jax.random.normal(k3, (n,), jnp.float32)
    var = jax.random.uniform(k4, (n,), jnp.float32, 0.5, 1.5)
    scale = gamma / jnp.sqrt(var + EPS)
    shift = beta - mean * scale
    return scale, shift


def _linear(key, fan_in, fan_out):
    kw, kb = jax.random.split(key)
    lim = 1.0 / np.sqrt(fan_in)
    w = jax.random.uniform(kw, (fan_in, fan_out), jnp.float32, -lim, lim)
    b = jax.random.uniform(kb, (1, fan_out), jnp.float32, -lim, lim)
    return w, b


def init_params(key):
    keys = jax.random.split(key, 14)
    p = {}
    p["emb_table"] = jax.random.normal(keys[0], (3774, 32), jnp.float32)
    p["w_e1"], p["b_e1"] = _linear(keys[1], 32, 64)
    p["bn_e_s"], p["bn_e_t"] = _folded_bn(keys[2], 64)
    p["w_e2"], p["b_e2"] = _linear(keys[3], 64, 64)
    p["bn_hd_s"], p["bn_hd_t"] = _folded_bn(keys[4], 300)
    p["w_hd"], p["b_hd"] = _linear(keys[5], 300, 1024)
    p["bn_c_s"], p["bn_c_t"] = _folded_bn(keys[6], 64)
    lim = 1.0 / np.sqrt(64 * 5)
    p["w_conv"] = jax.random.uniform(keys[7], (128, 64, 5), jnp.float32, -lim, lim)
    p["bn_a_s"], p["bn_a_t"] = _folded_bn(keys[8], 1088)
    p["w_f1"], p["b_f1"] = _linear(keys[9], 1088, 512)
    p["bn_b_s"], p["bn_b_t"] = _folded_bn(keys[10], 512)
    p["w_f2"], p["b_f2"] = _linear(keys[11], 512, 128)
    p["bn_c2_s"], p["bn_c2_t"] = _folded_bn(keys[12], 128)
    p["w_f3"], p["b_f3"] = _linear(keys[13], 128, 1)
    return p


# ----------------- offline folding / permutation for the kernel -------------

def prepare_params(p):
    q = {"emb_table": p["emb_table"]}

    # embed branch: fold BN(64) (post-linear) into w_e1/b_e1
    q["we1"] = p["w_e1"] * p["bn_e_s"][None, :]
    q["be1"] = p["b_e1"] * p["bn_e_s"][None, :] + p["bn_e_t"][None, :]
    q["we2"], q["be2"] = p["w_e2"], p["b_e2"]

    # high_dim_map: fold BN(300) (pre-linear) into w_hd, permute output columns
    # to length-major order: new col (l*64 + c) <- old col (c*16 + l)
    W = p["bn_hd_s"][:, None] * p["w_hd"]
    Bv = p["bn_hd_t"][None, :] @ p["w_hd"] + p["b_hd"]
    pidx = np.arange(1024)
    perm = (pidx % 64) * 16 + (pidx // 64)
    q["whd"] = W[:, perm]
    q["bhd"] = Bv[:, perm]

    # image BN(64): per-channel scale/shift tiled to the length-major 1024 layout
    q["s_img"] = jnp.tile(p["bn_c_s"], 16)[None, :]
    q["t_img"] = jnp.tile(p["bn_c_t"], 16)[None, :]

    # conv weight (cout=128, cin=64, k=5) -> (cin, k*128) with col = k*128 + o
    q["w_all"] = jnp.transpose(p["w_conv"], (1, 2, 0)).reshape(64, 5 * 128)

    # final MLP: fold BN(1088) (pre) and BN(512) (post) into w_f1; split rows:
    # first 64 rows -> embedding block, remaining 1024 rows permuted so that
    # kernel row (j*128 + o) maps to torch flatten index (o*8 + j).
    W1 = p["bn_a_s"][:, None] * p["w_f1"] * p["bn_b_s"][None, :]
    B1 = (p["bn_a_t"][None, :] @ p["w_f1"] + p["b_f1"]) * p["bn_b_s"][None, :] \
        + p["bn_b_t"][None, :]
    q["w1e"] = W1[:64]
    r = np.arange(1024)
    img_idx = 64 + (r % 128) * 8 + (r // 128)
    q["w1i"] = W1[img_idx]
    q["b1"] = B1

    # fold BN(128) (post) into w_f2
    q["w2"] = p["w_f2"] * p["bn_c2_s"][None, :]
    q["b2"] = p["b_f2"] * p["bn_c2_s"][None, :] + p["bn_c2_t"][None, :]
    q["w3"], q["b3"] = p["w_f3"], p["b_f3"]
    return q


# --------------------------- pure-JAX reference ------------------------------

def dcnn_reference(x, p):
    B = x.shape[0]
    ids = x[:, 0].astype(jnp.int32)
    nx = x[:, 1:]
    e = jnp.take(p["emb_table"], ids, axis=0)
    e = e @ p["w_e1"] + p["b_e1"]
    e = e * p["bn_e_s"][None, :] + p["bn_e_t"][None, :]
    e = e * jax.nn.sigmoid(e)
    e = e @ p["w_e2"] + p["b_e2"]

    n = nx * p["bn_hd_s"][None, :] + p["bn_hd_t"][None, :]
    h = jnp.maximum(n @ p["w_hd"] + p["b_hd"], 0.0)
    img = h.reshape(B, 64, 16)
    img = img * p["bn_c_s"][None, :, None] + p["bn_c_t"][None, :, None]
    img_pad = jnp.pad(img, ((0, 0), (0, 0), (2, 2)))
    conv = jnp.zeros((B, 128, 16), jnp.float32)
    for k in range(5):
        conv = conv + jnp.einsum("oc,bcl->bol", p["w_conv"][:, :, k],
                                 img_pad[:, :, k:k + 16])
    conv = jnp.maximum(conv, 0.0)
    pooled = conv.reshape(B, 128, 8, 2).mean(-1)
    flat = pooled.reshape(B, 1024)
    cat = jnp.concatenate([e, flat], axis=-1)
    z = cat * p["bn_a_s"][None, :] + p["bn_a_t"][None, :]
    z = jnp.maximum((z @ p["w_f1"] + p["b_f1"]) * p["bn_b_s"][None, :]
                    + p["bn_b_t"][None, :], 0.0)
    z = jnp.maximum((z @ p["w_f2"] + p["b_f2"]) * p["bn_c2_s"][None, :]
                    + p["bn_c2_t"][None, :], 0.0)
    return (z @ p["w_f3"] + p["b_f3"])[:, 0]


# --------------------------------- main --------------------------------------

if __name__ == "__main__":
    B = 8   # multiple of 8 keeps all in-kernel sublane slices tile-aligned
    key = jax.random.PRNGKey(0)
    kp, kid, kx = jax.random.split(key, 3)
    raw = init_params(kp)
    prepped = prepare_params(raw)

    ids = jax.random.randint(kid, (B,), 0, 3774).astype(jnp.float32)
    feats = jax.random.normal(kx, (B, 300), jnp.float32)
    x = jnp.concatenate([ids[:, None], feats], axis=1)                 # (B, 301)

    out = jax.jit(dcnn_forward)(x, prepped)
    out = jax.block_until_ready(out)
    assert out.shape == (B,)

    ref = dcnn_reference(x, raw)
    np.testing.assert_allclose(np.asarray(out), np.asarray(ref), rtol=5e-2, atol=5e-2)
    print("KERNEL_OK")
</pallas_src>

<mosaic_0001>
module attributes {stable_mosaic.version = 11 : i64} {
  func.func @_dcnn_fused_kernel(%arg0: memref<8x32xf32, #tpu.memory_space<vmem>>, %arg1: memref<8x300xf32, #tpu.memory_space<vmem>>, %arg2: memref<32x64xf32, #tpu.memory_space<vmem>>, %arg3: memref<1x64xf32, #tpu.memory_space<vmem>>, %arg4: memref<64x64xf32, #tpu.memory_space<vmem>>, %arg5: memref<1x64xf32, #tpu.memory_space<vmem>>, %arg6: memref<300x1024xf32, #tpu.memory_space<vmem>>, %arg7: memref<1x1024xf32, #tpu.memory_space<vmem>>, %arg8: memref<1x1024xf32, #tpu.memory_space<vmem>>, %arg9: memref<1x1024xf32, #tpu.memory_space<vmem>>, %arg10: memref<64x640xf32, #tpu.memory_space<vmem>>, %arg11: memref<64x512xf32, #tpu.memory_space<vmem>>, %arg12: memref<1024x512xf32, #tpu.memory_space<vmem>>, %arg13: memref<1x512xf32, #tpu.memory_space<vmem>>, %arg14: memref<512x128xf32, #tpu.memory_space<vmem>>, %arg15: memref<1x128xf32, #tpu.memory_space<vmem>>, %arg16: memref<128x1xf32, #tpu.memory_space<vmem>>, %arg17: memref<1x1xf32, #tpu.memory_space<vmem>>, %arg18: memref<8x1xf32, #tpu.memory_space<vmem>>) attributes {dimension_semantics = [], scalar_prefetch = 0 : i64, scratch_operands = 0 : i64, tpu.core_type = #tpu.core_type<tc>} {
    %c0 = arith.constant 0 : index
    %c0_0 = arith.constant 0 : index
    %0 = vector.load %arg0[%c0, %c0_0] : memref<8x32xf32, #tpu.memory_space<vmem>>, vector<8x32xf32>
    %c0_1 = arith.constant 0 : index
    %c0_2 = arith.constant 0 : index
    %1 = vector.load %arg2[%c0_1, %c0_2] : memref<32x64xf32, #tpu.memory_space<vmem>>, vector<32x64xf32>
    %cst = arith.constant dense<0.000000e+00> : vector<8x64xf32>
    %2 = tpu.matmul %0, %1, %cst {dimension_numbers = #tpu.dot_dimension_numbers<[1], [0], [0], [1], [0, 0, 1, 1], [], []>} : vector<8x32xf32>, vector<32x64xf32>, vector<8x64xf32> -> vector<8x64xf32>
    %c0_3 = arith.constant 0 : index
    %c0_4 = arith.constant 0 : index
    %3 = vector.load %arg3[%c0_3, %c0_4] : memref<1x64xf32, #tpu.memory_space<vmem>>, vector<1x64xf32>
    %4 = vector.broadcast %3 : vector<1x64xf32> to vector<8x64xf32>
    %5 = arith.addf %2, %4 : vector<8x64xf32>
    %cst_5 = arith.constant 0.000000e+00 : f32
    %6 = vector.broadcast %cst_5 : f32 to vector<8x64xf32>
    %7 = arith.subf %6, %5 : vector<8x64xf32>
    %8 = math.exp %7 : vector<8x64xf32>
    %cst_6 = arith.constant 1.000000e+00 : f32
    %9 = vector.broadcast %cst_6 : f32 to vector<8x64xf32>
    %10 = arith.addf %9, %8 : vector<8x64xf32>
    %11 = tpu.reciprocal %10 {approx = true} : vector<8x64xf32> -> vector<8x64xf32>
    %12 = arith.mulf %5, %11 : vector<8x64xf32>
    %c0_7 = arith.constant 0 : index
    %c0_8 = arith.constant 0 : index
    %13 = vector.load %arg4[%c0_7, %c0_8] : memref<64x64xf32, #tpu.memory_space<vmem>>, vector<64x64xf32>
    %cst_9 = arith.constant dense<0.000000e+00> : vector<8x64xf32>
    %14 = tpu.matmul %12, %13, %cst_9 {dimension_numbers = #tpu.dot_dimension_numbers<[1], [0], [0], [1], [0, 0, 1, 1], [], []>} : vector<8x64xf32>, vector<64x64xf32>, vector<8x64xf32> -> vector<8x64xf32>
    %c0_10 = arith.constant 0 : index
    %c0_11 = arith.constant 0 : index
    %15 = vector.load %arg5[%c0_10, %c0_11] : memref<1x64xf32, #tpu.memory_space<vmem>>, vector<1x64xf32>
    %16 = vector.broadcast %15 : vector<1x64xf32> to vector<8x64xf32>
    %17 = arith.addf %14, %16 : vector<8x64xf32>
    %c0_12 = arith.constant 0 : index
    %c0_13 = arith.constant 0 : index
    %18 = vector.load %arg1[%c0_12, %c0_13] : memref<8x300xf32, #tpu.memory_space<vmem>>, vector<8x300xf32>
    %c0_14 = arith.constant 0 : index
    %c0_15 = arith.constant 0 : index
    %19 = vector.load %arg6[%c0_14, %c0_15] : memref<300x1024xf32, #tpu.memory_space<vmem>>, vector<300x1024xf32>
    %cst_16 = arith.constant dense<0.000000e+00> : vector<8x1024xf32>
    %20 = tpu.matmul %18, %19, %cst_16 {dimension_numbers = #tpu.dot_dimension_numbers<[1], [0], [0], [1], [0, 0, 1, 1], [], []>} : vector<8x300xf32>, vector<300x1024xf32>, vector<8x1024xf32> -> vector<8x1024xf32>
    %c0_17 = arith.constant 0 : index
    %c0_18 = arith.constant 0 : index
    %21 = vector.load %arg7[%c0_17, %c0_18] : memref<1x1024xf32, #tpu.memory_space<vmem>>, vector<1x1024xf32>
    %22 = vector.broadcast %21 : vector<1x1024xf32> to vector<8x1024xf32>
    %23 = arith.addf %20, %22 : vector<8x1024xf32>
    %cst_19 = arith.constant 0.000000e+00 : f32
    %24 = vector.broadcast %cst_19 : f32 to vector<8x1024xf32>
    %25 = arith.maximumf %23, %24 : vector<8x1024xf32>
    %c0_20 = arith.constant 0 : index
    %c0_21 = arith.constant 0 : index
    %26 = vector.load %arg8[%c0_20, %c0_21] : memref<1x1024xf32, #tpu.memory_space<vmem>>, vector<1x1024xf32>
    %27 = vector.broadcast %26 : vector<1x1024xf32> to vector<8x1024xf32>
    %28 = arith.mulf %25, %27 : vector<8x1024xf32>
    %c0_22 = arith.constant 0 : index
    %c0_23 = arith.constant 0 : index
    %29 = vector.load %arg9[%c0_22, %c0_23] : memref<1x1024xf32, #tpu.memory_space<vmem>>, vector<1x1024xf32>
    %30 = vector.broadcast %29 : vector<1x1024xf32> to vector<8x1024xf32>
    %31 = arith.addf %28, %30 : vector<8x1024xf32>
    %32 = vector.extract_strided_slice %31 {offsets = [0, 0], sizes = [8, 64], strides = [1, 1]} : vector<8x1024xf32> to vector<8x64xf32>
    %33 = vector.extract_strided_slice %31 {offsets = [0, 64], sizes = [8, 64], strides = [1, 1]} : vector<8x1024xf32> to vector<8x64xf32>
    %34 = vector.extract_strided_slice %31 {offsets = [0, 128], sizes = [8, 64], strides = [1, 1]} : vector<8x1024xf32> to vector<8x64xf32>
    %35 = vector.extract_strided_slice %31 {offsets = [0, 192], sizes = [8, 64], strides = [1, 1]} : vector<8x1024xf32> to vector<8x64xf32>
    %36 = vector.extract_strided_slice %31 {offsets = [0, 256], sizes = [8, 64], strides = [1, 1]} : vector<8x1024xf32> to vector<8x64xf32>
    %37 = vector.extract_strided_slice %31 {offsets = [0, 320], sizes = [8, 64], strides = [1, 1]} : vector<8x1024xf32> to vector<8x64xf32>
    %38 = vector.extract_strided_slice %31 {offsets = [0, 384], sizes = [8, 64], strides = [1, 1]} : vector<8x1024xf32> to vector<8x64xf32>
    %39 = vector.extract_strided_slice %31 {offsets = [0, 448], sizes = [8, 64], strides = [1, 1]} : vector<8x1024xf32> to vector<8x64xf32>
    %40 = vector.extract_strided_slice %31 {offsets = [0, 512], sizes = [8, 64], strides = [1, 1]} : vector<8x1024xf32> to vector<8x64xf32>
    %41 = vector.extract_strided_slice %31 {offsets = [0, 576], sizes = [8, 64], strides = [1, 1]} : vector<8x1024xf32> to vector<8x64xf32>
    %42 = vector.extract_strided_slice %31 {offsets = [0, 640], sizes = [8, 64], strides = [1, 1]} : vector<8x1024xf32> to vector<8x64xf32>
    %43 = vector.extract_strided_slice %31 {offsets = [0, 704], sizes = [8, 64], strides = [1, 1]} : vector<8x1024xf32> to vector<8x64xf32>
    %44 = vector.extract_strided_slice %31 {offsets = [0, 768], sizes = [8, 64], strides = [1, 1]} : vector<8x1024xf32> to vector<8x64xf32>
    %45 = vector.extract_strided_slice %31 {offsets = [0, 832], sizes = [8, 64], strides = [1, 1]} : vector<8x1024xf32> to vector<8x64xf32>
    %46 = vector.extract_strided_slice %31 {offsets = [0, 896], sizes = [8, 64], strides = [1, 1]} : vector<8x1024xf32> to vector<8x64xf32>
    %47 = vector.extract_strided_slice %31 {offsets = [0, 960], sizes = [8, 64], strides = [1, 1]} : vector<8x1024xf32> to vector<8x64xf32>
    %48 = tpu.concatenate %32, %33, %34, %35, %36, %37, %38, %39, %40, %41, %42, %43, %44, %45, %46, %47 in 0 : vector<8x64xf32>, vector<8x64xf32>, vector<8x64xf32>, vector<8x64xf32>, vector<8x64xf32>, vector<8x64xf32>, vector<8x64xf32>, vector<8x64xf32>, vector<8x64xf32>, vector<8x64xf32>, vector<8x64xf32>, vector<8x64xf32>, vector<8x64xf32>, vector<8x64xf32>, vector<8x64xf32>, vector<8x64xf32> -> vector<128x64xf32>
    %c0_24 = arith.constant 0 : index
    %c0_25 = arith.constant 0 : index
    %49 = vector.load %arg10[%c0_24, %c0_25] : memref<64x640xf32, #tpu.memory_space<vmem>>, vector<64x640xf32>
    %cst_26 = arith.constant dense<0.000000e+00> : vector<128x640xf32>
    %50 = tpu.matmul %48, %49, %cst_26 {dimension_numbers = #tpu.dot_dimension_numbers<[1], [0], [0], [1], [0, 0, 1, 1], [], []>} : vector<128x64xf32>, vector<64x640xf32>, vector<128x640xf32> -> vector<128x640xf32>
    %51 = vector.extract_strided_slice %50 {offsets = [0, 256], sizes = [128, 128], strides = [1, 1]} : vector<128x640xf32> to vector<128x128xf32>
    %52 = vector.extract_strided_slice %50 {offsets = [0, 0], sizes = [128, 128], strides = [1, 1]} : vector<128x640xf32> to vector<128x128xf32>
    %cst_27 = arith.constant 0.000000e+00 : f32
    %53 = vector.broadcast %cst_27 : f32 to vector<16x128xf32>
    %54 = vector.extract_strided_slice %52 {offsets = [0, 0], sizes = [112, 128], strides = [1, 1]} : vector<128x128xf32> to vector<112x128xf32>
    %55 = tpu.concatenate %53, %54 in 0 : vector<16x128xf32>, vector<112x128xf32> -> vector<128x128xf32>
    %56 = arith.addf %51, %55 : vector<128x128xf32>
    %57 = vector.extract_strided_slice %50 {offsets = [0, 128], sizes = [128, 128], strides = [1, 1]} : vector<128x640xf32> to vector<128x128xf32>
    %cst_28 = arith.constant 0.000000e+00 : f32
    %58 = vector.broadcast %cst_28 : f32 to vector<8x128xf32>
    %59 = vector.extract_strided_slice %57 {offsets = [0, 0], sizes = [120, 128], strides = [1, 1]} : vector<128x128xf32> to vector<120x128xf32>
    %60 = tpu.concatenate %58, %59 in 0 : vector<8x128xf32>, vector<120x128xf32> -> vector<128x128xf32>
    %61 = arith.addf %56, %60 : vector<128x128xf32>
    %62 = vector.extract_strided_slice %50 {offsets = [0, 384], sizes = [128, 128], strides = [1, 1]} : vector<128x640xf32> to vector<128x128xf32>
    %63 = vector.extract_strided_slice %62 {offsets = [8, 0], sizes = [120, 128], strides = [1, 1]} : vector<128x128xf32> to vector<120x128xf32>
    %cst_29 = arith.constant 0.000000e+00 : f32
    %64 = vector.broadcast %cst_29 : f32 to vector<8x128xf32>
    %65 = tpu.concatenate %63, %64 in 0 : vector<120x128xf32>, vector<8x128xf32> -> vector<128x128xf32>
    %66 = arith.addf %61, %65 : vector<128x128xf32>
    %67 = vector.extract_strided_slice %50 {offsets = [0, 512], sizes = [128, 128], strides = [1, 1]} : vector<128x640xf32> to vector<128x128xf32>
    %68 = vector.extract_strided_slice %67 {offsets = [16, 0], sizes = [112, 128], strides = [1, 1]} : vector<128x128xf32> to vector<112x128xf32>
    %cst_30 = arith.constant 0.000000e+00 : f32
    %69 = vector.broadcast %cst_30 : f32 to vector<16x128xf32>
    %70 = tpu.concatenate %68, %69 in 0 : vector<112x128xf32>, vector<16x128xf32> -> vector<128x128xf32>
    %71 = arith.addf %66, %70 : vector<128x128xf32>
    %cst_31 = arith.constant 0.000000e+00 : f32
    %72 = vector.broadcast %cst_31 : f32 to vector<128x128xf32>
    %73 = arith.maximumf %71, %72 : vector<128x128xf32>
    %74 = vector.extract_strided_slice %73 {offsets = [0, 0], sizes = [8, 128], strides = [1, 1]} : vector<128x128xf32> to vector<8x128xf32>
    %75 = vector.extract_strided_slice %73 {offsets = [8, 0], sizes = [8, 128], strides = [1, 1]} : vector<128x128xf32> to vector<8x128xf32>
    %76 = arith.addf %74, %75 : vector<8x128xf32>
    %cst_32 = arith.constant 5.000000e-01 : f32
    %77 = vector.broadcast %cst_32 : f32 to vector<8x128xf32>
    %78 = arith.mulf %77, %76 : vector<8x128xf32>
    %79 = vector.extract_strided_slice %73 {offsets = [16, 0], sizes = [8, 128], strides = [1, 1]} : vector<128x128xf32> to vector<8x128xf32>
    %80 = vector.extract_strided_slice %73 {offsets = [24, 0], sizes = [8, 128], strides = [1, 1]} : vector<128x128xf32> to vector<8x128xf32>
    %81 = arith.addf %79, %80 : vector<8x128xf32>
    %cst_33 = arith.constant 5.000000e-01 : f32
    %82 = vector.broadcast %cst_33 : f32 to vector<8x128xf32>
    %83 = arith.mulf %82, %81 : vector<8x128xf32>
    %84 = vector.extract_strided_slice %73 {offsets = [32, 0], sizes = [8, 128], strides = [1, 1]} : vector<128x128xf32> to vector<8x128xf32>
    %85 = vector.extract_strided_slice %73 {offsets = [40, 0], sizes = [8, 128], strides = [1, 1]} : vector<128x128xf32> to vector<8x128xf32>
    %86 = arith.addf %84, %85 : vector<8x128xf32>
    %cst_34 = arith.constant 5.000000e-01 : f32
    %87 = vector.broadcast %cst_34 : f32 to vector<8x128xf32>
    %88 = arith.mulf %87, %86 : vector<8x128xf32>
    %89 = vector.extract_strided_slice %73 {offsets = [48, 0], sizes = [8, 128], strides = [1, 1]} : vector<128x128xf32> to vector<8x128xf32>
    %90 = vector.extract_strided_slice %73 {offsets = [56, 0], sizes = [8, 128], strides = [1, 1]} : vector<128x128xf32> to vector<8x128xf32>
    %91 = arith.addf %89, %90 : vector<8x128xf32>
    %cst_35 = arith.constant 5.000000e-01 : f32
    %92 = vector.broadcast %cst_35 : f32 to vector<8x128xf32>
    %93 = arith.mulf %92, %91 : vector<8x128xf32>
    %94 = vector.extract_strided_slice %73 {offsets = [64, 0], sizes = [8, 128], strides = [1, 1]} : vector<128x128xf32> to vector<8x128xf32>
    %95 = vector.extract_strided_slice %73 {offsets = [72, 0], sizes = [8, 128], strides = [1, 1]} : vector<128x128xf32> to vector<8x128xf32>
    %96 = arith.addf %94, %95 : vector<8x128xf32>
    %cst_36 = arith.constant 5.000000e-01 : f32
    %97 = vector.broadcast %cst_36 : f32 to vector<8x128xf32>
    %98 = arith.mulf %97, %96 : vector<8x128xf32>
    %99 = vector.extract_strided_slice %73 {offsets = [80, 0], sizes = [8, 128], strides = [1, 1]} : vector<128x128xf32> to vector<8x128xf32>
    %100 = vector.extract_strided_slice %73 {offsets = [88, 0], sizes = [8, 128], strides = [1, 1]} : vector<128x128xf32> to vector<8x128xf32>
    %101 = arith.addf %99, %100 : vector<8x128xf32>
    %cst_37 = arith.constant 5.000000e-01 : f32
    %102 = vector.broadcast %cst_37 : f32 to vector<8x128xf32>
    %103 = arith.mulf %102, %101 : vector<8x128xf32>
    %104 = vector.extract_strided_slice %73 {offsets = [96, 0], sizes = [8, 128], strides = [1, 1]} : vector<128x128xf32> to vector<8x128xf32>
    %105 = vector.extract_strided_slice %73 {offsets = [104, 0], sizes = [8, 128], strides = [1, 1]} : vector<128x128xf32> to vector<8x128xf32>
    %106 = arith.addf %104, %105 : vector<8x128xf32>
    %cst_38 = arith.constant 5.000000e-01 : f32
    %107 = vector.broadcast %cst_38 : f32 to vector<8x128xf32>
    %108 = arith.mulf %107, %106 : vector<8x128xf32>
    %109 = vector.extract_strided_slice %73 {offsets = [112, 0], sizes = [8, 128], strides = [1, 1]} : vector<128x128xf32> to vector<8x128xf32>
    %110 = vector.extract_strided_slice %73 {offsets = [120, 0], sizes = [8, 128], strides = [1, 1]} : vector<128x128xf32> to vector<8x128xf32>
    %111 = arith.addf %109, %110 : vector<8x128xf32>
    %cst_39 = arith.constant 5.000000e-01 : f32
    %112 = vector.broadcast %cst_39 : f32 to vector<8x128xf32>
    %113 = arith.mulf %112, %111 : vector<8x128xf32>
    %114 = tpu.concatenate %78, %83, %88, %93, %98, %103, %108, %113 in 1 : vector<8x128xf32>, vector<8x128xf32>, vector<8x128xf32>, vector<8x128xf32>, vector<8x128xf32>, vector<8x128xf32>, vector<8x128xf32>, vector<8x128xf32> -> vector<8x1024xf32>
    %c0_40 = arith.constant 0 : index
    %c0_41 = arith.constant 0 : index
    %115 = vector.load %arg11[%c0_40, %c0_41] : memref<64x512xf32, #tpu.memory_space<vmem>>, vector<64x512xf32>
    %cst_42 = arith.constant dense<0.000000e+00> : vector<8x512xf32>
    %116 = tpu.matmul %17, %115, %cst_42 {dimension_numbers = #tpu.dot_dimension_numbers<[1], [0], [0], [1], [0, 0, 1, 1], [], []>} : vector<8x64xf32>, vector<64x512xf32>, vector<8x512xf32> -> vector<8x512xf32>
    %c0_43 = arith.constant 0 : index
    %c0_44 = arith.constant 0 : index
    %117 = vector.load %arg12[%c0_43, %c0_44] : memref<1024x512xf32, #tpu.memory_space<vmem>>, vector<1024x512xf32>
    %cst_45 = arith.constant dense<0.000000e+00> : vector<8x512xf32>
    %118 = tpu.matmul %114, %117, %cst_45 {dimension_numbers = #tpu.dot_dimension_numbers<[1], [0], [0], [1], [0, 0, 1, 1], [], []>} : vector<8x1024xf32>, vector<1024x512xf32>, vector<8x512xf32> -> vector<8x512xf32>
    %119 = arith.addf %116, %118 : vector<8x512xf32>
    %c0_46 = arith.constant 0 : index
    %c0_47 = arith.constant 0 : index
    %120 = vector.load %arg13[%c0_46, %c0_47] : memref<1x512xf32, #tpu.memory_space<vmem>>, vector<1x512xf32>
    %121 = vector.broadcast %120 : vector<1x512xf32> to vector<8x512xf32>
    %122 = arith.addf %119, %121 : vector<8x512xf32>
    %cst_48 = arith.constant 0.000000e+00 : f32
    %123 = vector.broadcast %cst_48 : f32 to vector<8x512xf32>
    %124 = arith.maximumf %122, %123 : vector<8x512xf32>
    %c0_49 = arith.constant 0 : index
    %c0_50 = arith.constant 0 : index
    %125 = vector.load %arg14[%c0_49, %c0_50] : memref<512x128xf32, #tpu.memory_space<vmem>>, vector<512x128xf32>
    %cst_51 = arith.constant dense<0.000000e+00> : vector<8x128xf32>
    %126 = tpu.matmul %124, %125, %cst_51 {dimension_numbers = #tpu.dot_dimension_numbers<[1], [0], [0], [1], [0, 0, 1, 1], [], []>} : vector<8x512xf32>, vector<512x128xf32>, vector<8x128xf32> -> vector<8x128xf32>
    %c0_52 = arith.constant 0 : index
    %c0_53 = arith.constant 0 : index
    %127 = vector.load %arg15[%c0_52, %c0_53] : memref<1x128xf32, #tpu.memory_space<vmem>>, vector<1x128xf32>
    %128 = vector.broadcast %127 : vector<1x128xf32> to vector<8x128xf32>
    %129 = arith.addf %126, %128 : vector<8x128xf32>
    %cst_54 = arith.constant 0.000000e+00 : f32
    %130 = vector.broadcast %cst_54 : f32 to vector<8x128xf32>
    %131 = arith.maximumf %129, %130 : vector<8x128xf32>
    %c0_55 = arith.constant 0 : index
    %c0_56 = arith.constant 0 : index
    %132 = vector.load %arg16[%c0_55, %c0_56] : memref<128x1xf32, #tpu.memory_space<vmem>>, vector<128x1xf32>
    %cst_57 = arith.constant dense<0.000000e+00> : vector<8x1xf32>
    %133 = tpu.matmul %131, %132, %cst_57 {dimension_numbers = #tpu.dot_dimension_numbers<[1], [0], [0], [1], [0, 0, 1, 1], [], []>} : vector<8x128xf32>, vector<128x1xf32>, vector<8x1xf32> -> vector<8x1xf32>
    %c0_58 = arith.constant 0 : index
    %c0_59 = arith.constant 0 : index
    %134 = vector.load %arg17[%c0_58, %c0_59] : memref<1x1xf32, #tpu.memory_space<vmem>>, vector<1x1xf32>
    %135 = vector.broadcast %134 : vector<1x1xf32> to vector<8x1xf32>
    %136 = arith.addf %133, %135 : vector<8x1xf32>
    %c0_60 = arith.constant 0 : index
    %c0_61 = arith.constant 0 : index
    %137 = vector.load %arg18[%c0_60, %c0_61] : memref<8x1xf32, #tpu.memory_space<vmem>>, vector<8x1xf32>
    tpu.vector_store %arg18[%c0_60, %c0_61], %136 {strides = array<i32>} : memref<8x1xf32, #tpu.memory_space<vmem>>, vector<8x1xf32>,
    return
  }
}

</mosaic_0001>

<llo_original>
// kernel: dcnn_forward.1
$region0: #{dcnn_forward.1}
  #allocation0 [shape = 'u32[]', space=smem, size = 0x4, offset = 0x4, fixed_abs, tag = 'smem constant byte address 0x4 - core index']
  #allocation1 [shape = 'u32[72,128]{1,0:T(1,128)}', space=vmem, size = 0x9000, scoped, tag = 'internal scratch']
  #allocation2 [shape = 'f32[1,1]{1,0:T(1,128)S(1)}', space=vmem, size = 0x200, scoped, tag = 'scoped memory for dcnn_forward.1']
  %s0 = inlined_call_operand.vmem [shape: f32[8,32], index: 0, kind: input, shape index: {}]
  %s1 = inlined_call_operand.vmem [shape: f32[8,300], index: 1, kind: input, shape index: {}]
  %s2 = inlined_call_operand.hbm [shape: f32[32,64], index: 2, kind: input, shape index: {}]
  %s3 = inlined_call_operand.vmem [shape: f32[1,64], index: 3, kind: input, shape index: {}]
  %s4 = inlined_call_operand.vmem [shape: f32[64,64], index: 4, kind: input, shape index: {}]
  %s5 = inlined_call_operand.vmem [shape: f32[1,64], index: 5, kind: input, shape index: {}]
  %s6 = inlined_call_operand.hbm [shape: f32[300,1024], index: 6, kind: input, shape index: {}]
  %s7 = inlined_call_operand.vmem [shape: f32[1,1024], index: 7, kind: input, shape index: {}]
  %s8 = inlined_call_operand.vmem [shape: f32[1,1024], index: 8, kind: input, shape index: {}]
  %s9 = inlined_call_operand.vmem [shape: f32[1,1024], index: 9, kind: input, shape index: {}]
  %s10 = inlined_call_operand.vmem [shape: f32[64,640], index: 10, kind: input, shape index: {}]
  %s11 = inlined_call_operand.hbm [shape: f32[64,512], index: 11, kind: input, shape index: {}]
  %s12 = inlined_call_operand.vmem [shape: f32[1024,512], index: 12, kind: input, shape index: {}]
  %s13 = inlined_call_operand.vmem [shape: f32[1,512], index: 13, kind: input, shape index: {}]
  %s14 = inlined_call_operand.vmem [shape: f32[512,128], index: 14, kind: input, shape index: {}]
  %s15 = inlined_call_operand.hbm [shape: f32[1,128], index: 15, kind: input, shape index: {}]
  %s16 = inlined_call_operand.vmem [shape: f32[128,1], index: 16, kind: input, shape index: {}]
  %s17 = inlined_call_operand.<no memory space> [shape: f32[1,1], index: 17, kind: input, shape index: {}]
  %s18 = inlined_call_operand.vmem [shape: f32[8,1], index: 18, kind: output, shape index: {}]
  %s19 = sld [smem:[#allocation0]]
  $region98: #{dcnn_forward.1} parent=0
    _
  %s21 = ssub.s32 1, %s19
  %s22 = scalar_select 0, %s21, %s19
  %v23 = vstv %s17
  %24 = vst [vmem:[#allocation2] sm:$0x1] %v23
  $region1: #{dcnn_forward.1} parent=0
    #allocation3 [shape = 'u8[16384]{0}', space=vmem, size = 0x4000, scoped, tag = 'input window, operand 2, single buffered']
    #allocation4 [shape = 's32[1]{0}', space=sflag, size = 0x4, scoped, tag = 'scoped memory for dcnn_forward.1']
    #allocation5 [shape = 'u8[1245184]{0}', space=vmem, size = 0x130000, scoped, tag = 'input window, operand 6, single buffered']
    #allocation6 [shape = 's32[1]{0}', space=sflag, size = 0x4, scoped, tag = 'scoped memory for dcnn_forward.1']
    #allocation7 [shape = 'u8[131072]{0}', space=vmem, size = 0x20000, scoped, tag = 'input window, operand 11, single buffered']
    #allocation8 [shape = 'u8[512]{0}', space=vmem, size = 0x400, scoped, tag = 'input window, operand 15, single buffered']
    #allocation9 [shape = 's32[1]{0}', space=sflag, size = 0x4, scoped, tag = 'scoped memory for dcnn_forward.1']
    %25 = vsyncpa [#allocation4], 0
    %26 = vsyncpa [#allocation6], 0
    %27 = vsyncpa [#allocation9], 0
    // Predicated region
    $region2: #{dcnn_forward.1} parent=1 // pred_check
      _
    $region3: #{dcnn_forward.1} parent=1 // pred_check_branch
      %29 = sbr.rel (0) target = $region5
    $region4: #{dcnn_forward.1} parent=1 // pred_region
      _
    $region5: #{dcnn_forward.1} parent=1 // pred_fallthru
      _
    // Predicated region
    $region6: #{dcnn_forward.1} parent=1 // pred_check
      _
    $region7: #{dcnn_forward.1} parent=1 // pred_check_branch
      %31 = sbr.rel (0) target = $region9
    $region8: #{dcnn_forward.1} parent=1 // pred_region
      _
    $region9: #{dcnn_forward.1} parent=1 // pred_fallthru
      _
    // Predicated region
    $region10: #{dcnn_forward.1} parent=1 // pred_check
      _
    $region11: #{dcnn_forward.1} parent=1 // pred_check_branch
      %33 = sbr.rel (0) target = $region13
    $region12: #{dcnn_forward.1} parent=1 // pred_region
      %35 = vsyncadd [#allocation4], 0
      %s36 = sshll.u32 %s2, 4
      %s37 = int_to_ptr.hbm [resolvable:$true] %s36
      %s38 = sshll.u32 [#allocation3], 4
      %s39 = int_to_ptr.vmem [resolvable:$true] %s38
      %44 = dma.hbm_to_vmem [thread:$0]  %s37, 512, %s39, [#allocation4], 128, 128, 8
    $region13: #{dcnn_forward.1} parent=1 // pred_fallthru
      _
    // Predicated region
    $region14: #{dcnn_forward.1} parent=1 // pred_check
      _
    $region15: #{dcnn_forward.1} parent=1 // pred_check_branch
      %46 = sbr.rel (0) target = $region17
    $region16: #{dcnn_forward.1} parent=1 // pred_region
      _
    $region17: #{dcnn_forward.1} parent=1 // pred_fallthru
      _
    // Predicated region
    $region18: #{dcnn_forward.1} parent=1 // pred_check
      _
    $region19: #{dcnn_forward.1} parent=1 // pred_check_branch
      %48 = sbr.rel (0) target = $region21
    $region20: #{dcnn_forward.1} parent=1 // pred_region
      _
    $region21: #{dcnn_forward.1} parent=1 // pred_fallthru
      _
    // Predicated region
    $region22: #{dcnn_forward.1} parent=1 // pred_check
      _
    $region23: #{dcnn_forward.1} parent=1 // pred_check_branch
      %50 = sbr.rel (0) target = $region25
    $region24: #{dcnn_forward.1} parent=1 // pred_region
      _
    $region25: #{dcnn_forward.1} parent=1 // pred_fallthru
      _
    // Predicated region
    $region26: #{dcnn_forward.1} parent=1 // pred_check
      _
    $region27: #{dcnn_forward.1} parent=1 // pred_check_branch
      %52 = sbr.rel (0) target = $region29
    $region28: #{dcnn_forward.1} parent=1 // pred_region
      %54 = vsyncadd [#allocation6], 0
      %s55 = sshll.u32 %s6, 4
      %s56 = int_to_ptr.hbm [resolvable:$true] %s55
      %s57 = sshll.u32 [#allocation5], 4
      %s58 = int_to_ptr.vmem [resolvable:$true] %s57
      %63 = dma.hbm_to_vmem [thread:$0]  %s56, 38912, %s58, [#allocation6], 1024, 1024, 64
    $region29: #{dcnn_forward.1} parent=1 // pred_fallthru
      _
    // Predicated region
    $region30: #{dcnn_forward.1} parent=1 // pred_check
      _
    $region31: #{dcnn_forward.1} parent=1 // pred_check_branch
      %65 = sbr.rel (0) target = $region33
    $region32: #{dcnn_forward.1} parent=1 // pred_region
      _
    $region33: #{dcnn_forward.1} parent=1 // pred_fallthru
      _
    // Predicated region
    $region34: #{dcnn_forward.1} parent=1 // pred_check
      _
    $region35: #{dcnn_forward.1} parent=1 // pred_check_branch
      %67 = sbr.rel (0) target = $region37
    $region36: #{dcnn_forward.1} parent=1 // pred_region
      _
    $region37: #{dcnn_forward.1} parent=1 // pred_fallthru
      _
    // Predicated region
    $region38: #{dcnn_forward.1} parent=1 // pred_check
      _
    $region39: #{dcnn_forward.1} parent=1 // pred_check_branch
      %69 = sbr.rel (0) target = $region41
    $region40: #{dcnn_forward.1} parent=1 // pred_region
      _
    $region41: #{dcnn_forward.1} parent=1 // pred_fallthru
      _
    // Predicated region
    $region42: #{dcnn_forward.1} parent=1 // pred_check
      _
    $region43: #{dcnn_forward.1} parent=1 // pred_check_branch
      %71 = sbr.rel (0) target = $region45
    $region44: #{dcnn_forward.1} parent=1 // pred_region
      _
    $region45: #{dcnn_forward.1} parent=1 // pred_fallthru
      _
    // Predicated region
    $region46: #{dcnn_forward.1} parent=1 // pred_check
      _
    $region47: #{dcnn_forward.1} parent=1 // pred_check_branch
      %73 = sbr.rel (0) target = $region49
    $region48: #{dcnn_forward.1} parent=1 // pred_region
      %75 = vsyncadd [#allocation6], 0
      %s76 = sshll.u32 %s11, 4
      %s77 = int_to_ptr.hbm [resolvable:$true] %s76
      %s78 = sshll.u32 [#allocation7], 4
      %s79 = int_to_ptr.vmem [resolvable:$true] %s78
      %84 = dma.hbm_to_vmem [thread:$0]  %s77, 4096, %s79, [#allocation6], 512, 512, 32
    $region49: #{dcnn_forward.1} parent=1 // pred_fallthru
      _
    // Predicated region
    $region50: #{dcnn_forward.1} parent=1 // pred_check
      _
    $region51: #{dcnn_forward.1} parent=1 // pred_check_branch
      %86 = sbr.rel (0) target = $region53
    $region52: #{dcnn_forward.1} parent=1 // pred_region
      _
    $region53: #{dcnn_forward.1} parent=1 // pred_fallthru
      _
    // Predicated region
    $region54: #{dcnn_forward.1} parent=1 // pred_check
      _
    $region55: #{dcnn_forward.1} parent=1 // pred_check_branch
      %88 = sbr.rel (0) target = $region57
    $region56: #{dcnn_forward.1} parent=1 // pred_region
      _
    $region57: #{dcnn_forward.1} parent=1 // pred_fallthru
      _
    // Predicated region
    $region58: #{dcnn_forward.1} parent=1 // pred_check
      _
    $region59: #{dcnn_forward.1} parent=1 // pred_check_branch
      %90 = sbr.rel (0) target = $region61
    $region60: #{dcnn_forward.1} parent=1 // pred_region
      _
    $region61: #{dcnn_forward.1} parent=1 // pred_fallthru
      _
    // Predicated region
    $region62: #{dcnn_forward.1} parent=1 // pred_check
      _
    $region63: #{dcnn_forward.1} parent=1 // pred_check_branch
      %92 = sbr.rel (0) target = $region65
    $region64: #{dcnn_forward.1} parent=1 // pred_region
      %94 = vsyncadd [#allocation9], 0
      %s96 = sshll.u32 %s15, 4
      %s97 = int_to_ptr.hbm [resolvable:$true] %s96
      %s98 = sshll.u32 [#allocation8], 4
      %s99 = int_to_ptr.vmem [resolvable:$true] %s98
      %101 = dma.hbm_to_vmem [thread:$0]  %s97, 16, %s99, [#allocation9]
    $region65: #{dcnn_forward.1} parent=1 // pred_fallthru
      _
    // Predicated region
    $region66: #{dcnn_forward.1} parent=1 // pred_check
      _
    $region67: #{dcnn_forward.1} parent=1 // pred_check_branch
      %103 = sbr.rel (0) target = $region69
    $region68: #{dcnn_forward.1} parent=1 // pred_region
      _
    $region69: #{dcnn_forward.1} parent=1 // pred_fallthru
      _
    // Predicated region
    $region70: #{dcnn_forward.1} parent=1 // pred_check
      _
    $region71: #{dcnn_forward.1} parent=1 // pred_check_branch
      %105 = sbr.rel (0) target = $region73
    $region72: #{dcnn_forward.1} parent=1 // pred_region
      _
    $region73: #{dcnn_forward.1} parent=1 // pred_fallthru
      _
    // Predicated region
    $region74: #{dcnn_forward.1} parent=1 // pred_check
      _
    $region75: #{dcnn_forward.1} parent=1 // pred_check_branch
      %107 = sbr.rel (0) target = $region77
    $region76: #{dcnn_forward.1} parent=1 // pred_region
      %109 = dma.done [#allocation4], 512
    $region77: #{dcnn_forward.1} parent=1 // pred_fallthru
      _
    // Predicated region
    $region78: #{dcnn_forward.1} parent=1 // pred_check
      _
    $region79: #{dcnn_forward.1} parent=1 // pred_check_branch
      %111 = sbr.rel (0) target = $region81
    $region80: #{dcnn_forward.1} parent=1 // pred_region
      %113 = dma.done [#allocation6], 38912
    $region81: #{dcnn_forward.1} parent=1 // pred_fallthru
      _
    // Predicated region
    $region82: #{dcnn_forward.1} parent=1 // pred_check
      _
    $region83: #{dcnn_forward.1} parent=1 // pred_check_branch
      %115 = sbr.rel (0) target = $region85
    $region84: #{dcnn_forward.1} parent=1 // pred_region
      %117 = dma.done [#allocation6], 4096
    $region85: #{dcnn_forward.1} parent=1 // pred_fallthru
      _
    // Predicated region
    $region86: #{dcnn_forward.1} parent=1 // pred_check
      _
    $region87: #{dcnn_forward.1} parent=1 // pred_check_branch
      %119 = sbr.rel (0) target = $region89
    $region88: #{dcnn_forward.1} parent=1 // pred_region
      %121 = dma.done [#allocation9], 16
    $region89: #{dcnn_forward.1} parent=1 // pred_fallthru
      _
    %v122 = vld [vmem:[%s0] sm:$0xff]
    %v123 = vld [vmem:[#allocation3] sm:$0xff]
    %v124 = vld [vmem:[#allocation3 + $0x8] sm:$0xff]
    %v125 = vld [vmem:[#allocation3 + $0x10] sm:$0xff]
    %v126 = vld [vmem:[#allocation3 + $0x18] sm:$0xff]
    %v127 = vld [vmem:[%s3] sm:$0x1]
    %v129 = vperm.slane %v127, 0
    %vm131 = vcmask 261120
    %v133 = vsel %vm131, %v122, 0
    %135 = vmatpush.msra.mxu0 0.0
    %136 = vmatpush.msra.mxu0 0.0
    %137 = vmatpush.msra.mxu0 0.0
    %138 = vmatpush.msra.mxu0 0.0
    %139 = vmatpush.msra.mxu0 0.0
    %140 = vmatpush.msra.mxu0 0.0
    %141 = vmatpush.msra.mxu0 0.0
    %142 = vmatpush.msra.mxu0 0.0
    %143 = vmatpush.msra.mxu0 0.0
    %144 = vmatpush.msra.mxu0 0.0
    %145 = vmatpush.msra.mxu0 0.0
    %146 = vmatpush.msra.mxu0 0.0
    %147 = vmatpush.msra.mxu0 %v126
    %148 = vmatpush.msra.mxu0 %v125
    %149 = vmatpush.msra.mxu0 %v124
    %150 = vmatpush.msra.mxu0 %v123
    %151 = vmatmul.f32.gmra.mxu0 %v133
    %v152 = vpop.f32.mrf.mxu0
    %v153 = vadd.f32 %v129, %v152
    %154 = vdwg.mxu0
    %v155 = vsub.f32 0.0, %v153
    %v156 = vmul.f32 %v155, 1.442695
    %v157 = vpow.pop %v156
    %v158 = vadd.f32 %v157, 1.0
    %v159 = vrcp.pop %v158
    %v160 = vmul.f32 %v153, %v159
    %v161 = vld [vmem:[%s4] sm:$0xff]
    %v162 = vld [vmem:[%s4 + $0x8] sm:$0xff]
    %v163 = vld [vmem:[%s4 + $0x10] sm:$0xff]
    %v164 = vld [vmem:[%s4 + $0x18] sm:$0xff]
    %v165 = vld [vmem:[%s4 + $0x20] sm:$0xff]
    %v166 = vld [vmem:[%s4 + $0x28] sm:$0xff]
    %v167 = vld [vmem:[%s4 + $0x30] sm:$0xff]
    %v168 = vld [vmem:[%s4 + $0x38] sm:$0xff]
    %v169 = vld [vmem:[%s5] sm:$0x1]
    %v171 = vperm.slane %v169, 0
    %vm173 = vcmask 523264
    %v175 = vsel %vm173, %v160, 0
    %177 = vmatpush.msra.mxu0 0.0
    %178 = vmatpush.msra.mxu0 0.0
    %179 = vmatpush.msra.mxu0 0.0
    %180 = vmatpush.msra.mxu0 0.0
    %181 = vmatpush.msra.mxu0 0.0
    %182 = vmatpush.msra.mxu0 0.0
    %183 = vmatpush.msra.mxu0 0.0
    %184 = vmatpush.msra.mxu0 0.0
    %185 = vmatpush.msra.mxu0 %v168
    %186 = vmatpush.msra.mxu0 %v167
    %187 = vmatpush.msra.mxu0 %v166
    %188 = vmatpush.msra.mxu0 %v165
    %189 = vmatpush.msra.mxu0 %v164
    %190 = vmatpush.msra.mxu0 %v163
    %191 = vmatpush.msra.mxu0 %v162
    %192 = vmatpush.msra.mxu0 %v161
    %193 = vmatmul.f32.gmra.mxu0 %v175
    %v194 = vpop.f32.mrf.mxu0
    %v195 = vadd.f32 %v171, %v194
    %196 = vdwg.mxu0
    %v197 = vld [vmem:[%s1] sm:$0xff]
    %v198 = vld [vmem:[%s1 + $0x8] sm:$0xff]
    %v199 = vld [vmem:[%s1 + $0x10] sm:$0xff]
    %v200 = vld [vmem:[#allocation5] sm:$0xff]
    %v201 = vld [vmem:[#allocation5 + $0x8] sm:$0xff]
    %v202 = vld [vmem:[#allocation5 + $0x10] sm:$0xff]
    %v203 = vld [vmem:[#allocation5 + $0x18] sm:$0xff]
    %v204 = vld [vmem:[#allocation5 + $0x20] sm:$0xff]
    %v205 = vld [vmem:[#allocation5 + $0x28] sm:$0xff]
    %v206 = vld [vmem:[#allocation5 + $0x30] sm:$0xff]
    %v207 = vld [vmem:[#allocation5 + $0x38] sm:$0xff]
    %v208 = vld [vmem:[#allocation5 + $0x40] sm:$0xff]
    %v209 = vld [vmem:[#allocation5 + $0x48] sm:$0xff]
    %v210 = vld [vmem:[#allocation5 + $0x50] sm:$0xff]
    %v211 = vld [vmem:[#allocation5 + $0x58] sm:$0xff]
    %v212 = vld [vmem:[#allocation5 + $0x60] sm:$0xff]
    %v213 = vld [vmem:[#allocation5 + $0x68] sm:$0xff]
    %v214 = vld [vmem:[#allocation5 + $0x70] sm:$0xff]
    %v215 = vld [vmem:[#allocation5 + $0x78] sm:$0xff]
    %v216 = vld [vmem:[#allocation5 + $0x80] sm:$0xff]
    %v217 = vld [vmem:[#allocation5 + $0x88] sm:$0xff]
    %v218 = vld [vmem:[#allocation5 + $0x90] sm:$0xff]
    %v219 = vld [vmem:[#allocation5 + $0x98] sm:$0xff]
    %v220 = vld [vmem:[#allocation5 + $0xa0] sm:$0xff]
    %v221 = vld [vmem:[#allocation5 + $0xa8] sm:$0xff]
    %v222 = vld [vmem:[#allocation5 + $0xb0] sm:$0xff]
    %v223 = vld [vmem:[#allocation5 + $0xb8] sm:$0xff]
    %v224 = vld [vmem:[#allocation5 + $0xc0] sm:$0xff]
    %v225 = vld [vmem:[#allocation5 + $0xc8] sm:$0xff]
    %v226 = vld [vmem:[#allocation5 + $0xd0] sm:$0xff]
    %v227 = vld [vmem:[#allocation5 + $0xd8] sm:$0xff]
    %v228 = vld [vmem:[#allocation5 + $0xe0] sm:$0xff]
    %v229 = vld [vmem:[#allocation5 + $0xe8] sm:$0xff]
    %v230 = vld [vmem:[#allocation5 + $0xf0] sm:$0xff]
    %v231 = vld [vmem:[#allocation5 + $0xf8] sm:$0xff]
    %v232 = vld [vmem:[#allocation5 + $0x100] sm:$0xff]
    %v233 = vld [vmem:[#allocation5 + $0x108] sm:$0xff]
    %v234 = vld [vmem:[#allocation5 + $0x110] sm:$0xff]
    %v235 = vld [vmem:[#allocation5 + $0x118] sm:$0xff]
    %v236 = vld [vmem:[#allocation5 + $0x120] sm:$0xff]
    %v237 = vld [vmem:[#allocation5 + $0x128] sm:$0xff]
    %v238 = vld [vmem:[#allocation5 + $0x130] sm:$0xff]
    %v239 = vld [vmem:[#allocation5 + $0x138] sm:$0xff]
    %v240 = vld [vmem:[#allocation5 + $0x140] sm:$0xff]
    %v241 = vld [vmem:[#allocation5 + $0x148] sm:$0xff]
    %v242 = vld [vmem:[#allocation5 + $0x150] sm:$0xff]
    %v243 = vld [vmem:[#allocation5 + $0x158] sm:$0xff]
    %v244 = vld [vmem:[#allocation5 + $0x160] sm:$0xff]
    %v245 = vld [vmem:[#allocation5 + $0x168] sm:$0xff]
    %v246 = vld [vmem:[#allocation5 + $0x170] sm:$0xff]
    %v247 = vld [vmem:[#allocation5 + $0x178] sm:$0xff]
    %v248 = vld [vmem:[#allocation5 + $0x180] sm:$0xff]
    %v249 = vld [vmem:[#allocation5 + $0x188] sm:$0xff]
    %v250 = vld [vmem:[#allocation5 + $0x190] sm:$0xff]
    %v251 = vld [vmem:[#allocation5 + $0x198] sm:$0xff]
    %v252 = vld [vmem:[#allocation5 + $0x1a0] sm:$0xff]
    %v253 = vld [vmem:[#allocation5 + $0x1a8] sm:$0xff]
    %v254 = vld [vmem:[#allocation5 + $0x1b0] sm:$0xff]
    %v255 = vld [vmem:[#allocation5 + $0x1b8] sm:$0xff]
    %v256 = vld [vmem:[#allocation5 + $0x1c0] sm:$0xff]
    %v257 = vld [vmem:[#allocation5 + $0x1c8] sm:$0xff]
    %v258 = vld [vmem:[#allocation5 + $0x1d0] sm:$0xff]
    %v259 = vld [vmem:[#allocation5 + $0x1d8] sm:$0xff]
    %v260 = vld [vmem:[#allocation5 + $0x1e0] sm:$0xff]
    %v261 = vld [vmem:[#allocation5 + $0x1e8] sm:$0xff]
    %v262 = vld [vmem:[#allocation5 + $0x1f0] sm:$0xff]
    %v263 = vld [vmem:[#allocation5 + $0x1f8] sm:$0xff]
    %v264 = vld [vmem:[#allocation5 + $0x200] sm:$0xff]
    %v265 = vld [vmem:[#allocation5 + $0x208] sm:$0xff]
    %v266 = vld [vmem:[#allocation5 + $0x210] sm:$0xff]
    %v267 = vld [vmem:[#allocation5 + $0x218] sm:$0xff]
    %v268 = vld [vmem:[#allocation5 + $0x220] sm:$0xff]
    %v269 = vld [vmem:[#allocation5 + $0x228] sm:$0xff]
    %v270 = vld [vmem:[#allocation5 + $0x230] sm:$0xff]
    %v271 = vld [vmem:[#allocation5 + $0x238] sm:$0xff]
    %v272 = vld [vmem:[#allocation5 + $0x240] sm:$0xff]
    %v273 = vld [vmem:[#allocation5 + $0x248] sm:$0xff]
    %v274 = vld [vmem:[#allocation5 + $0x250] sm:$0xff]
    %v275 = vld [vmem:[#allocation5 + $0x258] sm:$0xff]
    %v276 = vld [vmem:[#allocation5 + $0x260] sm:$0xff]
    %v277 = vld [vmem:[#allocation5 + $0x268] sm:$0xff]
    %v278 = vld [vmem:[#allocation5 + $0x270] sm:$0xff]
    %v279 = vld [vmem:[#allocation5 + $0x278] sm:$0xff]
    %v280 = vld [vmem:[#allocation5 + $0x280] sm:$0xff]
    %v281 = vld [vmem:[#allocation5 + $0x288] sm:$0xff]
    %v282 = vld [vmem:[#allocation5 + $0x290] sm:$0xff]
    %v283 = vld [vmem:[#allocation5 + $0x298] sm:$0xff]
    %v284 = vld [vmem:[#allocation5 + $0x2a0] sm:$0xff]
    %v285 = vld [vmem:[#allocation5 + $0x2a8] sm:$0xff]
    %v286 = vld [vmem:[#allocation5 + $0x2b0] sm:$0xff]
    %v287 = vld [vmem:[#allocation5 + $0x2b8] sm:$0xff]
    %v288 = vld [vmem:[#allocation5 + $0x2c0] sm:$0xff]
    %v289 = vld [vmem:[#allocation5 + $0x2c8] sm:$0xff]
    %v290 = vld [vmem:[#allocation5 + $0x2d0] sm:$0xff]
    %v291 = vld [vmem:[#allocation5 + $0x2d8] sm:$0xff]
    %v292 = vld [vmem:[#allocation5 + $0x2e0] sm:$0xff]
    %v293 = vld [vmem:[#allocation5 + $0x2e8] sm:$0xff]
    %v294 = vld [vmem:[#allocation5 + $0x2f0] sm:$0xff]
    %v295 = vld [vmem:[#allocation5 + $0x2f8] sm:$0xff]
    %v296 = vld [vmem:[#allocation5 + $0x300] sm:$0xff]
    %v297 = vld [vmem:[#allocation5 + $0x308] sm:$0xff]
    %v298 = vld [vmem:[#allocation5 + $0x310] sm:$0xff]
    %v299 = vld [vmem:[#allocation5 + $0x318] sm:$0xff]
    %v300 = vld [vmem:[#allocation5 + $0x320] sm:$0xff]
    %v301 = vld [vmem:[#allocation5 + $0x328] sm:$0xff]
    %v302 = vld [vmem:[#allocation5 + $0x330] sm:$0xff]
    %v303 = vld [vmem:[#allocation5 + $0x338] sm:$0xff]
    %v304 = vld [vmem:[#allocation5 + $0x340] sm:$0xff]
    %v305 = vld [vmem:[#allocation5 + $0x348] sm:$0xff]
    %v306 = vld [vmem:[#allocation5 + $0x350] sm:$0xff]
    %v307 = vld [vmem:[#allocation5 + $0x358] sm:$0xff]
    %v308 = vld [vmem:[#allocation5 + $0x360] sm:$0xff]
    %v309 = vld [vmem:[#allocation5 + $0x368] sm:$0xff]
    %v310 = vld [vmem:[#allocation5 + $0x370] sm:$0xff]
    %v311 = vld [vmem:[#allocation5 + $0x378] sm:$0xff]
    %v312 = vld [vmem:[#allocation5 + $0x380] sm:$0xff]
    %v313 = vld [vmem:[#allocation5 + $0x388] sm:$0xff]
    %v314 = vld [vmem:[#allocation5 + $0x390] sm:$0xff]
    %v315 = vld [vmem:[#allocation5 + $0x398] sm:$0xff]
    %v316 = vld [vmem:[#allocation5 + $0x3a0] sm:$0xff]
    %v317 = vld [vmem:[#allocation5 + $0x3a8] sm:$0xff]
    %v318 = vld [vmem:[#allocation5 + $0x3b0] sm:$0xff]
    %v319 = vld [vmem:[#allocation5 + $0x3b8] sm:$0xff]
    %v320 = vld [vmem:[#allocation5 + $0x3c0] sm:$0xff]
    %v321 = vld [vmem:[#allocation5 + $0x3c8] sm:$0xff]
    %v322 = vld [vmem:[#allocation5 + $0x3d0] sm:$0xff]
    %v323 = vld [vmem:[#allocation5 + $0x3d8] sm:$0xff]
    %v324 = vld [vmem:[#allocation5 + $0x3e0] sm:$0xff]
    %v325 = vld [vmem:[#allocation5 + $0x3e8] sm:$0xff]
    %v326 = vld [vmem:[#allocation5 + $0x3f0] sm:$0xff]
    %v327 = vld [vmem:[#allocation5 + $0x3f8] sm:$0xff]
    %v328 = vld [vmem:[#allocation5 + $0x400] sm:$0xff]
    %v329 = vld [vmem:[#allocation5 + $0x408] sm:$0xff]
    %v330 = vld [vmem:[#allocation5 + $0x410] sm:$0xff]
    %v331 = vld [vmem:[#allocation5 + $0x418] sm:$0xff]
    %v332 = vld [vmem:[#allocation5 + $0x420] sm:$0xff]
    %v333 = vld [vmem:[#allocation5 + $0x428] sm:$0xff]
    %v334 = vld [vmem:[#allocation5 + $0x430] sm:$0xff]
    %v335 = vld [vmem:[#allocation5 + $0x438] sm:$0xff]
    %v336 = vld [vmem:[#allocation5 + $0x440] sm:$0xff]
    %v337 = vld [vmem:[#allocation5 + $0x448] sm:$0xff]
    %v338 = vld [vmem:[#allocation5 + $0x450] sm:$0xff]
    %v339 = vld [vmem:[#allocation5 + $0x458] sm:$0xff]
    %v340 = vld [vmem:[#allocation5 + $0x460] sm:$0xff]
    %v341 = vld [vmem:[#allocation5 + $0x468] sm:$0xff]
    %v342 = vld [vmem:[#allocation5 + $0x470] sm:$0xff]
    %v343 = vld [vmem:[#allocation5 + $0x478] sm:$0xff]
    %v344 = vld [vmem:[#allocation5 + $0x480] sm:$0xff]
    %v345 = vld [vmem:[#allocation5 + $0x488] sm:$0xff]
    %v346 = vld [vmem:[#allocation5 + $0x490] sm:$0xff]
    %v347 = vld [vmem:[#allocation5 + $0x498] sm:$0xff]
    %v348 = vld [vmem:[#allocation5 + $0x4a0] sm:$0xff]
    %v349 = vld [vmem:[#allocation5 + $0x4a8] sm:$0xff]
    %v350 = vld [vmem:[#allocation5 + $0x4b0] sm:$0xff]
    %v351 = vld [vmem:[#allocation5 + $0x4b8] sm:$0xff]
    %v352 = vld [vmem:[#allocation5 + $0x4c0] sm:$0xff]
    %v353 = vld [vmem:[#allocation5 + $0x4c8] sm:$0xff]
    %v354 = vld [vmem:[#allocation5 + $0x4d0] sm:$0xff]
    %v355 = vld [vmem:[#allocation5 + $0x4d8] sm:$0xff]
    %v356 = vld [vmem:[#allocation5 + $0x4e0] sm:$0xff]
    %v357 = vld [vmem:[#allocation5 + $0x4e8] sm:$0xff]
    %v358 = vld [vmem:[#allocation5 + $0x4f0] sm:$0xff]
    %v359 = vld [vmem:[#allocation5 + $0x4f8] sm:$0xff]
    %v360 = vld [vmem:[#allocation5 + $0x500] sm:$0xff]
    %v361 = vld [vmem:[#allocation5 + $0x508] sm:$0xff]
    %v362 = vld [vmem:[#allocation5 + $0x510] sm:$0xff]
    %v363 = vld [vmem:[#allocation5 + $0x518] sm:$0xff]
    %v364 = vld [vmem:[#allocation5 + $0x520] sm:$0xff]
    %v365 = vld [vmem:[#allocation5 + $0x528] sm:$0xff]
    %v366 = vld [vmem:[#allocation5 + $0x530] sm:$0xff]
    %v367 = vld [vmem:[#allocation5 + $0x538] sm:$0xff]
    %v368 = vld [vmem:[#allocation5 + $0x540] sm:$0xff]
    %v369 = vld [vmem:[#allocation5 + $0x548] sm:$0xff]
    %v370 = vld [vmem:[#allocation5 + $0x550] sm:$0xff]
    %v371 = vld [vmem:[#allocation5 + $0x558] sm:$0xff]
    %v372 = vld [vmem:[#allocation5 + $0x560] sm:$0xff]
    %v373 = vld [vmem:[#allocation5 + $0x568] sm:$0xff]
    %v374 = vld [vmem:[#allocation5 + $0x570] sm:$0xff]
    %v375 = vld [vmem:[#allocation5 + $0x578] sm:$0xff]
    %v376 = vld [vmem:[#allocation5 + $0x580] sm:$0xff]
    %v377 = vld [vmem:[#allocation5 + $0x588] sm:$0xff]
    %v378 = vld [vmem:[#allocation5 + $0x590] sm:$0xff]
    %v379 = vld [vmem:[#allocation5 + $0x598] sm:$0xff]
    %v380 = vld [vmem:[#allocation5 + $0x5a0] sm:$0xff]
    %v381 = vld [vmem:[#allocation5 + $0x5a8] sm:$0xff]
    %v382 = vld [vmem:[#allocation5 + $0x5b0] sm:$0xff]
    %v383 = vld [vmem:[#allocation5 + $0x5b8] sm:$0xff]
    %v384 = vld [vmem:[#allocation5 + $0x5c0] sm:$0xff]
    %v385 = vld [vmem:[#allocation5 + $0x5c8] sm:$0xff]
    %v386 = vld [vmem:[#allocation5 + $0x5d0] sm:$0xff]
    %v387 = vld [vmem:[#allocation5 + $0x5d8] sm:$0xff]
    %v388 = vld [vmem:[#allocation5 + $0x5e0] sm:$0xff]
    %v389 = vld [vmem:[#allocation5 + $0x5e8] sm:$0xff]
    %v390 = vld [vmem:[#allocation5 + $0x5f0] sm:$0xff]
    %v391 = vld [vmem:[#allocation5 + $0x5f8] sm:$0xff]
    %v392 = vld [vmem:[#allocation5 + $0x600] sm:$0xff]
    %v393 = vld [vmem:[#allocation5 + $0x608] sm:$0xff]
    %v394 = vld [vmem:[#allocation5 + $0x610] sm:$0xff]
    %v395 = vld [vmem:[#allocation5 + $0x618] sm:$0xff]
    %v396 = vld [vmem:[#allocation5 + $0x620] sm:$0xff]
    %v397 = vld [vmem:[#allocation5 + $0x628] sm:$0xff]
    %v398 = vld [vmem:[#allocation5 + $0x630] sm:$0xff]
    %v399 = vld [vmem:[#allocation5 + $0x638] sm:$0xff]
    %v400 = vld [vmem:[#allocation5 + $0x640] sm:$0xff]
    %v401 = vld [vmem:[#allocation5 + $0x648] sm:$0xff]
    %v402 = vld [vmem:[#allocation5 + $0x650] sm:$0xff]
    %v403 = vld [vmem:[#allocation5 + $0x658] sm:$0xff]
    %v404 = vld [vmem:[#allocation5 + $0x660] sm:$0xff]
    %v405 = vld [vmem:[#allocation5 + $0x668] sm:$0xff]
    %v406 = vld [vmem:[#allocation5 + $0x670] sm:$0xff]
    %v407 = vld [vmem:[#allocation5 + $0x678] sm:$0xff]
    %v408 = vld [vmem:[#allocation5 + $0x680] sm:$0xff]
    %v409 = vld [vmem:[#allocation5 + $0x688] sm:$0xff]
    %v410 = vld [vmem:[#allocation5 + $0x690] sm:$0xff]
    %v411 = vld [vmem:[#allocation5 + $0x698] sm:$0xff]
    %v412 = vld [vmem:[#allocation5 + $0x6a0] sm:$0xff]
    %v413 = vld [vmem:[#allocation5 + $0x6a8] sm:$0xff]
    %v414 = vld [vmem:[#allocation5 + $0x6b0] sm:$0xff]
    %v415 = vld [vmem:[#allocation5 + $0x6b8] sm:$0xff]
    %v416 = vld [vmem:[#allocation5 + $0x6c0] sm:$0xff]
    %v417 = vld [vmem:[#allocation5 + $0x6c8] sm:$0xff]
    %v418 = vld [vmem:[#allocation5 + $0x6d0] sm:$0xff]
    %v419 = vld [vmem:[#allocation5 + $0x6d8] sm:$0xff]
    %v420 = vld [vmem:[#allocation5 + $0x6e0] sm:$0xff]
    %v421 = vld [vmem:[#allocation5 + $0x6e8] sm:$0xff]
    %v422 = vld [vmem:[#allocation5 + $0x6f0] sm:$0xff]
    %v423 = vld [vmem:[#allocation5 + $0x6f8] sm:$0xff]
    %v424 = vld [vmem:[#allocation5 + $0x700] sm:$0xff]
    %v425 = vld [vmem:[#allocation5 + $0x708] sm:$0xff]
    %v426 = vld [vmem:[#allocation5 + $0x710] sm:$0xff]
    %v427 = vld [vmem:[#allocation5 + $0x718] sm:$0xff]
    %v428 = vld [vmem:[#allocation5 + $0x720] sm:$0xff]
    %v429 = vld [vmem:[#allocation5 + $0x728] sm:$0xff]
    %v430 = vld [vmem:[#allocation5 + $0x730] sm:$0xff]
    %v431 = vld [vmem:[#allocation5 + $0x738] sm:$0xff]
    %v432 = vld [vmem:[#allocation5 + $0x740] sm:$0xff]
    %v433 = vld [vmem:[#allocation5 + $0x748] sm:$0xff]
    %v434 = vld [vmem:[#allocation5 + $0x750] sm:$0xff]
    %v435 = vld [vmem:[#allocation5 + $0x758] sm:$0xff]
    %v436 = vld [vmem:[#allocation5 + $0x760] sm:$0xff]
    %v437 = vld [vmem:[#allocation5 + $0x768] sm:$0xff]
    %v438 = vld [vmem:[#allocation5 + $0x770] sm:$0xff]
    %v439 = vld [vmem:[#allocation5 + $0x778] sm:$0xff]
    %v440 = vld [vmem:[#allocation5 + $0x780] sm:$0xff]
    %v441 = vld [vmem:[#allocation5 + $0x788] sm:$0xff]
    %v442 = vld [vmem:[#allocation5 + $0x790] sm:$0xff]
    %v443 = vld [vmem:[#allocation5 + $0x798] sm:$0xff]
    %v444 = vld [vmem:[#allocation5 + $0x7a0] sm:$0xff]
    %v445 = vld [vmem:[#allocation5 + $0x7a8] sm:$0xff]
    %v446 = vld [vmem:[#allocation5 + $0x7b0] sm:$0xff]
    %v447 = vld [vmem:[#allocation5 + $0x7b8] sm:$0xff]
    %v448 = vld [vmem:[#allocation5 + $0x7c0] sm:$0xff]
    %v449 = vld [vmem:[#allocation5 + $0x7c8] sm:$0xff]
    %v450 = vld [vmem:[#allocation5 + $0x7d0] sm:$0xff]
    %v451 = vld [vmem:[#allocation5 + $0x7d8] sm:$0xff]
    %v452 = vld [vmem:[#allocation5 + $0x7e0] sm:$0xff]
    %v453 = vld [vmem:[#allocation5 + $0x7e8] sm:$0xff]
    %v454 = vld [vmem:[#allocation5 + $0x7f0] sm:$0xff]
    %v455 = vld [vmem:[#allocation5 + $0x7f8] sm:$0xff]
    %v456 = vld [vmem:[#allocation5 + $0x800] sm:$0xff]
    %v457 = vld [vmem:[#allocation5 + $0x808] sm:$0xff]
    %v458 = vld [vmem:[#allocation5 + $0x810] sm:$0xff]
    %v459 = vld [vmem:[#allocation5 + $0x818] sm:$0xff]
    %v460 = vld [vmem:[#allocation5 + $0x820] sm:$0xff]
    %v461 = vld [vmem:[#allocation5 + $0x828] sm:$0xff]
    %v462 = vld [vmem:[#allocation5 + $0x830] sm:$0xff]
    %v463 = vld [vmem:[#allocation5 + $0x838] sm:$0xff]
    %v464 = vld [vmem:[#allocation5 + $0x840] sm:$0xff]
    %v465 = vld [vmem:[#allocation5 + $0x848] sm:$0xff]
    %v466 = vld [vmem:[#allocation5 + $0x850] sm:$0xff]
    %v467 = vld [vmem:[#allocation5 + $0x858] sm:$0xff]
    %v468 = vld [vmem:[#allocation5 + $0x860] sm:$0xff]
    %v469 = vld [vmem:[#allocation5 + $0x868] sm:$0xff]
    %v470 = vld [vmem:[#allocation5 + $0x870] sm:$0xff]
    %v471 = vld [vmem:[#allocation5 + $0x878] sm:$0xff]
    %v472 = vld [vmem:[#allocation5 + $0x880] sm:$0xff]
    %v473 = vld [vmem:[#allocation5 + $0x888] sm:$0xff]
    %v474 = vld [vmem:[#allocation5 + $0x890] sm:$0xff]
    %v475 = vld [vmem:[#allocation5 + $0x898] sm:$0xff]
    %v476 = vld [vmem:[#allocation5 + $0x8a0] sm:$0xff]
    %v477 = vld [vmem:[#allocation5 + $0x8a8] sm:$0xff]
    %v478 = vld [vmem:[#allocation5 + $0x8b0] sm:$0xff]
    %v479 = vld [vmem:[#allocation5 + $0x8b8] sm:$0xff]
    %v480 = vld [vmem:[#allocation5 + $0x8c0] sm:$0xff]
    %v481 = vld [vmem:[#allocation5 + $0x8c8] sm:$0xff]
    %v482 = vld [vmem:[#allocation5 + $0x8d0] sm:$0xff]
    %v483 = vld [vmem:[#allocation5 + $0x8d8] sm:$0xff]
    %v484 = vld [vmem:[#allocation5 + $0x8e0] sm:$0xff]
    %v485 = vld [vmem:[#allocation5 + $0x8e8] sm:$0xff]
    %v486 = vld [vmem:[#allocation5 + $0x8f0] sm:$0xff]
    %v487 = vld [vmem:[#allocation5 + $0x8f8] sm:$0xff]
    %v488 = vld [vmem:[#allocation5 + $0x900] sm:$0xff]
    %v489 = vld [vmem:[#allocation5 + $0x908] sm:$0xff]
    %v490 = vld [vmem:[#allocation5 + $0x910] sm:$0xff]
    %v491 = vld [vmem:[#allocation5 + $0x918] sm:$0xff]
    %v492 = vld [vmem:[#allocation5 + $0x920] sm:$0xff]
    %v493 = vld [vmem:[#allocation5 + $0x928] sm:$0xff]
    %v494 = vld [vmem:[#allocation5 + $0x930] sm:$0xff]
    %v495 = vld [vmem:[#allocation5 + $0x938] sm:$0xff]
    %v496 = vld [vmem:[#allocation5 + $0x940] sm:$0xf]
    %v497 = vld [vmem:[#allocation5 + $0x948] sm:$0xf]
    %v498 = vld [vmem:[#allocation5 + $0x950] sm:$0xf]
    %v499 = vld [vmem:[#allocation5 + $0x958] sm:$0xf]
    %v500 = vld [vmem:[#allocation5 + $0x960] sm:$0xf]
    %v501 = vld [vmem:[#allocation5 + $0x968] sm:$0xf]
    %v502 = vld [vmem:[#allocation5 + $0x970] sm:$0xf]
    %v503 = vld [vmem:[#allocation5 + $0x978] sm:$0xf]
    %v504 = vld [vmem:[%s7] sm:$0xff]
    %v506 = vperm.slane %v504, 0
    %v507 = vperm.slane %v504, 1
    %v508 = vperm.slane %v504, 2
    %v509 = vperm.slane %v504, 3
    %v510 = vperm.slane %v504, 4
    %v511 = vperm.slane %v504, 5
    %v512 = vperm.slane %v504, 6
    %v513 = vperm.slane %v504, 7
    %vm522 = vcmask 359424
    %v524 = vsel %vm522, %v199, 0
    %vm526 = vcmask 1043456
    %v528 = vsel %vm526, %v496, 0
    %v531 = vsel %vm526, %v497, 0
    %v534 = vsel %vm526, %v498, 0
    %v537 = vsel %vm526, %v499, 0
    %v540 = vsel %vm526, %v500, 0
    %v543 = vsel %vm526, %v501, 0
    %v546 = vsel %vm526, %v502, 0
    %v549 = vsel %vm526, %v503, 0
    %551 = vmatpush.msra.mxu0 %v320
    %552 = vmatpush.msra.mxu0 %v312
    %553 = vmatpush.msra.mxu0 %v304
    %554 = vmatpush.msra.mxu0 %v296
    %555 = vmatpush.msra.mxu0 %v288
    %556 = vmatpush.msra.mxu0 %v280
    %557 = vmatpush.msra.mxu0 %v272
    %558 = vmatpush.msra.mxu0 %v264
    %559 = vmatpush.msra.mxu0 %v256
    %560 = vmatpush.msra.mxu0 %v248
    %561 = vmatpush.msra.mxu0 %v240
    %562 = vmatpush.msra.mxu0 %v232
    %563 = vmatpush.msra.mxu0 %v224
    %564 = vmatpush.msra.mxu0 %v216
    %565 = vmatpush.msra.mxu0 %v208
    %566 = vmatpush.msra.mxu0 %v200
    %567 = vmatmul.f32.gmra.mxu0 %v197
    %v568 = vpop.f32.mrf.mxu0
    %v569 = vadd.f32 %v506, %v568
    %570 = vdwg.mxu0
    %571 = vmatpush.msra.mxu0 %v448
    %572 = vmatpush.msra.mxu0 %v440
    %573 = vmatpush.msra.mxu0 %v432
    %574 = vmatpush.msra.mxu0 %v424
    %575 = vmatpush.msra.mxu0 %v416
    %576 = vmatpush.msra.mxu0 %v408
    %577 = vmatpush.msra.mxu0 %v400
    %578 = vmatpush.msra.mxu0 %v392
    %579 = vmatpush.msra.mxu0 %v384
    %580 = vmatpush.msra.mxu0 %v376
    %581 = vmatpush.msra.mxu0 %v368
    %582 = vmatpush.msra.mxu0 %v360
    %583 = vmatpush.msra.mxu0 %v352
    %584 = vmatpush.msra.mxu0 %v344
    %585 = vmatpush.msra.mxu0 %v336
    %586 = vmatpush.msra.mxu0 %v328
    %587 = vmatmul.f32.gmra.mxu0 %v198
    %v588 = vpop.f32.mrf.mxu0
    %v589 = vadd.f32 %v569, %v588
    %590 = vdwg.mxu0
    %591 = vmatpush.msra.mxu0 0.0
    %592 = vmatpush.msra.mxu0 0.0
    %593 = vmatpush.msra.mxu0 0.0
    %594 = vmatpush.msra.mxu0 0.0
    %595 = vmatpush.msra.mxu0 0.0
    %596 = vmatpush.msra.mxu0 0.0
    %597 = vmatpush.msra.mxu0 0.0
    %598 = vmatpush.msra.mxu0 0.0
    %599 = vmatpush.msra.mxu0 0.0
    %600 = vmatpush.msra.mxu0 0.0
    %601 = vmatpush.msra.mxu0 %v528
    %602 = vmatpush.msra.mxu0 %v488
    %603 = vmatpush.msra.mxu0 %v480
    %604 = vmatpush.msra.mxu0 %v472
    %605 = vmatpush.msra.mxu0 %v464
    %606 = vmatpush.msra.mxu0 %v456
    %607 = vmatmul.f32.gmra.mxu0 %v524
    %v608 = vpop.f32.mrf.mxu0
    %v609 = vadd.f32 %v589, %v608
    %610 = vdwg.mxu0
    %611 = vmatpush.msra.mxu0 %v321
    %612 = vmatpush.msra.mxu0 %v313
    %613 = vmatpush.msra.mxu0 %v305
    %614 = vmatpush.msra.mxu0 %v297
    %615 = vmatpush.msra.mxu0 %v289
    %616 = vmatpush.msra.mxu0 %v281
    %617 = vmatpush.msra.mxu0 %v273
    %618 = vmatpush.msra.mxu0 %v265
    %619 = vmatpush.msra.mxu0 %v257
    %620 = vmatpush.msra.mxu0 %v249
    %621 = vmatpush.msra.mxu0 %v241
    %622 = vmatpush.msra.mxu0 %v233
    %623 = vmatpush.msra.mxu0 %v225
    %624 = vmatpush.msra.mxu0 %v217
    %625 = vmatpush.msra.mxu0 %v209
    %626 = vmatpush.msra.mxu0 %v201
    %627 = vmatmul.f32.gmra.mxu0 %v197
    %v628 = vpop.f32.mrf.mxu0
    %v629 = vadd.f32 %v507, %v628
    %630 = vdwg.mxu0
    %631 = vmatpush.msra.mxu0 %v449
    %632 = vmatpush.msra.mxu0 %v441
    %633 = vmatpush.msra.mxu0 %v433
    %634 = vmatpush.msra.mxu0 %v425
    %635 = vmatpush.msra.mxu0 %v417
    %636 = vmatpush.msra.mxu0 %v409
    %637 = vmatpush.msra.mxu0 %v401
    %638 = vmatpush.msra.mxu0 %v393
    %639 = vmatpush.msra.mxu0 %v385
    %640 = vmatpush.msra.mxu0 %v377
    %641 = vmatpush.msra.mxu0 %v369
    %642 = vmatpush.msra.mxu0 %v361
    %643 = vmatpush.msra.mxu0 %v353
    %644 = vmatpush.msra.mxu0 %v345
    %645 = vmatpush.msra.mxu0 %v337
    %646 = vmatpush.msra.mxu0 %v329
    %647 = vmatmul.f32.gmra.mxu0 %v198
    %v648 = vpop.f32.mrf.mxu0
    %v649 = vadd.f32 %v629, %v648
    %650 = vdwg.mxu0
    %651 = vmatpush.msra.mxu0 0.0
    %652 = vmatpush.msra.mxu0 0.0
    %653 = vmatpush.msra.mxu0 0.0
    %654 = vmatpush.msra.mxu0 0.0
    %655 = vmatpush.msra.mxu0 0.0
    %656 = vmatpush.msra.mxu0 0.0
    %657 = vmatpush.msra.mxu0 0.0
    %658 = vmatpush.msra.mxu0 0.0
    %659 = vmatpush.msra.mxu0 0.0
    %660 = vmatpush.msra.mxu0 0.0
    %661 = vmatpush.msra.mxu0 %v531
    %662 = vmatpush.msra.mxu0 %v489
    %663 = vmatpush.msra.mxu0 %v481
    %664 = vmatpush.msra.mxu0 %v473
    %665 = vmatpush.msra.mxu0 %v465
    %666 = vmatpush.msra.mxu0 %v457
    %667 = vmatmul.f32.gmra.mxu0 %v524
    %v668 = vpop.f32.mrf.mxu0
    %v669 = vadd.f32 %v649, %v668
    %670 = vdwg.mxu0
    %671 = vmatpush.msra.mxu0 %v322
    %672 = vmatpush.msra.mxu0 %v314
    %673 = vmatpush.msra.mxu0 %v306
    %674 = vmatpush.msra.mxu0 %v298
    %675 = vmatpush.msra.mxu0 %v290
    %676 = vmatpush.msra.mxu0 %v282
    %677 = vmatpush.msra.mxu0 %v274
    %678 = vmatpush.msra.mxu0 %v266
    %679 = vmatpush.msra.mxu0 %v258
    %680 = vmatpush.msra.mxu0 %v250
    %681 = vmatpush.msra.mxu0 %v242
    %682 = vmatpush.msra.mxu0 %v234
    %683 = vmatpush.msra.mxu0 %v226
    %684 = vmatpush.msra.mxu0 %v218
    %685 = vmatpush.msra.mxu0 %v210
    %686 = vmatpush.msra.mxu0 %v202
    %687 = vmatmul.f32.gmra.mxu0 %v197
    %v688 = vpop.f32.mrf.mxu0
    %v689 = vadd.f32 %v508, %v688
    %690 = vdwg.mxu0
    %691 = vmatpush.msra.mxu0 %v450
    %692 = vmatpush.msra.mxu0 %v442
    %693 = vmatpush.msra.mxu0 %v434
    %694 = vmatpush.msra.mxu0 %v426
    %695 = vmatpush.msra.mxu0 %v418
    %696 = vmatpush.msra.mxu0 %v410
    %697 = vmatpush.msra.mxu0 %v402
    %698 = vmatpush.msra.mxu0 %v394
    %699 = vmatpush.msra.mxu0 %v386
    %700 = vmatpush.msra.mxu0 %v378
    %701 = vmatpush.msra.mxu0 %v370
    %702 = vmatpush.msra.mxu0 %v362
    %703 = vmatpush.msra.mxu0 %v354
    %704 = vmatpush.msra.mxu0 %v346
    %705 = vmatpush.msra.mxu0 %v338
    %706 = vmatpush.msra.mxu0 %v330
    %707 = vmatmul.f32.gmra.mxu0 %v198
    %v708 = vpop.f32.mrf.mxu0
    %v709 = vadd.f32 %v689, %v708
    %710 = vdwg.mxu0
    %711 = vmatpush.msra.mxu0 0.0
    %712 = vmatpush.msra.mxu0 0.0
    %713 = vmatpush.msra.mxu0 0.0
    %714 = vmatpush.msra.mxu0 0.0
    %715 = vmatpush.msra.mxu0 0.0
    %716 = vmatpush.msra.mxu0 0.0
    %717 = vmatpush.msra.mxu0 0.0
    %718 = vmatpush.msra.mxu0 0.0
    %719 = vmatpush.msra.mxu0 0.0
    %720 = vmatpush.msra.mxu0 0.0
    %721 = vmatpush.msra.mxu0 %v534
    %722 = vmatpush.msra.mxu0 %v490
    %723 = vmatpush.msra.mxu0 %v482
    %724 = vmatpush.msra.mxu0 %v474
    %725 = vmatpush.msra.mxu0 %v466
    %726 = vmatpush.msra.mxu0 %v458
    %727 = vmatmul.f32.gmra.mxu0 %v524
    %v728 = vpop.f32.mrf.mxu0
    %v729 = vadd.f32 %v709, %v728
    %730 = vdwg.mxu0
    %731 = vmatpush.msra.mxu0 %v323
    %732 = vmatpush.msra.mxu0 %v315
    %733 = vmatpush.msra.mxu0 %v307
    %734 = vmatpush.msra.mxu0 %v299
    %735 = vmatpush.msra.mxu0 %v291
    %736 = vmatpush.msra.mxu0 %v283
    %737 = vmatpush.msra.mxu0 %v275
    %738 = vmatpush.msra.mxu0 %v267
    %739 = vmatpush.msra.mxu0 %v259
    %740 = vmatpush.msra.mxu0 %v251
    %741 = vmatpush.msra.mxu0 %v243
    %742 = vmatpush.msra.mxu0 %v235
    %743 = vmatpush.msra.mxu0 %v227
    %744 = vmatpush.msra.mxu0 %v219
    %745 = vmatpush.msra.mxu0 %v211
    %746 = vmatpush.msra.mxu0 %v203
    %747 = vmatmul.f32.gmra.mxu0 %v197
    %v748 = vpop.f32.mrf.mxu0
    %v749 = vadd.f32 %v509, %v748
    %750 = vdwg.mxu0
    %751 = vmatpush.msra.mxu0 %v451
    %752 = vmatpush.msra.mxu0 %v443
    %753 = vmatpush.msra.mxu0 %v435
    %754 = vmatpush.msra.mxu0 %v427
    %755 = vmatpush.msra.mxu0 %v419
    %756 = vmatpush.msra.mxu0 %v411
    %757 = vmatpush.msra.mxu0 %v403
    %758 = vmatpush.msra.mxu0 %v395
    %759 = vmatpush.msra.mxu0 %v387
    %760 = vmatpush.msra.mxu0 %v379
    %761 = vmatpush.msra.mxu0 %v371
    %762 = vmatpush.msra.mxu0 %v363
    %763 = vmatpush.msra.mxu0 %v355
    %764 = vmatpush.msra.mxu0 %v347
    %765 = vmatpush.msra.mxu0 %v339
    %766 = vmatpush.msra.mxu0 %v331
    %767 = vmatmul.f32.gmra.mxu0 %v198
    %v768 = vpop.f32.mrf.mxu0
    %v769 = vadd.f32 %v749, %v768
    %770 = vdwg.mxu0
    %771 = vmatpush.msra.mxu0 0.0
    %772 = vmatpush.msra.mxu0 0.0
    %773 = vmatpush.msra.mxu0 0.0
    %774 = vmatpush.msra.mxu0 0.0
    %775 = vmatpush.msra.mxu0 0.0
    %776 = vmatpush.msra.mxu0 0.0
    %777 = vmatpush.msra.mxu0 0.0
    %778 = vmatpush.msra.mxu0 0.0
    %779 = vmatpush.msra.mxu0 0.0
    %780 = vmatpush.msra.mxu0 0.0
    %781 = vmatpush.msra.mxu0 %v537
    %782 = vmatpush.msra.mxu0 %v491
    %783 = vmatpush.msra.mxu0 %v483
    %784 = vmatpush.msra.mxu0 %v475
    %785 = vmatpush.msra.mxu0 %v467
    %786 = vmatpush.msra.mxu0 %v459
    %787 = vmatmul.f32.gmra.mxu0 %v524
    %v788 = vpop.f32.mrf.mxu0
    %v789 = vadd.f32 %v769, %v788
    %790 = vdwg.mxu0
    %791 = vmatpush.msra.mxu0 %v324
    %792 = vmatpush.msra.mxu0 %v316
    %793 = vmatpush.msra.mxu0 %v308
    %794 = vmatpush.msra.mxu0 %v300
    %795 = vmatpush.msra.mxu0 %v292
    %796 = vmatpush.msra.mxu0 %v284
    %797 = vmatpush.msra.mxu0 %v276
    %798 = vmatpush.msra.mxu0 %v268
    %799 = vmatpush.msra.mxu0 %v260
    %800 = vmatpush.msra.mxu0 %v252
    %801 = vmatpush.msra.mxu0 %v244
    %802 = vmatpush.msra.mxu0 %v236
    %803 = vmatpush.msra.mxu0 %v228
    %804 = vmatpush.msra.mxu0 %v220
    %805 = vmatpush.msra.mxu0 %v212
    %806 = vmatpush.msra.mxu0 %v204
    %807 = vmatmul.f32.gmra.mxu0 %v197
    %v808 = vpop.f32.mrf.mxu0
    %v809 = vadd.f32 %v510, %v808
    %810 = vdwg.mxu0
    %811 = vmatpush.msra.mxu0 %v452
    %812 = vmatpush.msra.mxu0 %v444
    %813 = vmatpush.msra.mxu0 %v436
    %814 = vmatpush.msra.mxu0 %v428
    %815 = vmatpush.msra.mxu0 %v420
    %816 = vmatpush.msra.mxu0 %v412
    %817 = vmatpush.msra.mxu0 %v404
    %818 = vmatpush.msra.mxu0 %v396
    %819 = vmatpush.msra.mxu0 %v388
    %820 = vmatpush.msra.mxu0 %v380
    %821 = vmatpush.msra.mxu0 %v372
    %822 = vmatpush.msra.mxu0 %v364
    %823 = vmatpush.msra.mxu0 %v356
    %824 = vmatpush.msra.mxu0 %v348
    %825 = vmatpush.msra.mxu0 %v340
    %826 = vmatpush.msra.mxu0 %v332
    %827 = vmatmul.f32.gmra.mxu0 %v198
    %v828 = vpop.f32.mrf.mxu0
    %v829 = vadd.f32 %v809, %v828
    %830 = vdwg.mxu0
    %831 = vmatpush.msra.mxu0 0.0
    %832 = vmatpush.msra.mxu0 0.0
    %833 = vmatpush.msra.mxu0 0.0
    %834 = vmatpush.msra.mxu0 0.0
    %835 = vmatpush.msra.mxu0 0.0
    %836 = vmatpush.msra.mxu0 0.0
    %837 = vmatpush.msra.mxu0 0.0
    %838 = vmatpush.msra.mxu0 0.0
    %839 = vmatpush.msra.mxu0 0.0
    %840 = vmatpush.msra.mxu0 0.0
    %841 = vmatpush.msra.mxu0 %v540
    %842 = vmatpush.msra.mxu0 %v492
    %843 = vmatpush.msra.mxu0 %v484
    %844 = vmatpush.msra.mxu0 %v476
    %845 = vmatpush.msra.mxu0 %v468
    %846 = vmatpush.msra.mxu0 %v460
    %847 = vmatmul.f32.gmra.mxu0 %v524
    %v848 = vpop.f32.mrf.mxu0
    %v849 = vadd.f32 %v829, %v848
    %850 = vdwg.mxu0
    %851 = vmatpush.msra.mxu0 %v325
    %852 = vmatpush.msra.mxu0 %v317
    %853 = vmatpush.msra.mxu0 %v309
    %854 = vmatpush.msra.mxu0 %v301
    %855 = vmatpush.msra.mxu0 %v293
    %856 = vmatpush.msra.mxu0 %v285
    %857 = vmatpush.msra.mxu0 %v277
    %858 = vmatpush.msra.mxu0 %v269
    %859 = vmatpush.msra.mxu0 %v261
    %860 = vmatpush.msra.mxu0 %v253
    %861 = vmatpush.msra.mxu0 %v245
    %862 = vmatpush.msra.mxu0 %v237
    %863 = vmatpush.msra.mxu0 %v229
    %864 = vmatpush.msra.mxu0 %v221
    %865 = vmatpush.msra.mxu0 %v213
    %866 = vmatpush.msra.mxu0 %v205
    %867 = vmatmul.f32.gmra.mxu0 %v197
    %v868 = vpop.f32.mrf.mxu0
    %v869 = vadd.f32 %v511, %v868
    %870 = vdwg.mxu0
    %871 = vmatpush.msra.mxu0 %v453
    %872 = vmatpush.msra.mxu0 %v445
    %873 = vmatpush.msra.mxu0 %v437
    %874 = vmatpush.msra.mxu0 %v429
    %875 = vmatpush.msra.mxu0 %v421
    %876 = vmatpush.msra.mxu0 %v413
    %877 = vmatpush.msra.mxu0 %v405
    %878 = vmatpush.msra.mxu0 %v397
    %879 = vmatpush.msra.mxu0 %v389
    %880 = vmatpush.msra.mxu0 %v381
    %881 = vmatpush.msra.mxu0 %v373
    %882 = vmatpush.msra.mxu0 %v365
    %883 = vmatpush.msra.mxu0 %v357
    %884 = vmatpush.msra.mxu0 %v349
    %885 = vmatpush.msra.mxu0 %v341
    %886 = vmatpush.msra.mxu0 %v333
    %887 = vmatmul.f32.gmra.mxu0 %v198
    %v888 = vpop.f32.mrf.mxu0
    %v889 = vadd.f32 %v869, %v888
    %890 = vdwg.mxu0
    %891 = vmatpush.msra.mxu0 0.0
    %892 = vmatpush.msra.mxu0 0.0
    %893 = vmatpush.msra.mxu0 0.0
    %894 = vmatpush.msra.mxu0 0.0
    %895 = vmatpush.msra.mxu0 0.0
    %896 = vmatpush.msra.mxu0 0.0
    %897 = vmatpush.msra.mxu0 0.0
    %898 = vmatpush.msra.mxu0 0.0
    %899 = vmatpush.msra.mxu0 0.0
    %900 = vmatpush.msra.mxu0 0.0
    %901 = vmatpush.msra.mxu0 %v543
    %902 = vmatpush.msra.mxu0 %v493
    %903 = vmatpush.msra.mxu0 %v485
    %904 = vmatpush.msra.mxu0 %v477
    %905 = vmatpush.msra.mxu0 %v469
    %906 = vmatpush.msra.mxu0 %v461
    %907 = vmatmul.f32.gmra.mxu0 %v524
    %v908 = vpop.f32.mrf.mxu0
    %v909 = vadd.f32 %v889, %v908
    %910 = vdwg.mxu0
    %911 = vmatpush.msra.mxu0 %v326
    %912 = vmatpush.msra.mxu0 %v318
    %913 = vmatpush.msra.mxu0 %v310
    %914 = vmatpush.msra.mxu0 %v302
    %915 = vmatpush.msra.mxu0 %v294
    %916 = vmatpush.msra.mxu0 %v286
    %917 = vmatpush.msra.mxu0 %v278
    %918 = vmatpush.msra.mxu0 %v270
    %919 = vmatpush.msra.mxu0 %v262
    %920 = vmatpush.msra.mxu0 %v254
    %921 = vmatpush.msra.mxu0 %v246
    %922 = vmatpush.msra.mxu0 %v238
    %923 = vmatpush.msra.mxu0 %v230
    %924 = vmatpush.msra.mxu0 %v222
    %925 = vmatpush.msra.mxu0 %v214
    %926 = vmatpush.msra.mxu0 %v206
    %927 = vmatmul.f32.gmra.mxu0 %v197
    %v928 = vpop.f32.mrf.mxu0
    %v929 = vadd.f32 %v512, %v928
    %930 = vdwg.mxu0
    %931 = vmatpush.msra.mxu0 %v454
    %932 = vmatpush.msra.mxu0 %v446
    %933 = vmatpush.msra.mxu0 %v438
    %934 = vmatpush.msra.mxu0 %v430
    %935 = vmatpush.msra.mxu0 %v422
    %936 = vmatpush.msra.mxu0 %v414
    %937 = vmatpush.msra.mxu0 %v406
    %938 = vmatpush.msra.mxu0 %v398
    %939 = vmatpush.msra.mxu0 %v390
    %940 = vmatpush.msra.mxu0 %v382
    %941 = vmatpush.msra.mxu0 %v374
    %942 = vmatpush.msra.mxu0 %v366
    %943 = vmatpush.msra.mxu0 %v358
    %944 = vmatpush.msra.mxu0 %v350
    %945 = vmatpush.msra.mxu0 %v342
    %946 = vmatpush.msra.mxu0 %v334
    %947 = vmatmul.f32.gmra.mxu0 %v198
    %v948 = vpop.f32.mrf.mxu0
    %v949 = vadd.f32 %v929, %v948
    %950 = vdwg.mxu0
    %951 = vmatpush.msra.mxu0 0.0
    %952 = vmatpush.msra.mxu0 0.0
    %953 = vmatpush.msra.mxu0 0.0
    %954 = vmatpush.msra.mxu0 0.0
    %955 = vmatpush.msra.mxu0 0.0
    %956 = vmatpush.msra.mxu0 0.0
    %957 = vmatpush.msra.mxu0 0.0
    %958 = vmatpush.msra.mxu0 0.0
    %959 = vmatpush.msra.mxu0 0.0
    %960 = vmatpush.msra.mxu0 0.0
    %961 = vmatpush.msra.mxu0 %v546
    %962 = vmatpush.msra.mxu0 %v494
    %963 = vmatpush.msra.mxu0 %v486
    %964 = vmatpush.msra.mxu0 %v478
    %965 = vmatpush.msra.mxu0 %v470
    %966 = vmatpush.msra.mxu0 %v462
    %967 = vmatmul.f32.gmra.mxu0 %v524
    %v968 = vpop.f32.mrf.mxu0
    %v969 = vadd.f32 %v949, %v968
    %970 = vdwg.mxu0
    %971 = vmatpush.msra.mxu0 %v327
    %972 = vmatpush.msra.mxu0 %v319
    %973 = vmatpush.msra.mxu0 %v311
    %974 = vmatpush.msra.mxu0 %v303
    %975 = vmatpush.msra.mxu0 %v295
    %976 = vmatpush.msra.mxu0 %v287
    %977 = vmatpush.msra.mxu0 %v279
    %978 = vmatpush.msra.mxu0 %v271
    %979 = vmatpush.msra.mxu0 %v263
    %980 = vmatpush.msra.mxu0 %v255
    %981 = vmatpush.msra.mxu0 %v247
    %982 = vmatpush.msra.mxu0 %v239
    %983 = vmatpush.msra.mxu0 %v231
    %984 = vmatpush.msra.mxu0 %v223
    %985 = vmatpush.msra.mxu0 %v215
    %986 = vmatpush.msra.mxu0 %v207
    %987 = vmatmul.f32.gmra.mxu0 %v197
    %v988 = vpop.f32.mrf.mxu0
    %v989 = vadd.f32 %v513, %v988
    %990 = vdwg.mxu0
    %991 = vmatpush.msra.mxu0 %v455
    %992 = vmatpush.msra.mxu0 %v447
    %993 = vmatpush.msra.mxu0 %v439
    %994 = vmatpush.msra.mxu0 %v431
    %995 = vmatpush.msra.mxu0 %v423
    %996 = vmatpush.msra.mxu0 %v415
    %997 = vmatpush.msra.mxu0 %v407
    %998 = vmatpush.msra.mxu0 %v399
    %999 = vmatpush.msra.mxu0 %v391
    %1000 = vmatpush.msra.mxu0 %v383
    %1001 = vmatpush.msra.mxu0 %v375
    %1002 = vmatpush.msra.mxu0 %v367
    %1003 = vmatpush.msra.mxu0 %v359
    %1004 = vmatpush.msra.mxu0 %v351
    %1005 = vmatpush.msra.mxu0 %v343
    %1006 = vmatpush.msra.mxu0 %v335
    %1007 = vmatmul.f32.gmra.mxu0 %v198
    %v1008 = vpop.f32.mrf.mxu0
    %v1009 = vadd.f32 %v989, %v1008
    %1010 = vdwg.mxu0
    %1011 = vmatpush.msra.mxu0 0.0
    %1012 = vmatpush.msra.mxu0 0.0
    %1013 = vmatpush.msra.mxu0 0.0
    %1014 = vmatpush.msra.mxu0 0.0
    %1015 = vmatpush.msra.mxu0 0.0
    %1016 = vmatpush.msra.mxu0 0.0
    %1017 = vmatpush.msra.mxu0 0.0
    %1018 = vmatpush.msra.mxu0 0.0
    %1019 = vmatpush.msra.mxu0 0.0
    %1020 = vmatpush.msra.mxu0 0.0
    %1021 = vmatpush.msra.mxu0 %v549
    %1022 = vmatpush.msra.mxu0 %v495
    %1023 = vmatpush.msra.mxu0 %v487
    %1024 = vmatpush.msra.mxu0 %v479
    %1025 = vmatpush.msra.mxu0 %v471
    %1026 = vmatpush.msra.mxu0 %v463
    %1027 = vmatmul.f32.gmra.mxu0 %v524
    %v1028 = vpop.f32.mrf.mxu0
    %v1029 = vadd.f32 %v1009, %v1028
    %1030 = vdwg.mxu0
    %v1031 = vmax.f32 %v609, 0.0
    %v1032 = vmax.f32 %v669, 0.0
    %v1033 = vmax.f32 %v729, 0.0
    %v1034 = vmax.f32 %v789, 0.0
    %v1035 = vmax.f32 %v849, 0.0
    %v1036 = vmax.f32 %v909, 0.0
    %v1037 = vmax.f32 %v969, 0.0
    %v1038 = vmax.f32 %v1029, 0.0
    %v1039 = vld [vmem:[%s8] sm:$0xff]
    %v1041 = vperm.slane %v1039, 0
    %v1042 = vperm.slane %v1039, 1
    %v1043 = vperm.slane %v1039, 2
    %v1044 = vperm.slane %v1039, 3
    %v1045 = vperm.slane %v1039, 4
    %v1046 = vperm.slane %v1039, 5
    %v1047 = vperm.slane %v1039, 6
    %v1048 = vperm.slane %v1039, 7
    %v1057 = vmul.f32 %v1031, %v1041
    %v1058 = vmul.f32 %v1032, %v1042
    %v1059 = vmul.f32 %v1033, %v1043
    %v1060 = vmul.f32 %v1034, %v1044
    %v1061 = vmul.f32 %v1035, %v1045
    %v1062 = vmul.f32 %v1036, %v1046
    %v1063 = vmul.f32 %v1037, %v1047
    %v1064 = vmul.f32 %v1038, %v1048
    %v1065 = vld [vmem:[%s9] sm:$0xff]
    %v1067 = vperm.slane %v1065, 0
    %v1068 = vperm.slane %v1065, 1
    %v1069 = vperm.slane %v1065, 2
    %v1070 = vperm.slane %v1065, 3
    %v1071 = vperm.slane %v1065, 4
    %v1072 = vperm.slane %v1065, 5
    %v1073 = vperm.slane %v1065, 6
    %v1074 = vperm.slane %v1065, 7
    %v1083 = vadd.f32 %v1057, %v1067
    %v1084 = vadd.f32 %v1058, %v1068
    %v1085 = vadd.f32 %v1059, %v1069
    %v1086 = vadd.f32 %v1060, %v1070
    %v1087 = vadd.f32 %v1061, %v1071
    %v1088 = vadd.f32 %v1062, %v1072
    %v1089 = vadd.f32 %v1063, %v1073
    %v1090 = vadd.f32 %v1064, %v1074
    %1092 = vrot.lane.b32.xlu0 %v1083, 64
    %v1093 = vpop.permute.xlu0 %1092
    %1095 = vrot.lane.b32.xlu0 %v1084, 64
    %v1096 = vpop.permute.xlu0 %1095
    %1098 = vrot.lane.b32.xlu0 %v1085, 64
    %v1099 = vpop.permute.xlu0 %1098
    %1101 = vrot.lane.b32.xlu0 %v1086, 64
    %v1102 = vpop.permute.xlu0 %1101
    %1104 = vrot.lane.b32.xlu0 %v1087, 64
    %v1105 = vpop.permute.xlu0 %1104
    %1107 = vrot.lane.b32.xlu0 %v1088, 64
    %v1108 = vpop.permute.xlu0 %1107
    %1110 = vrot.lane.b32.xlu0 %v1089, 64
    %v1111 = vpop.permute.xlu0 %1110
    %1113 = vrot.lane.b32.xlu0 %v1090, 64
    %v1114 = vpop.permute.xlu0 %1113
    %v1115 = vld [vmem:[%s10] sm:$0xff]
    %v1116 = vld [vmem:[%s10 + $0x8] sm:$0xff]
    %v1117 = vld [vmem:[%s10 + $0x10] sm:$0xff]
    %v1118 = vld [vmem:[%s10 + $0x18] sm:$0xff]
    %v1119 = vld [vmem:[%s10 + $0x20] sm:$0xff]
    %v1120 = vld [vmem:[%s10 + $0x28] sm:$0xff]
    %v1121 = vld [vmem:[%s10 + $0x30] sm:$0xff]
    %v1122 = vld [vmem:[%s10 + $0x38] sm:$0xff]
    %v1123 = vld [vmem:[%s10 + $0x40] sm:$0xff]
    %v1124 = vld [vmem:[%s10 + $0x48] sm:$0xff]
    %v1125 = vld [vmem:[%s10 + $0x50] sm:$0xff]
    %v1126 = vld [vmem:[%s10 + $0x58] sm:$0xff]
    %v1127 = vld [vmem:[%s10 + $0x60] sm:$0xff]
    %v1128 = vld [vmem:[%s10 + $0x68] sm:$0xff]
    %v1129 = vld [vmem:[%s10 + $0x70] sm:$0xff]
    %v1130 = vld [vmem:[%s10 + $0x78] sm:$0xff]
    %v1131 = vld [vmem:[%s10 + $0x80] sm:$0xff]
    %v1132 = vld [vmem:[%s10 + $0x88] sm:$0xff]
    %v1133 = vld [vmem:[%s10 + $0x90] sm:$0xff]
    %v1134 = vld [vmem:[%s10 + $0x98] sm:$0xff]
    %v1135 = vld [vmem:[%s10 + $0xa0] sm:$0xff]
    %v1136 = vld [vmem:[%s10 + $0xa8] sm:$0xff]
    %v1137 = vld [vmem:[%s10 + $0xb0] sm:$0xff]
    %v1138 = vld [vmem:[%s10 + $0xb8] sm:$0xff]
    %v1139 = vld [vmem:[%s10 + $0xc0] sm:$0xff]
    %v1140 = vld [vmem:[%s10 + $0xc8] sm:$0xff]
    %v1141 = vld [vmem:[%s10 + $0xd0] sm:$0xff]
    %v1142 = vld [vmem:[%s10 + $0xd8] sm:$0xff]
    %v1143 = vld [vmem:[%s10 + $0xe0] sm:$0xff]
    %v1144 = vld [vmem:[%s10 + $0xe8] sm:$0xff]
    %v1145 = vld [vmem:[%s10 + $0xf0] sm:$0xff]
    %v1146 = vld [vmem:[%s10 + $0xf8] sm:$0xff]
    %v1147 = vld [vmem:[%s10 + $0x100] sm:$0xff]
    %v1148 = vld [vmem:[%s10 + $0x108] sm:$0xff]
    %v1149 = vld [vmem:[%s10 + $0x110] sm:$0xff]
    %v1150 = vld [vmem:[%s10 + $0x118] sm:$0xff]
    %v1151 = vld [vmem:[%s10 + $0x120] sm:$0xff]
    %v1152 = vld [vmem:[%s10 + $0x128] sm:$0xff]
    %v1153 = vld [vmem:[%s10 + $0x130] sm:$0xff]
    %v1154 = vld [vmem:[%s10 + $0x138] sm:$0xff]
    %v1155 = vsel %vm173, %v1083, 0
    %v1157 = vsel %vm173, %v1093, 0
    %v1159 = vsel %vm173, %v1084, 0
    %v1161 = vsel %vm173, %v1096, 0
    %v1163 = vsel %vm173, %v1085, 0
    %v1165 = vsel %vm173, %v1099, 0
    %v1167 = vsel %vm173, %v1086, 0
    %v1169 = vsel %vm173, %v1102, 0
    %v1171 = vsel %vm173, %v1087, 0
    %v1173 = vsel %vm173, %v1105, 0
    %v1175 = vsel %vm173, %v1088, 0
    %v1177 = vsel %vm173, %v1108, 0
    %v1179 = vsel %vm173, %v1089, 0
    %v1181 = vsel %vm173, %v1111, 0
    %v1183 = vsel %vm173, %v1090, 0
    %v1185 = vsel %vm173, %v1114, 0
    %1187 = vmatpush.msra.mxu0 0.0
    %1188 = vmatpush.msra.mxu0 0.0
    %1189 = vmatpush.msra.mxu0 0.0
    %1190 = vmatpush.msra.mxu0 0.0
    %1191 = vmatpush.msra.mxu0 0.0
    %1192 = vmatpush.msra.mxu0 0.0
    %1193 = vmatpush.msra.mxu0 0.0
    %1194 = vmatpush.msra.mxu0 0.0
    %1195 = vmatpush.msra.mxu0 %v1150
    %1196 = vmatpush.msra.mxu0 %v1145
    %1197 = vmatpush.msra.mxu0 %v1140
    %1198 = vmatpush.msra.mxu0 %v1135
    %1199 = vmatpush.msra.mxu0 %v1130
    %1200 = vmatpush.msra.mxu0 %v1125
    %1201 = vmatpush.msra.mxu0 %v1120
    %1202 = vmatpush.msra.mxu0 %v1115
    %1203 = vmatmul.f32.gmra.mxu0 %v1155
    %v1204 = vpop.f32.mrf.mxu0
    %v1205 = vadd.f32 0.0, %v1204
    %1206 = vmatmul.f32.gmra.mxu0 %v1157
    %v1207 = vpop.f32.mrf.mxu0
    %v1208 = vadd.f32 0.0, %v1207
    %1209 = vmatmul.f32.gmra.mxu0 %v1159
    %v1210 = vpop.f32.mrf.mxu0
    %v1211 = vadd.f32 0.0, %v1210
    %1212 = vmatmul.f32.gmra.mxu0 %v1161
    %v1213 = vpop.f32.mrf.mxu0
    %v1214 = vadd.f32 0.0, %v1213
    %1215 = vmatmul.f32.gmra.mxu0 %v1163
    %v1216 = vpop.f32.mrf.mxu0
    %v1217 = vadd.f32 0.0, %v1216
    %1218 = vmatmul.f32.gmra.mxu0 %v1165
    %v1219 = vpop.f32.mrf.mxu0
    %v1220 = vadd.f32 0.0, %v1219
    %1221 = vmatmul.f32.gmra.mxu0 %v1167
    %v1222 = vpop.f32.mrf.mxu0
    %v1223 = vadd.f32 0.0, %v1222
    %1224 = vmatmul.f32.gmra.mxu0 %v1169
    %v1225 = vpop.f32.mrf.mxu0
    %v1226 = vadd.f32 0.0, %v1225
    %1227 = vmatmul.f32.gmra.mxu0 %v1171
    %v1228 = vpop.f32.mrf.mxu0
    %v1229 = vadd.f32 0.0, %v1228
    %1230 = vmatmul.f32.gmra.mxu0 %v1173
    %v1231 = vpop.f32.mrf.mxu0
    %v1232 = vadd.f32 0.0, %v1231
    %1233 = vmatmul.f32.gmra.mxu0 %v1175
    %v1234 = vpop.f32.mrf.mxu0
    %v1235 = vadd.f32 0.0, %v1234
    %1236 = vmatmul.f32.gmra.mxu0 %v1177
    %v1237 = vpop.f32.mrf.mxu0
    %v1238 = vadd.f32 0.0, %v1237
    %1239 = vmatmul.f32.gmra.mxu0 %v1179
    %v1240 = vpop.f32.mrf.mxu0
    %v1241 = vadd.f32 0.0, %v1240
    %1242 = vmatmul.f32.gmra.mxu0 %v1181
    %v1243 = vpop.f32.mrf.mxu0
    %v1244 = vadd.f32 0.0, %v1243
    %1245 = vmatmul.f32.gmra.mxu0 %v1183
    %v1246 = vpop.f32.mrf.mxu0
    %1247 = vmatmul.f32.gmra.mxu0 %v1185
    %v1248 = vpop.f32.mrf.mxu0
    %1249 = vdwg.mxu0
    %1250 = vmatpush.msra.mxu0 0.0
    %1251 = vmatpush.msra.mxu0 0.0
    %1252 = vmatpush.msra.mxu0 0.0
    %1253 = vmatpush.msra.mxu0 0.0
    %1254 = vmatpush.msra.mxu0 0.0
    %1255 = vmatpush.msra.mxu0 0.0
    %1256 = vmatpush.msra.mxu0 0.0
    %1257 = vmatpush.msra.mxu0 0.0
    %1258 = vmatpush.msra.mxu0 %v1151
    %1259 = vmatpush.msra.mxu0 %v1146
    %1260 = vmatpush.msra.mxu0 %v1141
    %1261 = vmatpush.msra.mxu0 %v1136
    %1262 = vmatpush.msra.mxu0 %v1131
    %1263 = vmatpush.msra.mxu0 %v1126
    %1264 = vmatpush.msra.mxu0 %v1121
    %1265 = vmatpush.msra.mxu0 %v1116
    %1266 = vmatmul.f32.gmra.mxu0 %v1155
    %v1267 = vpop.f32.mrf.mxu0
    %v1268 = vadd.f32 0.0, %v1267
    %1269 = vmatmul.f32.gmra.mxu0 %v1157
    %v1270 = vpop.f32.mrf.mxu0
    %v1271 = vadd.f32 0.0, %v1270
    %1272 = vmatmul.f32.gmra.mxu0 %v1159
    %v1273 = vpop.f32.mrf.mxu0
    %v1274 = vadd.f32 0.0, %v1273
    %1275 = vmatmul.f32.gmra.mxu0 %v1161
    %v1276 = vpop.f32.mrf.mxu0
    %v1277 = vadd.f32 0.0, %v1276
    %1278 = vmatmul.f32.gmra.mxu0 %v1163
    %v1279 = vpop.f32.mrf.mxu0
    %v1280 = vadd.f32 0.0, %v1279
    %1281 = vmatmul.f32.gmra.mxu0 %v1165
    %v1282 = vpop.f32.mrf.mxu0
    %v1283 = vadd.f32 0.0, %v1282
    %1284 = vmatmul.f32.gmra.mxu0 %v1167
    %v1285 = vpop.f32.mrf.mxu0
    %v1286 = vadd.f32 0.0, %v1285
    %1287 = vmatmul.f32.gmra.mxu0 %v1169
    %v1288 = vpop.f32.mrf.mxu0
    %v1289 = vadd.f32 0.0, %v1288
    %1290 = vmatmul.f32.gmra.mxu0 %v1171
    %v1291 = vpop.f32.mrf.mxu0
    %v1292 = vadd.f32 0.0, %v1291
    %1293 = vmatmul.f32.gmra.mxu0 %v1173
    %v1294 = vpop.f32.mrf.mxu0
    %v1295 = vadd.f32 0.0, %v1294
    %1296 = vmatmul.f32.gmra.mxu0 %v1175
    %v1297 = vpop.f32.mrf.mxu0
    %v1298 = vadd.f32 0.0, %v1297
    %1299 = vmatmul.f32.gmra.mxu0 %v1177
    %v1300 = vpop.f32.mrf.mxu0
    %v1301 = vadd.f32 0.0, %v1300
    %1302 = vmatmul.f32.gmra.mxu0 %v1179
    %v1303 = vpop.f32.mrf.mxu0
    %v1304 = vadd.f32 0.0, %v1303
    %1305 = vmatmul.f32.gmra.mxu0 %v1181
    %v1306 = vpop.f32.mrf.mxu0
    %v1307 = vadd.f32 0.0, %v1306
    %1308 = vmatmul.f32.gmra.mxu0 %v1183
    %v1309 = vpop.f32.mrf.mxu0
    %v1310 = vadd.f32 0.0, %v1309
    %1311 = vmatmul.f32.gmra.mxu0 %v1185
    %v1312 = vpop.f32.mrf.mxu0
    %1313 = vdwg.mxu0
    %1314 = vmatpush.msra.mxu0 0.0
    %1315 = vmatpush.msra.mxu0 0.0
    %1316 = vmatpush.msra.mxu0 0.0
    %1317 = vmatpush.msra.mxu0 0.0
    %1318 = vmatpush.msra.mxu0 0.0
    %1319 = vmatpush.msra.mxu0 0.0
    %1320 = vmatpush.msra.mxu0 0.0
    %1321 = vmatpush.msra.mxu0 0.0
    %1322 = vmatpush.msra.mxu0 %v1152
    %1323 = vmatpush.msra.mxu0 %v1147
    %1324 = vmatpush.msra.mxu0 %v1142
    %1325 = vmatpush.msra.mxu0 %v1137
    %1326 = vmatpush.msra.mxu0 %v1132
    %1327 = vmatpush.msra.mxu0 %v1127
    %1328 = vmatpush.msra.mxu0 %v1122
    %1329 = vmatpush.msra.mxu0 %v1117
    %1330 = vmatmul.f32.gmra.mxu0 %v1155
    %v1331 = vpop.f32.mrf.mxu0
    %v1332 = vadd.f32 0.0, %v1331
    %1333 = vmatmul.f32.gmra.mxu0 %v1157
    %v1334 = vpop.f32.mrf.mxu0
    %v1335 = vadd.f32 0.0, %v1334
    %1336 = vmatmul.f32.gmra.mxu0 %v1159
    %v1337 = vpop.f32.mrf.mxu0
    %v1338 = vadd.f32 0.0, %v1337
    %1339 = vmatmul.f32.gmra.mxu0 %v1161
    %v1340 = vpop.f32.mrf.mxu0
    %v1341 = vadd.f32 0.0, %v1340
    %1342 = vmatmul.f32.gmra.mxu0 %v1163
    %v1343 = vpop.f32.mrf.mxu0
    %v1344 = vadd.f32 0.0, %v1343
    %1345 = vmatmul.f32.gmra.mxu0 %v1165
    %v1346 = vpop.f32.mrf.mxu0
    %v1347 = vadd.f32 0.0, %v1346
    %1348 = vmatmul.f32.gmra.mxu0 %v1167
    %v1349 = vpop.f32.mrf.mxu0
    %v1350 = vadd.f32 0.0, %v1349
    %1351 = vmatmul.f32.gmra.mxu0 %v1169
    %v1352 = vpop.f32.mrf.mxu0
    %v1353 = vadd.f32 0.0, %v1352
    %1354 = vmatmul.f32.gmra.mxu0 %v1171
    %v1355 = vpop.f32.mrf.mxu0
    %v1356 = vadd.f32 0.0, %v1355
    %1357 = vmatmul.f32.gmra.mxu0 %v1173
    %v1358 = vpop.f32.mrf.mxu0
    %v1359 = vadd.f32 0.0, %v1358
    %1360 = vmatmul.f32.gmra.mxu0 %v1175
    %v1361 = vpop.f32.mrf.mxu0
    %v1362 = vadd.f32 0.0, %v1361
    %1363 = vmatmul.f32.gmra.mxu0 %v1177
    %v1364 = vpop.f32.mrf.mxu0
    %v1365 = vadd.f32 0.0, %v1364
    %1366 = vmatmul.f32.gmra.mxu0 %v1179
    %v1367 = vpop.f32.mrf.mxu0
    %v1368 = vadd.f32 0.0, %v1367
    %1369 = vmatmul.f32.gmra.mxu0 %v1181
    %v1370 = vpop.f32.mrf.mxu0
    %v1371 = vadd.f32 0.0, %v1370
    %1372 = vmatmul.f32.gmra.mxu0 %v1183
    %v1373 = vpop.f32.mrf.mxu0
    %v1374 = vadd.f32 0.0, %v1373
    %1375 = vmatmul.f32.gmra.mxu0 %v1185
    %v1376 = vpop.f32.mrf.mxu0
    %v1377 = vadd.f32 0.0, %v1376
    %1378 = vdwg.mxu0
    %1379 = vmatpush.msra.mxu0 0.0
    %1380 = vmatpush.msra.mxu0 0.0
    %1381 = vmatpush.msra.mxu0 0.0
    %1382 = vmatpush.msra.mxu0 0.0
    %1383 = vmatpush.msra.mxu0 0.0
    %1384 = vmatpush.msra.mxu0 0.0
    %1385 = vmatpush.msra.mxu0 0.0
    %1386 = vmatpush.msra.mxu0 0.0
    %1387 = vmatpush.msra.mxu0 %v1153
    %1388 = vmatpush.msra.mxu0 %v1148
    %1389 = vmatpush.msra.mxu0 %v1143
    %1390 = vmatpush.msra.mxu0 %v1138
    %1391 = vmatpush.msra.mxu0 %v1133
    %1392 = vmatpush.msra.mxu0 %v1128
    %1393 = vmatpush.msra.mxu0 %v1123
    %1394 = vmatpush.msra.mxu0 %v1118
    %1395 = vmatmul.f32.gmra.mxu0 %v1155
    %v1396 = vpop.f32.mrf.mxu0
    %1397 = vmatmul.f32.gmra.mxu0 %v1157
    %v1398 = vpop.f32.mrf.mxu0
    %v1399 = vadd.f32 0.0, %v1398
    %1400 = vmatmul.f32.gmra.mxu0 %v1159
    %v1401 = vpop.f32.mrf.mxu0
    %v1402 = vadd.f32 0.0, %v1401
    %1403 = vmatmul.f32.gmra.mxu0 %v1161
    %v1404 = vpop.f32.mrf.mxu0
    %v1405 = vadd.f32 0.0, %v1404
    %1406 = vmatmul.f32.gmra.mxu0 %v1163
    %v1407 = vpop.f32.mrf.mxu0
    %v1408 = vadd.f32 0.0, %v1407
    %1409 = vmatmul.f32.gmra.mxu0 %v1165
    %v1410 = vpop.f32.mrf.mxu0
    %v1411 = vadd.f32 0.0, %v1410
    %1412 = vmatmul.f32.gmra.mxu0 %v1167
    %v1413 = vpop.f32.mrf.mxu0
    %v1414 = vadd.f32 0.0, %v1413
    %1415 = vmatmul.f32.gmra.mxu0 %v1169
    %v1416 = vpop.f32.mrf.mxu0
    %v1417 = vadd.f32 0.0, %v1416
    %1418 = vmatmul.f32.gmra.mxu0 %v1171
    %v1419 = vpop.f32.mrf.mxu0
    %v1420 = vadd.f32 0.0, %v1419
    %1421 = vmatmul.f32.gmra.mxu0 %v1173
    %v1422 = vpop.f32.mrf.mxu0
    %v1423 = vadd.f32 0.0, %v1422
    %1424 = vmatmul.f32.gmra.mxu0 %v1175
    %v1425 = vpop.f32.mrf.mxu0
    %v1426 = vadd.f32 0.0, %v1425
    %1427 = vmatmul.f32.gmra.mxu0 %v1177
    %v1428 = vpop.f32.mrf.mxu0
    %v1429 = vadd.f32 0.0, %v1428
    %1430 = vmatmul.f32.gmra.mxu0 %v1179
    %v1431 = vpop.f32.mrf.mxu0
    %v1432 = vadd.f32 0.0, %v1431
    %1433 = vmatmul.f32.gmra.mxu0 %v1181
    %v1434 = vpop.f32.mrf.mxu0
    %v1435 = vadd.f32 0.0, %v1434
    %1436 = vmatmul.f32.gmra.mxu0 %v1183
    %v1437 = vpop.f32.mrf.mxu0
    %v1438 = vadd.f32 0.0, %v1437
    %1439 = vmatmul.f32.gmra.mxu0 %v1185
    %v1440 = vpop.f32.mrf.mxu0
    %v1441 = vadd.f32 0.0, %v1440
    %1442 = vdwg.mxu0
    %1443 = vmatpush.msra.mxu0 0.0
    %1444 = vmatpush.msra.mxu0 0.0
    %1445 = vmatpush.msra.mxu0 0.0
    %1446 = vmatpush.msra.mxu0 0.0
    %1447 = vmatpush.msra.mxu0 0.0
    %1448 = vmatpush.msra.mxu0 0.0
    %1449 = vmatpush.msra.mxu0 0.0
    %1450 = vmatpush.msra.mxu0 0.0
    %1451 = vmatpush.msra.mxu0 %v1154
    %1452 = vmatpush.msra.mxu0 %v1149
    %1453 = vmatpush.msra.mxu0 %v1144
    %1454 = vmatpush.msra.mxu0 %v1139
    %1455 = vmatpush.msra.mxu0 %v1134
    %1456 = vmatpush.msra.mxu0 %v1129
    %1457 = vmatpush.msra.mxu0 %v1124
    %1458 = vmatpush.msra.mxu0 %v1119
    %1459 = vmatmul.f32.gmra.mxu0 %v1155
    %v1460 = vpop.f32.mrf.mxu0
    %1461 = vmatmul.f32.gmra.mxu0 %v1157
    %v1462 = vpop.f32.mrf.mxu0
    %1463 = vmatmul.f32.gmra.mxu0 %v1159
    %v1464 = vpop.f32.mrf.mxu0
    %v1465 = vadd.f32 0.0, %v1464
    %1466 = vmatmul.f32.gmra.mxu0 %v1161
    %v1467 = vpop.f32.mrf.mxu0
    %v1468 = vadd.f32 0.0, %v1467
    %1469 = vmatmul.f32.gmra.mxu0 %v1163
    %v1470 = vpop.f32.mrf.mxu0
    %v1471 = vadd.f32 0.0, %v1470
    %1472 = vmatmul.f32.gmra.mxu0 %v1165
    %v1473 = vpop.f32.mrf.mxu0
    %v1474 = vadd.f32 0.0, %v1473
    %1475 = vmatmul.f32.gmra.mxu0 %v1167
    %v1476 = vpop.f32.mrf.mxu0
    %v1477 = vadd.f32 0.0, %v1476
    %1478 = vmatmul.f32.gmra.mxu0 %v1169
    %v1479 = vpop.f32.mrf.mxu0
    %v1480 = vadd.f32 0.0, %v1479
    %1481 = vmatmul.f32.gmra.mxu0 %v1171
    %v1482 = vpop.f32.mrf.mxu0
    %v1483 = vadd.f32 0.0, %v1482
    %1484 = vmatmul.f32.gmra.mxu0 %v1173
    %v1485 = vpop.f32.mrf.mxu0
    %v1486 = vadd.f32 0.0, %v1485
    %1487 = vmatmul.f32.gmra.mxu0 %v1175
    %v1488 = vpop.f32.mrf.mxu0
    %v1489 = vadd.f32 0.0, %v1488
    %1490 = vmatmul.f32.gmra.mxu0 %v1177
    %v1491 = vpop.f32.mrf.mxu0
    %v1492 = vadd.f32 0.0, %v1491
    %1493 = vmatmul.f32.gmra.mxu0 %v1179
    %v1494 = vpop.f32.mrf.mxu0
    %v1495 = vadd.f32 0.0, %v1494
    %1496 = vmatmul.f32.gmra.mxu0 %v1181
    %v1497 = vpop.f32.mrf.mxu0
    %v1498 = vadd.f32 0.0, %v1497
    %1499 = vmatmul.f32.gmra.mxu0 %v1183
    %v1500 = vpop.f32.mrf.mxu0
    %v1501 = vadd.f32 0.0, %v1500
    %1502 = vmatmul.f32.gmra.mxu0 %v1185
    %v1503 = vpop.f32.mrf.mxu0
    %v1504 = vadd.f32 0.0, %v1503
    %1505 = vdwg.mxu0
    %v1506 = vadd.f32 %v1332, 0.0
    %v1507 = vadd.f32 %v1335, 0.0
    %v1508 = vadd.f32 %v1338, %v1205
    %v1509 = vadd.f32 %v1341, %v1208
    %v1510 = vadd.f32 %v1344, %v1211
    %v1511 = vadd.f32 %v1347, %v1214
    %v1512 = vadd.f32 %v1350, %v1217
    %v1513 = vadd.f32 %v1353, %v1220
    %v1514 = vadd.f32 %v1356, %v1223
    %v1515 = vadd.f32 %v1359, %v1226
    %v1516 = vadd.f32 %v1362, %v1229
    %v1517 = vadd.f32 %v1365, %v1232
    %v1518 = vadd.f32 %v1368, %v1235
    %v1519 = vadd.f32 %v1371, %v1238
    %v1520 = vadd.f32 %v1374, %v1241
    %v1521 = vadd.f32 %v1377, %v1244
    %v1522 = vadd.f32 %v1506, 0.0
    %v1523 = vadd.f32 %v1507, %v1268
    %v1524 = vadd.f32 %v1508, %v1271
    %v1525 = vadd.f32 %v1509, %v1274
    %v1526 = vadd.f32 %v1510, %v1277
    %v1527 = vadd.f32 %v1511, %v1280
    %v1528 = vadd.f32 %v1512, %v1283
    %v1529 = vadd.f32 %v1513, %v1286
    %v1530 = vadd.f32 %v1514, %v1289
    %v1531 = vadd.f32 %v1515, %v1292
    %v1532 = vadd.f32 %v1516, %v1295
    %v1533 = vadd.f32 %v1517, %v1298
    %v1534 = vadd.f32 %v1518, %v1301
    %v1535 = vadd.f32 %v1519, %v1304
    %v1536 = vadd.f32 %v1520, %v1307
    %v1537 = vadd.f32 %v1521, %v1310
    %v1538 = vadd.f32 %v1522, %v1399
    %v1539 = vadd.f32 %v1523, %v1402
    %v1540 = vadd.f32 %v1524, %v1405
    %v1541 = vadd.f32 %v1525, %v1408
    %v1542 = vadd.f32 %v1526, %v1411
    %v1543 = vadd.f32 %v1527, %v1414
    %v1544 = vadd.f32 %v1528, %v1417
    %v1545 = vadd.f32 %v1529, %v1420
    %v1546 = vadd.f32 %v1530, %v1423
    %v1547 = vadd.f32 %v1531, %v1426
    %v1548 = vadd.f32 %v1532, %v1429
    %v1549 = vadd.f32 %v1533, %v1432
    %v1550 = vadd.f32 %v1534, %v1435
    %v1551 = vadd.f32 %v1535, %v1438
    %v1552 = vadd.f32 %v1536, %v1441
    %v1553 = vadd.f32 %v1537, 0.0
    %v1554 = vadd.f32 %v1538, %v1465
    %v1555 = vadd.f32 %v1539, %v1468
    %v1556 = vadd.f32 %v1540, %v1471
    %v1557 = vadd.f32 %v1541, %v1474
    %v1558 = vadd.f32 %v1542, %v1477
    %v1559 = vadd.f32 %v1543, %v1480
    %v1560 = vadd.f32 %v1544, %v1483
    %v1561 = vadd.f32 %v1545, %v1486
    %v1562 = vadd.f32 %v1546, %v1489
    %v1563 = vadd.f32 %v1547, %v1492
    %v1564 = vadd.f32 %v1548, %v1495
    %v1565 = vadd.f32 %v1549, %v1498
    %v1566 = vadd.f32 %v1550, %v1501
    %v1567 = vadd.f32 %v1551, %v1504
    %v1568 = vadd.f32 %v1552, 0.0
    %v1569 = vadd.f32 %v1553, 0.0
    %v1570 = vmax.f32 %v1554, 0.0
    %v1571 = vmax.f32 %v1555, 0.0
    %v1572 = vmax.f32 %v1556, 0.0
    %v1573 = vmax.f32 %v1557, 0.0
    %v1574 = vmax.f32 %v1558, 0.0
    %v1575 = vmax.f32 %v1559, 0.0
    %v1576 = vmax.f32 %v1560, 0.0
    %v1577 = vmax.f32 %v1561, 0.0
    %v1578 = vmax.f32 %v1562, 0.0
    %v1579 = vmax.f32 %v1563, 0.0
    %v1580 = vmax.f32 %v1564, 0.0
    %v1581 = vmax.f32 %v1565, 0.0
    %v1582 = vmax.f32 %v1566, 0.0
    %v1583 = vmax.f32 %v1567, 0.0
    %v1584 = vmax.f32 %v1568, 0.0
    %v1585 = vmax.f32 %v1569, 0.0
    %v1586 = vadd.f32 %v1570, %v1571
    %v1587 = vmul.f32 %v1586, 0.5
    %v1588 = vadd.f32 %v1572, %v1573
    %v1589 = vmul.f32 %v1588, 0.5
    %v1590 = vadd.f32 %v1574, %v1575
    %v1591 = vmul.f32 %v1590, 0.5
    %v1592 = vadd.f32 %v1576, %v1577
    %v1593 = vmul.f32 %v1592, 0.5
    %v1594 = vadd.f32 %v1578, %v1579
    %v1595 = vmul.f32 %v1594, 0.5
    %v1596 = vadd.f32 %v1580, %v1581
    %v1597 = vmul.f32 %v1596, 0.5
    %v1598 = vadd.f32 %v1582, %v1583
    %v1599 = vmul.f32 %v1598, 0.5
    %v1600 = vadd.f32 %v1584, %v1585
    %v1601 = vmul.f32 %v1600, 0.5
    %v1602 = vld [vmem:[#allocation7] sm:$0xff]
    %v1603 = vld [vmem:[#allocation7 + $0x8] sm:$0xff]
    %v1604 = vld [vmem:[#allocation7 + $0x10] sm:$0xff]
    %v1605 = vld [vmem:[#allocation7 + $0x18] sm:$0xff]
    %v1606 = vld [vmem:[#allocation7 + $0x20] sm:$0xff]
    %v1607 = vld [vmem:[#allocation7 + $0x28] sm:$0xff]
    %v1608 = vld [vmem:[#allocation7 + $0x30] sm:$0xff]
    %v1609 = vld [vmem:[#allocation7 + $0x38] sm:$0xff]
    %v1610 = vld [vmem:[#allocation7 + $0x40] sm:$0xff]
    %v1611 = vld [vmem:[#allocation7 + $0x48] sm:$0xff]
    %v1612 = vld [vmem:[#allocation7 + $0x50] sm:$0xff]
    %v1613 = vld [vmem:[#allocation7 + $0x58] sm:$0xff]
    %v1614 = vld [vmem:[#allocation7 + $0x60] sm:$0xff]
    %v1615 = vld [vmem:[#allocation7 + $0x68] sm:$0xff]
    %v1616 = vld [vmem:[#allocation7 + $0x70] sm:$0xff]
    %v1617 = vld [vmem:[#allocation7 + $0x78] sm:$0xff]
    %v1618 = vld [vmem:[#allocation7 + $0x80] sm:$0xff]
    %v1619 = vld [vmem:[#allocation7 + $0x88] sm:$0xff]
    %v1620 = vld [vmem:[#allocation7 + $0x90] sm:$0xff]
    %v1621 = vld [vmem:[#allocation7 + $0x98] sm:$0xff]
    %v1622 = vld [vmem:[#allocation7 + $0xa0] sm:$0xff]
    %v1623 = vld [vmem:[#allocation7 + $0xa8] sm:$0xff]
    %v1624 = vld [vmem:[#allocation7 + $0xb0] sm:$0xff]
    %v1625 = vld [vmem:[#allocation7 + $0xb8] sm:$0xff]
    %v1626 = vld [vmem:[#allocation7 + $0xc0] sm:$0xff]
    %v1627 = vld [vmem:[#allocation7 + $0xc8] sm:$0xff]
    %v1628 = vld [vmem:[#allocation7 + $0xd0] sm:$0xff]
    %v1629 = vld [vmem:[#allocation7 + $0xd8] sm:$0xff]
    %v1630 = vld [vmem:[#allocation7 + $0xe0] sm:$0xff]
    %v1631 = vld [vmem:[#allocation7 + $0xe8] sm:$0xff]
    %v1632 = vld [vmem:[#allocation7 + $0xf0] sm:$0xff]
    %v1633 = vld [vmem:[#allocation7 + $0xf8] sm:$0xff]
    %v1634 = vld [vmem:[%s12] sm:$0xff]
    %v1635 = vld [vmem:[%s12 + $0x8] sm:$0xff]
    %v1636 = vld [vmem:[%s12 + $0x10] sm:$0xff]
    %v1637 = vld [vmem:[%s12 + $0x18] sm:$0xff]
    %v1638 = vld [vmem:[%s12 + $0x20] sm:$0xff]
    %v1639 = vld [vmem:[%s12 + $0x28] sm:$0xff]
    %v1640 = vld [vmem:[%s12 + $0x30] sm:$0xff]
    %v1641 = vld [vmem:[%s12 + $0x38] sm:$0xff]
    %v1642 = vld [vmem:[%s12 + $0x40] sm:$0xff]
    %v1643 = vld [vmem:[%s12 + $0x48] sm:$0xff]
    %v1644 = vld [vmem:[%s12 + $0x50] sm:$0xff]
    %v1645 = vld [vmem:[%s12 + $0x58] sm:$0xff]
    %v1646 = vld [vmem:[%s12 + $0x60] sm:$0xff]
    %v1647 = vld [vmem:[%s12 + $0x68] sm:$0xff]
    %v1648 = vld [vmem:[%s12 + $0x70] sm:$0xff]
    %v1649 = vld [vmem:[%s12 + $0x78] sm:$0xff]
    %v1650 = vld [vmem:[%s12 + $0x80] sm:$0xff]
    %v1651 = vld [vmem:[%s12 + $0x88] sm:$0xff]
    %v1652 = vld [vmem:[%s12 + $0x90] sm:$0xff]
    %v1653 = vld [vmem:[%s12 + $0x98] sm:$0xff]
    %v1654 = vld [vmem:[%s12 + $0xa0] sm:$0xff]
    %v1655 = vld [vmem:[%s12 + $0xa8] sm:$0xff]
    %v1656 = vld [vmem:[%s12 + $0xb0] sm:$0xff]
    %v1657 = vld [vmem:[%s12 + $0xb8] sm:$0xff]
    %v1658 = vld [vmem:[%s12 + $0xc0] sm:$0xff]
    %v1659 = vld [vmem:[%s12 + $0xc8] sm:$0xff]
    %v1660 = vld [vmem:[%s12 + $0xd0] sm:$0xff]
    %v1661 = vld [vmem:[%s12 + $0xd8] sm:$0xff]
    %v1662 = vld [vmem:[%s12 + $0xe0] sm:$0xff]
    %v1663 = vld [vmem:[%s12 + $0xe8] sm:$0xff]
    %v1664 = vld [vmem:[%s12 + $0xf0] sm:$0xff]
    %v1665 = vld [vmem:[%s12 + $0xf8] sm:$0xff]
    %v1666 = vld [vmem:[%s12 + $0x100] sm:$0xff]
    %v1667 = vld [vmem:[%s12 + $0x108] sm:$0xff]
    %v1668 = vld [vmem:[%s12 + $0x110] sm:$0xff]
    %v1669 = vld [vmem:[%s12 + $0x118] sm:$0xff]
    %v1670 = vld [vmem:[%s12 + $0x120] sm:$0xff]
    %v1671 = vld [vmem:[%s12 + $0x128] sm:$0xff]
    %v1672 = vld [vmem:[%s12 + $0x130] sm:$0xff]
    %v1673 = vld [vmem:[%s12 + $0x138] sm:$0xff]
    %v1674 = vld [vmem:[%s12 + $0x140] sm:$0xff]
    %v1675 = vld [vmem:[%s12 + $0x148] sm:$0xff]
    %v1676 = vld [vmem:[%s12 + $0x150] sm:$0xff]
    %v1677 = vld [vmem:[%s12 + $0x158] sm:$0xff]
    %v1678 = vld [vmem:[%s12 + $0x160] sm:$0xff]
    %v1679 = vld [vmem:[%s12 + $0x168] sm:$0xff]
    %v1680 = vld [vmem:[%s12 + $0x170] sm:$0xff]
    %v1681 = vld [vmem:[%s12 + $0x178] sm:$0xff]
    %v1682 = vld [vmem:[%s12 + $0x180] sm:$0xff]
    %v1683 = vld [vmem:[%s12 + $0x188] sm:$0xff]
    %v1684 = vld [vmem:[%s12 + $0x190] sm:$0xff]
    %v1685 = vld [vmem:[%s12 + $0x198] sm:$0xff]
    %v1686 = vld [vmem:[%s12 + $0x1a0] sm:$0xff]
    %v1687 = vld [vmem:[%s12 + $0x1a8] sm:$0xff]
    %v1688 = vld [vmem:[%s12 + $0x1b0] sm:$0xff]
    %v1689 = vld [vmem:[%s12 + $0x1b8] sm:$0xff]
    %v1690 = vld [vmem:[%s12 + $0x1c0] sm:$0xff]
    %v1691 = vld [vmem:[%s12 + $0x1c8] sm:$0xff]
    %v1692 = vld [vmem:[%s12 + $0x1d0] sm:$0xff]
    %v1693 = vld [vmem:[%s12 + $0x1d8] sm:$0xff]
    %v1694 = vld [vmem:[%s12 + $0x1e0] sm:$0xff]
    %v1695 = vld [vmem:[%s12 + $0x1e8] sm:$0xff]
    %v1696 = vld [vmem:[%s12 + $0x1f0] sm:$0xff]
    %v1697 = vld [vmem:[%s12 + $0x1f8] sm:$0xff]
    %v1698 = vld [vmem:[%s12 + $0x200] sm:$0xff]
    %v1699 = vld [vmem:[%s12 + $0x208] sm:$0xff]
    %v1700 = vld [vmem:[%s12 + $0x210] sm:$0xff]
    %v1701 = vld [vmem:[%s12 + $0x218] sm:$0xff]
    %v1702 = vld [vmem:[%s12 + $0x220] sm:$0xff]
    %v1703 = vld [vmem:[%s12 + $0x228] sm:$0xff]
    %v1704 = vld [vmem:[%s12 + $0x230] sm:$0xff]
    %v1705 = vld [vmem:[%s12 + $0x238] sm:$0xff]
    %v1706 = vld [vmem:[%s12 + $0x240] sm:$0xff]
    %v1707 = vld [vmem:[%s12 + $0x248] sm:$0xff]
    %v1708 = vld [vmem:[%s12 + $0x250] sm:$0xff]
    %v1709 = vld [vmem:[%s12 + $0x258] sm:$0xff]
    %v1710 = vld [vmem:[%s12 + $0x260] sm:$0xff]
    %v1711 = vld [vmem:[%s12 + $0x268] sm:$0xff]
    %v1712 = vld [vmem:[%s12 + $0x270] sm:$0xff]
    %v1713 = vld [vmem:[%s12 + $0x278] sm:$0xff]
    %v1714 = vld [vmem:[%s12 + $0x280] sm:$0xff]
    %v1715 = vld [vmem:[%s12 + $0x288] sm:$0xff]
    %v1716 = vld [vmem:[%s12 + $0x290] sm:$0xff]
    %v1717 = vld [vmem:[%s12 + $0x298] sm:$0xff]
    %v1718 = vld [vmem:[%s12 + $0x2a0] sm:$0xff]
    %v1719 = vld [vmem:[%s12 + $0x2a8] sm:$0xff]
    %v1720 = vld [vmem:[%s12 + $0x2b0] sm:$0xff]
    %v1721 = vld [vmem:[%s12 + $0x2b8] sm:$0xff]
    %v1722 = vld [vmem:[%s12 + $0x2c0] sm:$0xff]
    %v1723 = vld [vmem:[%s12 + $0x2c8] sm:$0xff]
    %v1724 = vld [vmem:[%s12 + $0x2d0] sm:$0xff]
    %v1725 = vld [vmem:[%s12 + $0x2d8] sm:$0xff]
    %v1726 = vld [vmem:[%s12 + $0x2e0] sm:$0xff]
    %v1727 = vld [vmem:[%s12 + $0x2e8] sm:$0xff]
    %v1728 = vld [vmem:[%s12 + $0x2f0] sm:$0xff]
    %v1729 = vld [vmem:[%s12 + $0x2f8] sm:$0xff]
    %v1730 = vld [vmem:[%s12 + $0x300] sm:$0xff]
    %v1731 = vld [vmem:[%s12 + $0x308] sm:$0xff]
    %v1732 = vld [vmem:[%s12 + $0x310] sm:$0xff]
    %v1733 = vld [vmem:[%s12 + $0x318] sm:$0xff]
    %v1734 = vld [vmem:[%s12 + $0x320] sm:$0xff]
    %v1735 = vld [vmem:[%s12 + $0x328] sm:$0xff]
    %v1736 = vld [vmem:[%s12 + $0x330] sm:$0xff]
    %v1737 = vld [vmem:[%s12 + $0x338] sm:$0xff]
    %v1738 = vld [vmem:[%s12 + $0x340] sm:$0xff]
    %v1739 = vld [vmem:[%s12 + $0x348] sm:$0xff]
    %v1740 = vld [vmem:[%s12 + $0x350] sm:$0xff]
    %v1741 = vld [vmem:[%s12 + $0x358] sm:$0xff]
    %v1742 = vld [vmem:[%s12 + $0x360] sm:$0xff]
    %v1743 = vld [vmem:[%s12 + $0x368] sm:$0xff]
    %v1744 = vld [vmem:[%s12 + $0x370] sm:$0xff]
    %v1745 = vld [vmem:[%s12 + $0x378] sm:$0xff]
    %v1746 = vld [vmem:[%s12 + $0x380] sm:$0xff]
    %v1747 = vld [vmem:[%s12 + $0x388] sm:$0xff]
    %v1748 = vld [vmem:[%s12 + $0x390] sm:$0xff]
    %v1749 = vld [vmem:[%s12 + $0x398] sm:$0xff]
    %v1750 = vld [vmem:[%s12 + $0x3a0] sm:$0xff]
    %v1751 = vld [vmem:[%s12 + $0x3a8] sm:$0xff]
    %v1752 = vld [vmem:[%s12 + $0x3b0] sm:$0xff]
    %v1753 = vld [vmem:[%s12 + $0x3b8] sm:$0xff]
    %v1754 = vld [vmem:[%s12 + $0x3c0] sm:$0xff]
    %v1755 = vld [vmem:[%s12 + $0x3c8] sm:$0xff]
    %v1756 = vld [vmem:[%s12 + $0x3d0] sm:$0xff]
    %v1757 = vld [vmem:[%s12 + $0x3d8] sm:$0xff]
    %v1758 = vld [vmem:[%s12 + $0x3e0] sm:$0xff]
    %v1759 = vld [vmem:[%s12 + $0x3e8] sm:$0xff]
    %v1760 = vld [vmem:[%s12 + $0x3f0] sm:$0xff]
    %v1761 = vld [vmem:[%s12 + $0x3f8] sm:$0xff]
    %v1762 = vld [vmem:[%s12 + $0x400] sm:$0xff]
    %v1763 = vld [vmem:[%s12 + $0x408] sm:$0xff]
    %v1764 = vld [vmem:[%s12 + $0x410] sm:$0xff]
    %v1765 = vld [vmem:[%s12 + $0x418] sm:$0xff]
    %v1766 = vld [vmem:[%s12 + $0x420] sm:$0xff]
    %v1767 = vld [vmem:[%s12 + $0x428] sm:$0xff]
    %v1768 = vld [vmem:[%s12 + $0x430] sm:$0xff]
    %v1769 = vld [vmem:[%s12 + $0x438] sm:$0xff]
    %v1770 = vld [vmem:[%s12 + $0x440] sm:$0xff]
    %v1771 = vld [vmem:[%s12 + $0x448] sm:$0xff]
    %v1772 = vld [vmem:[%s12 + $0x450] sm:$0xff]
    %v1773 = vld [vmem:[%s12 + $0x458] sm:$0xff]
    %v1774 = vld [vmem:[%s12 + $0x460] sm:$0xff]
    %v1775 = vld [vmem:[%s12 + $0x468] sm:$0xff]
    %v1776 = vld [vmem:[%s12 + $0x470] sm:$0xff]
    %v1777 = vld [vmem:[%s12 + $0x478] sm:$0xff]
    %v1778 = vld [vmem:[%s12 + $0x480] sm:$0xff]
    %v1779 = vld [vmem:[%s12 + $0x488] sm:$0xff]
    %v1780 = vld [vmem:[%s12 + $0x490] sm:$0xff]
    %v1781 = vld [vmem:[%s12 + $0x498] sm:$0xff]
    %v1782 = vld [vmem:[%s12 + $0x4a0] sm:$0xff]
    %v1783 = vld [vmem:[%s12 + $0x4a8] sm:$0xff]
    %v1784 = vld [vmem:[%s12 + $0x4b0] sm:$0xff]
    %v1785 = vld [vmem:[%s12 + $0x4b8] sm:$0xff]
    %v1786 = vld [vmem:[%s12 + $0x4c0] sm:$0xff]
    %v1787 = vld [vmem:[%s12 + $0x4c8] sm:$0xff]
    %v1788 = vld [vmem:[%s12 + $0x4d0] sm:$0xff]
    %v1789 = vld [vmem:[%s12 + $0x4d8] sm:$0xff]
    %v1790 = vld [vmem:[%s12 + $0x4e0] sm:$0xff]
    %v1791 = vld [vmem:[%s12 + $0x4e8] sm:$0xff]
    %v1792 = vld [vmem:[%s12 + $0x4f0] sm:$0xff]
    %v1793 = vld [vmem:[%s12 + $0x4f8] sm:$0xff]
    %v1794 = vld [vmem:[%s12 + $0x500] sm:$0xff]
    %v1795 = vld [vmem:[%s12 + $0x508] sm:$0xff]
    %v1796 = vld [vmem:[%s12 + $0x510] sm:$0xff]
    %v1797 = vld [vmem:[%s12 + $0x518] sm:$0xff]
    %v1798 = vld [vmem:[%s12 + $0x520] sm:$0xff]
    %v1799 = vld [vmem:[%s12 + $0x528] sm:$0xff]
    %v1800 = vld [vmem:[%s12 + $0x530] sm:$0xff]
    %v1801 = vld [vmem:[%s12 + $0x538] sm:$0xff]
    %v1802 = vld [vmem:[%s12 + $0x540] sm:$0xff]
    %v1803 = vld [vmem:[%s12 + $0x548] sm:$0xff]
    %v1804 = vld [vmem:[%s12 + $0x550] sm:$0xff]
    %v1805 = vld [vmem:[%s12 + $0x558] sm:$0xff]
    %v1806 = vld [vmem:[%s12 + $0x560] sm:$0xff]
    %v1807 = vld [vmem:[%s12 + $0x568] sm:$0xff]
    %v1808 = vld [vmem:[%s12 + $0x570] sm:$0xff]
    %v1809 = vld [vmem:[%s12 + $0x578] sm:$0xff]
    %v1810 = vld [vmem:[%s12 + $0x580] sm:$0xff]
    %v1811 = vld [vmem:[%s12 + $0x588] sm:$0xff]
    %v1812 = vld [vmem:[%s12 + $0x590] sm:$0xff]
    %v1813 = vld [vmem:[%s12 + $0x598] sm:$0xff]
    %v1814 = vld [vmem:[%s12 + $0x5a0] sm:$0xff]
    %v1815 = vld [vmem:[%s12 + $0x5a8] sm:$0xff]
    %v1816 = vld [vmem:[%s12 + $0x5b0] sm:$0xff]
    %v1817 = vld [vmem:[%s12 + $0x5b8] sm:$0xff]
    %v1818 = vld [vmem:[%s12 + $0x5c0] sm:$0xff]
    %v1819 = vld [vmem:[%s12 + $0x5c8] sm:$0xff]
    %v1820 = vld [vmem:[%s12 + $0x5d0] sm:$0xff]
    %v1821 = vld [vmem:[%s12 + $0x5d8] sm:$0xff]
    %v1822 = vld [vmem:[%s12 + $0x5e0] sm:$0xff]
    %v1823 = vld [vmem:[%s12 + $0x5e8] sm:$0xff]
    %v1824 = vld [vmem:[%s12 + $0x5f0] sm:$0xff]
    %v1825 = vld [vmem:[%s12 + $0x5f8] sm:$0xff]
    %v1826 = vld [vmem:[%s12 + $0x600] sm:$0xff]
    %v1827 = vld [vmem:[%s12 + $0x608] sm:$0xff]
    %v1828 = vld [vmem:[%s12 + $0x610] sm:$0xff]
    %v1829 = vld [vmem:[%s12 + $0x618] sm:$0xff]
    %v1830 = vld [vmem:[%s12 + $0x620] sm:$0xff]
    %v1831 = vld [vmem:[%s12 + $0x628] sm:$0xff]
    %v1832 = vld [vmem:[%s12 + $0x630] sm:$0xff]
    %v1833 = vld [vmem:[%s12 + $0x638] sm:$0xff]
    %v1834 = vld [vmem:[%s12 + $0x640] sm:$0xff]
    %v1835 = vld [vmem:[%s12 + $0x648] sm:$0xff]
    %v1836 = vld [vmem:[%s12 + $0x650] sm:$0xff]
    %v1837 = vld [vmem:[%s12 + $0x658] sm:$0xff]
    %v1838 = vld [vmem:[%s12 + $0x660] sm:$0xff]
    %v1839 = vld [vmem:[%s12 + $0x668] sm:$0xff]
    %v1840 = vld [vmem:[%s12 + $0x670] sm:$0xff]
    %v1841 = vld [vmem:[%s12 + $0x678] sm:$0xff]
    %v1842 = vld [vmem:[%s12 + $0x680] sm:$0xff]
    %v1843 = vld [vmem:[%s12 + $0x688] sm:$0xff]
    %v1844 = vld [vmem:[%s12 + $0x690] sm:$0xff]
    %v1845 = vld [vmem:[%s12 + $0x698] sm:$0xff]
    %v1846 = vld [vmem:[%s12 + $0x6a0] sm:$0xff]
    %v1847 = vld [vmem:[%s12 + $0x6a8] sm:$0xff]
    %v1848 = vld [vmem:[%s12 + $0x6b0] sm:$0xff]
    %v1849 = vld [vmem:[%s12 + $0x6b8] sm:$0xff]
    %v1850 = vld [vmem:[%s12 + $0x6c0] sm:$0xff]
    %v1851 = vld [vmem:[%s12 + $0x6c8] sm:$0xff]
    %v1852 = vld [vmem:[%s12 + $0x6d0] sm:$0xff]
    %v1853 = vld [vmem:[%s12 + $0x6d8] sm:$0xff]
    %v1854 = vld [vmem:[%s12 + $0x6e0] sm:$0xff]
    %v1855 = vld [vmem:[%s12 + $0x6e8] sm:$0xff]
    %v1856 = vld [vmem:[%s12 + $0x6f0] sm:$0xff]
    %v1857 = vld [vmem:[%s12 + $0x6f8] sm:$0xff]
    %v1858 = vld [vmem:[%s12 + $0x700] sm:$0xff]
    %v1859 = vld [vmem:[%s12 + $0x708] sm:$0xff]
    %v1860 = vld [vmem:[%s12 + $0x710] sm:$0xff]
    %v1861 = vld [vmem:[%s12 + $0x718] sm:$0xff]
    %v1862 = vld [vmem:[%s12 + $0x720] sm:$0xff]
    %v1863 = vld [vmem:[%s12 + $0x728] sm:$0xff]
    %v1864 = vld [vmem:[%s12 + $0x730] sm:$0xff]
    %v1865 = vld [vmem:[%s12 + $0x738] sm:$0xff]
    %v1866 = vld [vmem:[%s12 + $0x740] sm:$0xff]
    %v1867 = vld [vmem:[%s12 + $0x748] sm:$0xff]
    %v1868 = vld [vmem:[%s12 + $0x750] sm:$0xff]
    %v1869 = vld [vmem:[%s12 + $0x758] sm:$0xff]
    %v1870 = vld [vmem:[%s12 + $0x760] sm:$0xff]
    %v1871 = vld [vmem:[%s12 + $0x768] sm:$0xff]
    %v1872 = vld [vmem:[%s12 + $0x770] sm:$0xff]
    %v1873 = vld [vmem:[%s12 + $0x778] sm:$0xff]
    %v1874 = vld [vmem:[%s12 + $0x780] sm:$0xff]
    %v1875 = vld [vmem:[%s12 + $0x788] sm:$0xff]
    %v1876 = vld [vmem:[%s12 + $0x790] sm:$0xff]
    %v1877 = vld [vmem:[%s12 + $0x798] sm:$0xff]
    %v1878 = vld [vmem:[%s12 + $0x7a0] sm:$0xff]
    %v1879 = vld [vmem:[%s12 + $0x7a8] sm:$0xff]
    %v1880 = vld [vmem:[%s12 + $0x7b0] sm:$0xff]
    %v1881 = vld [vmem:[%s12 + $0x7b8] sm:$0xff]
    %v1882 = vld [vmem:[%s12 + $0x7c0] sm:$0xff]
    %v1883 = vld [vmem:[%s12 + $0x7c8] sm:$0xff]
    %v1884 = vld [vmem:[%s12 + $0x7d0] sm:$0xff]
    %v1885 = vld [vmem:[%s12 + $0x7d8] sm:$0xff]
    %v1886 = vld [vmem:[%s12 + $0x7e0] sm:$0xff]
    %v1887 = vld [vmem:[%s12 + $0x7e8] sm:$0xff]
    %v1888 = vld [vmem:[%s12 + $0x7f0] sm:$0xff]
    %v1889 = vld [vmem:[%s12 + $0x7f8] sm:$0xff]
    %v1890 = vld [vmem:[%s12 + $0x800] sm:$0xff]
    %v1891 = vld [vmem:[%s12 + $0x808] sm:$0xff]
    %v1892 = vld [vmem:[%s12 + $0x810] sm:$0xff]
    %v1893 = vld [vmem:[%s12 + $0x818] sm:$0xff]
    %v1894 = vld [vmem:[%s12 + $0x820] sm:$0xff]
    %v1895 = vld [vmem:[%s12 + $0x828] sm:$0xff]
    %v1896 = vld [vmem:[%s12 + $0x830] sm:$0xff]
    %v1897 = vld [vmem:[%s12 + $0x838] sm:$0xff]
    %v1898 = vld [vmem:[%s12 + $0x840] sm:$0xff]
    %v1899 = vld [vmem:[%s12 + $0x848] sm:$0xff]
    %v1900 = vld [vmem:[%s12 + $0x850] sm:$0xff]
    %v1901 = vld [vmem:[%s12 + $0x858] sm:$0xff]
    %v1902 = vld [vmem:[%s12 + $0x860] sm:$0xff]
    %v1903 = vld [vmem:[%s12 + $0x868] sm:$0xff]
    %v1904 = vld [vmem:[%s12 + $0x870] sm:$0xff]
    %v1905 = vld [vmem:[%s12 + $0x878] sm:$0xff]
    %v1906 = vld [vmem:[%s12 + $0x880] sm:$0xff]
    %v1907 = vld [vmem:[%s12 + $0x888] sm:$0xff]
    %v1908 = vld [vmem:[%s12 + $0x890] sm:$0xff]
    %v1909 = vld [vmem:[%s12 + $0x898] sm:$0xff]
    %v1910 = vld [vmem:[%s12 + $0x8a0] sm:$0xff]
    %v1911 = vld [vmem:[%s12 + $0x8a8] sm:$0xff]
    %v1912 = vld [vmem:[%s12 + $0x8b0] sm:$0xff]
    %v1913 = vld [vmem:[%s12 + $0x8b8] sm:$0xff]
    %v1914 = vld [vmem:[%s12 + $0x8c0] sm:$0xff]
    %v1915 = vld [vmem:[%s12 + $0x8c8] sm:$0xff]
    %v1916 = vld [vmem:[%s12 + $0x8d0] sm:$0xff]
    %v1917 = vld [vmem:[%s12 + $0x8d8] sm:$0xff]
    %v1918 = vld [vmem:[%s12 + $0x8e0] sm:$0xff]
    %v1919 = vld [vmem:[%s12 + $0x8e8] sm:$0xff]
    %v1920 = vld [vmem:[%s12 + $0x8f0] sm:$0xff]
    %v1921 = vld [vmem:[%s12 + $0x8f8] sm:$0xff]
    %v1922 = vld [vmem:[%s12 + $0x900] sm:$0xff]
    %v1923 = vld [vmem:[%s12 + $0x908] sm:$0xff]
    %v1924 = vld [vmem:[%s12 + $0x910] sm:$0xff]
    %v1925 = vld [vmem:[%s12 + $0x918] sm:$0xff]
    %v1926 = vld [vmem:[%s12 + $0x920] sm:$0xff]
    %v1927 = vld [vmem:[%s12 + $0x928] sm:$0xff]
    %v1928 = vld [vmem:[%s12 + $0x930] sm:$0xff]
    %v1929 = vld [vmem:[%s12 + $0x938] sm:$0xff]
    %v1930 = vld [vmem:[%s12 + $0x940] sm:$0xff]
    %v1931 = vld [vmem:[%s12 + $0x948] sm:$0xff]
    %v1932 = vld [vmem:[%s12 + $0x950] sm:$0xff]
    %v1933 = vld [vmem:[%s12 + $0x958] sm:$0xff]
    %v1934 = vld [vmem:[%s12 + $0x960] sm:$0xff]
    %v1935 = vld [vmem:[%s12 + $0x968] sm:$0xff]
    %v1936 = vld [vmem:[%s12 + $0x970] sm:$0xff]
    %v1937 = vld [vmem:[%s12 + $0x978] sm:$0xff]
    %v1938 = vld [vmem:[%s12 + $0x980] sm:$0xff]
    %v1939 = vld [vmem:[%s12 + $0x988] sm:$0xff]
    %v1940 = vld [vmem:[%s12 + $0x990] sm:$0xff]
    %v1941 = vld [vmem:[%s12 + $0x998] sm:$0xff]
    %v1942 = vld [vmem:[%s12 + $0x9a0] sm:$0xff]
    %v1943 = vld [vmem:[%s12 + $0x9a8] sm:$0xff]
    %v1944 = vld [vmem:[%s12 + $0x9b0] sm:$0xff]
    %v1945 = vld [vmem:[%s12 + $0x9b8] sm:$0xff]
    %v1946 = vld [vmem:[%s12 + $0x9c0] sm:$0xff]
    %v1947 = vld [vmem:[%s12 + $0x9c8] sm:$0xff]
    %v1948 = vld [vmem:[%s12 + $0x9d0] sm:$0xff]
    %v1949 = vld [vmem:[%s12 + $0x9d8] sm:$0xff]
    %v1950 = vld [vmem:[%s12 + $0x9e0] sm:$0xff]
    %v1951 = vld [vmem:[%s12 + $0x9e8] sm:$0xff]
    %v1952 = vld [vmem:[%s12 + $0x9f0] sm:$0xff]
    %v1953 = vld [vmem:[%s12 + $0x9f8] sm:$0xff]
    %v1954 = vld [vmem:[%s12 + $0xa00] sm:$0xff]
    %v1955 = vld [vmem:[%s12 + $0xa08] sm:$0xff]
    %v1956 = vld [vmem:[%s12 + $0xa10] sm:$0xff]
    %v1957 = vld [vmem:[%s12 + $0xa18] sm:$0xff]
    %v1958 = vld [vmem:[%s12 + $0xa20] sm:$0xff]
    %v1959 = vld [vmem:[%s12 + $0xa28] sm:$0xff]
    %v1960 = vld [vmem:[%s12 + $0xa30] sm:$0xff]
    %v1961 = vld [vmem:[%s12 + $0xa38] sm:$0xff]
    %v1962 = vld [vmem:[%s12 + $0xa40] sm:$0xff]
    %v1963 = vld [vmem:[%s12 + $0xa48] sm:$0xff]
    %v1964 = vld [vmem:[%s12 + $0xa50] sm:$0xff]
    %v1965 = vld [vmem:[%s12 + $0xa58] sm:$0xff]
    %v1966 = vld [vmem:[%s12 + $0xa60] sm:$0xff]
    %v1967 = vld [vmem:[%s12 + $0xa68] sm:$0xff]
    %v1968 = vld [vmem:[%s12 + $0xa70] sm:$0xff]
    %v1969 = vld [vmem:[%s12 + $0xa78] sm:$0xff]
    %v1970 = vld [vmem:[%s12 + $0xa80] sm:$0xff]
    %v1971 = vld [vmem:[%s12 + $0xa88] sm:$0xff]
    %v1972 = vld [vmem:[%s12 + $0xa90] sm:$0xff]
    %v1973 = vld [vmem:[%s12 + $0xa98] sm:$0xff]
    %v1974 = vld [vmem:[%s12 + $0xaa0] sm:$0xff]
    %v1975 = vld [vmem:[%s12 + $0xaa8] sm:$0xff]
    %v1976 = vld [vmem:[%s12 + $0xab0] sm:$0xff]
    %v1977 = vld [vmem:[%s12 + $0xab8] sm:$0xff]
    %v1978 = vld [vmem:[%s12 + $0xac0] sm:$0xff]
    %v1979 = vld [vmem:[%s12 + $0xac8] sm:$0xff]
    %v1980 = vld [vmem:[%s12 + $0xad0] sm:$0xff]
    %v1981 = vld [vmem:[%s12 + $0xad8] sm:$0xff]
    %v1982 = vld [vmem:[%s12 + $0xae0] sm:$0xff]
    %v1983 = vld [vmem:[%s12 + $0xae8] sm:$0xff]
    %v1984 = vld [vmem:[%s12 + $0xaf0] sm:$0xff]
    %v1985 = vld [vmem:[%s12 + $0xaf8] sm:$0xff]
    %v1986 = vld [vmem:[%s12 + $0xb00] sm:$0xff]
    %v1987 = vld [vmem:[%s12 + $0xb08] sm:$0xff]
    %v1988 = vld [vmem:[%s12 + $0xb10] sm:$0xff]
    %v1989 = vld [vmem:[%s12 + $0xb18] sm:$0xff]
    %v1990 = vld [vmem:[%s12 + $0xb20] sm:$0xff]
    %v1991 = vld [vmem:[%s12 + $0xb28] sm:$0xff]
    %v1992 = vld [vmem:[%s12 + $0xb30] sm:$0xff]
    %v1993 = vld [vmem:[%s12 + $0xb38] sm:$0xff]
    %v1994 = vld [vmem:[%s12 + $0xb40] sm:$0xff]
    %v1995 = vld [vmem:[%s12 + $0xb48] sm:$0xff]
    %v1996 = vld [vmem:[%s12 + $0xb50] sm:$0xff]
    %v1997 = vld [vmem:[%s12 + $0xb58] sm:$0xff]
    %v1998 = vld [vmem:[%s12 + $0xb60] sm:$0xff]
    %v1999 = vld [vmem:[%s12 + $0xb68] sm:$0xff]
    %v2000 = vld [vmem:[%s12 + $0xb70] sm:$0xff]
    %v2001 = vld [vmem:[%s12 + $0xb78] sm:$0xff]
    %v2002 = vld [vmem:[%s12 + $0xb80] sm:$0xff]
    %v2003 = vld [vmem:[%s12 + $0xb88] sm:$0xff]
    %v2004 = vld [vmem:[%s12 + $0xb90] sm:$0xff]
    %v2005 = vld [vmem:[%s12 + $0xb98] sm:$0xff]
    %v2006 = vld [vmem:[%s12 + $0xba0] sm:$0xff]
    %v2007 = vld [vmem:[%s12 + $0xba8] sm:$0xff]
    %v2008 = vld [vmem:[%s12 + $0xbb0] sm:$0xff]
    %v2009 = vld [vmem:[%s12 + $0xbb8] sm:$0xff]
    %v2010 = vld [vmem:[%s12 + $0xbc0] sm:$0xff]
    %v2011 = vld [vmem:[%s12 + $0xbc8] sm:$0xff]
    %v2012 = vld [vmem:[%s12 + $0xbd0] sm:$0xff]
    %v2013 = vld [vmem:[%s12 + $0xbd8] sm:$0xff]
    %v2014 = vld [vmem:[%s12 + $0xbe0] sm:$0xff]
    %v2015 = vld [vmem:[%s12 + $0xbe8] sm:$0xff]
    %v2016 = vld [vmem:[%s12 + $0xbf0] sm:$0xff]
    %v2017 = vld [vmem:[%s12 + $0xbf8] sm:$0xff]
    %v2018 = vld [vmem:[%s12 + $0xc00] sm:$0xff]
    %v2019 = vld [vmem:[%s12 + $0xc08] sm:$0xff]
    %v2020 = vld [vmem:[%s12 + $0xc10] sm:$0xff]
    %v2021 = vld [vmem:[%s12 + $0xc18] sm:$0xff]
    %v2022 = vld [vmem:[%s12 + $0xc20] sm:$0xff]
    %v2023 = vld [vmem:[%s12 + $0xc28] sm:$0xff]
    %v2024 = vld [vmem:[%s12 + $0xc30] sm:$0xff]
    %v2025 = vld [vmem:[%s12 + $0xc38] sm:$0xff]
    %v2026 = vld [vmem:[%s12 + $0xc40] sm:$0xff]
    %v2027 = vld [vmem:[%s12 + $0xc48] sm:$0xff]
    %v2028 = vld [vmem:[%s12 + $0xc50] sm:$0xff]
    %v2029 = vld [vmem:[%s12 + $0xc58] sm:$0xff]
    %v2030 = vld [vmem:[%s12 + $0xc60] sm:$0xff]
    %v2031 = vld [vmem:[%s12 + $0xc68] sm:$0xff]
    %v2032 = vld [vmem:[%s12 + $0xc70] sm:$0xff]
    %v2033 = vld [vmem:[%s12 + $0xc78] sm:$0xff]
    %v2034 = vld [vmem:[%s12 + $0xc80] sm:$0xff]
    %v2035 = vld [vmem:[%s12 + $0xc88] sm:$0xff]
    %v2036 = vld [vmem:[%s12 + $0xc90] sm:$0xff]
    %v2037 = vld [vmem:[%s12 + $0xc98] sm:$0xff]
    %v2038 = vld [vmem:[%s12 + $0xca0] sm:$0xff]
    %v2039 = vld [vmem:[%s12 + $0xca8] sm:$0xff]
    %v2040 = vld [vmem:[%s12 + $0xcb0] sm:$0xff]
    %v2041 = vld [vmem:[%s12 + $0xcb8] sm:$0xff]
    %v2042 = vld [vmem:[%s12 + $0xcc0] sm:$0xff]
    %v2043 = vld [vmem:[%s12 + $0xcc8] sm:$0xff]
    %v2044 = vld [vmem:[%s12 + $0xcd0] sm:$0xff]
    %v2045 = vld [vmem:[%s12 + $0xcd8] sm:$0xff]
    %v2046 = vld [vmem:[%s12 + $0xce0] sm:$0xff]
    %v2047 = vld [vmem:[%s12 + $0xce8] sm:$0xff]
    %v2048 = vld [vmem:[%s12 + $0xcf0] sm:$0xff]
    %v2049 = vld [vmem:[%s12 + $0xcf8] sm:$0xff]
    %v2050 = vld [vmem:[%s12 + $0xd00] sm:$0xff]
    %v2051 = vld [vmem:[%s12 + $0xd08] sm:$0xff]
    %v2052 = vld [vmem:[%s12 + $0xd10] sm:$0xff]
    %v2053 = vld [vmem:[%s12 + $0xd18] sm:$0xff]
    %v2054 = vld [vmem:[%s12 + $0xd20] sm:$0xff]
    %v2055 = vld [vmem:[%s12 + $0xd28] sm:$0xff]
    %v2056 = vld [vmem:[%s12 + $0xd30] sm:$0xff]
    %v2057 = vld [vmem:[%s12 + $0xd38] sm:$0xff]
    %v2058 = vld [vmem:[%s12 + $0xd40] sm:$0xff]
    %v2059 = vld [vmem:[%s12 + $0xd48] sm:$0xff]
    %v2060 = vld [vmem:[%s12 + $0xd50] sm:$0xff]
    %v2061 = vld [vmem:[%s12 + $0xd58] sm:$0xff]
    %v2062 = vld [vmem:[%s12 + $0xd60] sm:$0xff]
    %v2063 = vld [vmem:[%s12 + $0xd68] sm:$0xff]
    %v2064 = vld [vmem:[%s12 + $0xd70] sm:$0xff]
    %v2065 = vld [vmem:[%s12 + $0xd78] sm:$0xff]
    %v2066 = vld [vmem:[%s12 + $0xd80] sm:$0xff]
    %v2067 = vld [vmem:[%s12 + $0xd88] sm:$0xff]
    %v2068 = vld [vmem:[%s12 + $0xd90] sm:$0xff]
    %v2069 = vld [vmem:[%s12 + $0xd98] sm:$0xff]
    %v2070 = vld [vmem:[%s12 + $0xda0] sm:$0xff]
    %v2071 = vld [vmem:[%s12 + $0xda8] sm:$0xff]
    %v2072 = vld [vmem:[%s12 + $0xdb0] sm:$0xff]
    %v2073 = vld [vmem:[%s12 + $0xdb8] sm:$0xff]
    %v2074 = vld [vmem:[%s12 + $0xdc0] sm:$0xff]
    %v2075 = vld [vmem:[%s12 + $0xdc8] sm:$0xff]
    %v2076 = vld [vmem:[%s12 + $0xdd0] sm:$0xff]
    %v2077 = vld [vmem:[%s12 + $0xdd8] sm:$0xff]
    %v2078 = vld [vmem:[%s12 + $0xde0] sm:$0xff]
    %v2079 = vld [vmem:[%s12 + $0xde8] sm:$0xff]
    %v2080 = vld [vmem:[%s12 + $0xdf0] sm:$0xff]
    %v2081 = vld [vmem:[%s12 + $0xdf8] sm:$0xff]
    %v2082 = vld [vmem:[%s12 + $0xe00] sm:$0xff]
    %v2083 = vld [vmem:[%s12 + $0xe08] sm:$0xff]
    %v2084 = vld [vmem:[%s12 + $0xe10] sm:$0xff]
    %v2085 = vld [vmem:[%s12 + $0xe18] sm:$0xff]
    %v2086 = vld [vmem:[%s12 + $0xe20] sm:$0xff]
    %v2087 = vld [vmem:[%s12 + $0xe28] sm:$0xff]
    %v2088 = vld [vmem:[%s12 + $0xe30] sm:$0xff]
    %v2089 = vld [vmem:[%s12 + $0xe38] sm:$0xff]
    %v2090 = vld [vmem:[%s12 + $0xe40] sm:$0xff]
    %v2091 = vld [vmem:[%s12 + $0xe48] sm:$0xff]
    %v2092 = vld [vmem:[%s12 + $0xe50] sm:$0xff]
    %v2093 = vld [vmem:[%s12 + $0xe58] sm:$0xff]
    %v2094 = vld [vmem:[%s12 + $0xe60] sm:$0xff]
    %v2095 = vld [vmem:[%s12 + $0xe68] sm:$0xff]
    %v2096 = vld [vmem:[%s12 + $0xe70] sm:$0xff]
    %v2097 = vld [vmem:[%s12 + $0xe78] sm:$0xff]
    %v2098 = vld [vmem:[%s12 + $0xe80] sm:$0xff]
    %v2099 = vld [vmem:[%s12 + $0xe88] sm:$0xff]
    %v2100 = vld [vmem:[%s12 + $0xe90] sm:$0xff]
    %v2101 = vld [vmem:[%s12 + $0xe98] sm:$0xff]
    %v2102 = vld [vmem:[%s12 + $0xea0] sm:$0xff]
    %v2103 = vld [vmem:[%s12 + $0xea8] sm:$0xff]
    %v2104 = vld [vmem:[%s12 + $0xeb0] sm:$0xff]
    %v2105 = vld [vmem:[%s12 + $0xeb8] sm:$0xff]
    %v2106 = vld [vmem:[%s12 + $0xec0] sm:$0xff]
    %v2107 = vld [vmem:[%s12 + $0xec8] sm:$0xff]
    %v2108 = vld [vmem:[%s12 + $0xed0] sm:$0xff]
    %v2109 = vld [vmem:[%s12 + $0xed8] sm:$0xff]
    %v2110 = vld [vmem:[%s12 + $0xee0] sm:$0xff]
    %v2111 = vld [vmem:[%s12 + $0xee8] sm:$0xff]
    %v2112 = vld [vmem:[%s12 + $0xef0] sm:$0xff]
    %v2113 = vld [vmem:[%s12 + $0xef8] sm:$0xff]
    %v2114 = vld [vmem:[%s12 + $0xf00] sm:$0xff]
    %v2115 = vld [vmem:[%s12 + $0xf08] sm:$0xff]
    %v2116 = vld [vmem:[%s12 + $0xf10] sm:$0xff]
    %v2117 = vld [vmem:[%s12 + $0xf18] sm:$0xff]
    %v2118 = vld [vmem:[%s12 + $0xf20] sm:$0xff]
    %v2119 = vld [vmem:[%s12 + $0xf28] sm:$0xff]
    %v2120 = vld [vmem:[%s12 + $0xf30] sm:$0xff]
    %v2121 = vld [vmem:[%s12 + $0xf38] sm:$0xff]
    %v2122 = vld [vmem:[%s12 + $0xf40] sm:$0xff]
    %v2123 = vld [vmem:[%s12 + $0xf48] sm:$0xff]
    %v2124 = vld [vmem:[%s12 + $0xf50] sm:$0xff]
    %v2125 = vld [vmem:[%s12 + $0xf58] sm:$0xff]
    %v2126 = vld [vmem:[%s12 + $0xf60] sm:$0xff]
    %v2127 = vld [vmem:[%s12 + $0xf68] sm:$0xff]
    %v2128 = vld [vmem:[%s12 + $0xf70] sm:$0xff]
    %v2129 = vld [vmem:[%s12 + $0xf78] sm:$0xff]
    %v2130 = vld [vmem:[%s12 + $0xf80] sm:$0xff]
    %v2131 = vld [vmem:[%s12 + $0xf88] sm:$0xff]
    %v2132 = vld [vmem:[%s12 + $0xf90] sm:$0xff]
    %v2133 = vld [vmem:[%s12 + $0xf98] sm:$0xff]
    %v2134 = vld [vmem:[%s12 + $0xfa0] sm:$0xff]
    %v2135 = vld [vmem:[%s12 + $0xfa8] sm:$0xff]
    %v2136 = vld [vmem:[%s12 + $0xfb0] sm:$0xff]
    %v2137 = vld [vmem:[%s12 + $0xfb8] sm:$0xff]
    %v2138 = vld [vmem:[%s12 + $0xfc0] sm:$0xff]
    %v2139 = vld [vmem:[%s12 + $0xfc8] sm:$0xff]
    %v2140 = vld [vmem:[%s12 + $0xfd0] sm:$0xff]
    %v2141 = vld [vmem:[%s12 + $0xfd8] sm:$0xff]
    %v2142 = vld [vmem:[%s12 + $0xfe0] sm:$0xff]
    %v2143 = vld [vmem:[%s12 + $0xfe8] sm:$0xff]
    %v2144 = vld [vmem:[%s12 + $0xff0] sm:$0xff]
    %v2145 = vld [vmem:[%s12 + $0xff8] sm:$0xff]
    %2146 = vmatpush.msra.mxu0 %v1694
    %2147 = vmatpush.msra.mxu0 %v1690
    %2148 = vmatpush.msra.mxu0 %v1686
    %2149 = vmatpush.msra.mxu0 %v1682
    %2150 = vmatpush.msra.mxu0 %v1678
    %2151 = vmatpush.msra.mxu0 %v1674
    %2152 = vmatpush.msra.mxu0 %v1670
    %2153 = vmatpush.msra.mxu0 %v1666
    %2154 = vmatpush.msra.mxu0 %v1662
    %2155 = vmatpush.msra.mxu0 %v1658
    %2156 = vmatpush.msra.mxu0 %v1654
    %2157 = vmatpush.msra.mxu0 %v1650
    %2158 = vmatpush.msra.mxu0 %v1646
    %2159 = vmatpush.msra.mxu0 %v1642
    %2160 = vmatpush.msra.mxu0 %v1638
    %2161 = vmatpush.msra.mxu0 %v1634
    %2162 = vmatmul.f32.gmra.mxu0 %v1587
    %v2163 = vpop.f32.mrf.mxu0
    %v2164 = vadd.f32 0.0, %v2163
    %2165 = vdwg.mxu0
    %2166 = vmatpush.msra.mxu0 %v1758
    %2167 = vmatpush.msra.mxu0 %v1754
    %2168 = vmatpush.msra.mxu0 %v1750
    %2169 = vmatpush.msra.mxu0 %v1746
    %2170 = vmatpush.msra.mxu0 %v1742
    %2171 = vmatpush.msra.mxu0 %v1738
    %2172 = vmatpush.msra.mxu0 %v1734
    %2173 = vmatpush.msra.mxu0 %v1730
    %2174 = vmatpush.msra.mxu0 %v1726
    %2175 = vmatpush.msra.mxu0 %v1722
    %2176 = vmatpush.msra.mxu0 %v1718
    %2177 = vmatpush.msra.mxu0 %v1714
    %2178 = vmatpush.msra.mxu0 %v1710
    %2179 = vmatpush.msra.mxu0 %v1706
    %2180 = vmatpush.msra.mxu0 %v1702
    %2181 = vmatpush.msra.mxu0 %v1698
    %2182 = vmatmul.f32.gmra.mxu0 %v1589
    %v2183 = vpop.f32.mrf.mxu0
    %v2184 = vadd.f32 %v2164, %v2183
    %2185 = vdwg.mxu0
    %2186 = vmatpush.msra.mxu0 %v1822
    %2187 = vmatpush.msra.mxu0 %v1818
    %2188 = vmatpush.msra.mxu0 %v1814
    %2189 = vmatpush.msra.mxu0 %v1810
    %2190 = vmatpush.msra.mxu0 %v1806
    %2191 = vmatpush.msra.mxu0 %v1802
    %2192 = vmatpush.msra.mxu0 %v1798
    %2193 = vmatpush.msra.mxu0 %v1794
    %2194 = vmatpush.msra.mxu0 %v1790
    %2195 = vmatpush.msra.mxu0 %v1786
    %2196 = vmatpush.msra.mxu0 %v1782
    %2197 = vmatpush.msra.mxu0 %v1778
    %2198 = vmatpush.msra.mxu0 %v1774
    %2199 = vmatpush.msra.mxu0 %v1770
    %2200 = vmatpush.msra.mxu0 %v1766
    %2201 = vmatpush.msra.mxu0 %v1762
    %2202 = vmatmul.f32.gmra.mxu0 %v1591
    %v2203 = vpop.f32.mrf.mxu0
    %v2204 = vadd.f32 %v2184, %v2203
    %2205 = vdwg.mxu0
    %2206 = vmatpush.msra.mxu0 %v1886
    %2207 = vmatpush.msra.mxu0 %v1882
    %2208 = vmatpush.msra.mxu0 %v1878
    %2209 = vmatpush.msra.mxu0 %v1874
    %2210 = vmatpush.msra.mxu0 %v1870
    %2211 = vmatpush.msra.mxu0 %v1866
    %2212 = vmatpush.msra.mxu0 %v1862
    %2213 = vmatpush.msra.mxu0 %v1858
    %2214 = vmatpush.msra.mxu0 %v1854
    %2215 = vmatpush.msra.mxu0 %v1850
    %2216 = vmatpush.msra.mxu0 %v1846
    %2217 = vmatpush.msra.mxu0 %v1842
    %2218 = vmatpush.msra.mxu0 %v1838
    %2219 = vmatpush.msra.mxu0 %v1834
    %2220 = vmatpush.msra.mxu0 %v1830
    %2221 = vmatpush.msra.mxu0 %v1826
    %2222 = vmatmul.f32.gmra.mxu0 %v1593
    %v2223 = vpop.f32.mrf.mxu0
    %v2224 = vadd.f32 %v2204, %v2223
    %2225 = vdwg.mxu0
    %2226 = vmatpush.msra.mxu0 %v1950
    %2227 = vmatpush.msra.mxu0 %v1946
    %2228 = vmatpush.msra.mxu0 %v1942
    %2229 = vmatpush.msra.mxu0 %v1938
    %2230 = vmatpush.msra.mxu0 %v1934
    %2231 = vmatpush.msra.mxu0 %v1930
    %2232 = vmatpush.msra.mxu0 %v1926
    %2233 = vmatpush.msra.mxu0 %v1922
    %2234 = vmatpush.msra.mxu0 %v1918
    %2235 = vmatpush.msra.mxu0 %v1914
    %2236 = vmatpush.msra.mxu0 %v1910
    %2237 = vmatpush.msra.mxu0 %v1906
    %2238 = vmatpush.msra.mxu0 %v1902
    %2239 = vmatpush.msra.mxu0 %v1898
    %2240 = vmatpush.msra.mxu0 %v1894
    %2241 = vmatpush.msra.mxu0 %v1890
    %2242 = vmatmul.f32.gmra.mxu0 %v1595
    %v2243 = vpop.f32.mrf.mxu0
    %v2244 = vadd.f32 %v2224, %v2243
    %2245 = vdwg.mxu0
    %2246 = vmatpush.msra.mxu0 %v2014
    %2247 = vmatpush.msra.mxu0 %v2010
    %2248 = vmatpush.msra.mxu0 %v2006
    %2249 = vmatpush.msra.mxu0 %v2002
    %2250 = vmatpush.msra.mxu0 %v1998
    %2251 = vmatpush.msra.mxu0 %v1994
    %2252 = vmatpush.msra.mxu0 %v1990
    %2253 = vmatpush.msra.mxu0 %v1986
    %2254 = vmatpush.msra.mxu0 %v1982
    %2255 = vmatpush.msra.mxu0 %v1978
    %2256 = vmatpush.msra.mxu0 %v1974
    %2257 = vmatpush.msra.mxu0 %v1970
    %2258 = vmatpush.msra.mxu0 %v1966
    %2259 = vmatpush.msra.mxu0 %v1962
    %2260 = vmatpush.msra.mxu0 %v1958
    %2261 = vmatpush.msra.mxu0 %v1954
    %2262 = vmatmul.f32.gmra.mxu0 %v1597
    %v2263 = vpop.f32.mrf.mxu0
    %v2264 = vadd.f32 %v2244, %v2263
    %2265 = vdwg.mxu0
    %2266 = vmatpush.msra.mxu0 %v2078
    %2267 = vmatpush.msra.mxu0 %v2074
    %2268 = vmatpush.msra.mxu0 %v2070
    %2269 = vmatpush.msra.mxu0 %v2066
    %2270 = vmatpush.msra.mxu0 %v2062
    %2271 = vmatpush.msra.mxu0 %v2058
    %2272 = vmatpush.msra.mxu0 %v2054
    %2273 = vmatpush.msra.mxu0 %v2050
    %2274 = vmatpush.msra.mxu0 %v2046
    %2275 = vmatpush.msra.mxu0 %v2042
    %2276 = vmatpush.msra.mxu0 %v2038
    %2277 = vmatpush.msra.mxu0 %v2034
    %2278 = vmatpush.msra.mxu0 %v2030
    %2279 = vmatpush.msra.mxu0 %v2026
    %2280 = vmatpush.msra.mxu0 %v2022
    %2281 = vmatpush.msra.mxu0 %v2018
    %2282 = vmatmul.f32.gmra.mxu0 %v1599
    %v2283 = vpop.f32.mrf.mxu0
    %v2284 = vadd.f32 %v2264, %v2283
    %2285 = vdwg.mxu0
    %2286 = vmatpush.msra.mxu0 %v2142
    %2287 = vmatpush.msra.mxu0 %v2138
    %2288 = vmatpush.msra.mxu0 %v2134
    %2289 = vmatpush.msra.mxu0 %v2130
    %2290 = vmatpush.msra.mxu0 %v2126
    %2291 = vmatpush.msra.mxu0 %v2122
    %2292 = vmatpush.msra.mxu0 %v2118
    %2293 = vmatpush.msra.mxu0 %v2114
    %2294 = vmatpush.msra.mxu0 %v2110
    %2295 = vmatpush.msra.mxu0 %v2106
    %2296 = vmatpush.msra.mxu0 %v2102
    %2297 = vmatpush.msra.mxu0 %v2098
    %2298 = vmatpush.msra.mxu0 %v2094
    %2299 = vmatpush.msra.mxu0 %v2090
    %2300 = vmatpush.msra.mxu0 %v2086
    %2301 = vmatpush.msra.mxu0 %v2082
    %2302 = vmatmul.f32.gmra.mxu0 %v1601
    %v2303 = vpop.f32.mrf.mxu0
    %v2304 = vadd.f32 %v2284, %v2303
    %2305 = vdwg.mxu0
    %2306 = vmatpush.msra.mxu0 %v1695
    %2307 = vmatpush.msra.mxu0 %v1691
    %2308 = vmatpush.msra.mxu0 %v1687
    %2309 = vmatpush.msra.mxu0 %v1683
    %2310 = vmatpush.msra.mxu0 %v1679
    %2311 = vmatpush.msra.mxu0 %v1675
    %2312 = vmatpush.msra.mxu0 %v1671
    %2313 = vmatpush.msra.mxu0 %v1667
    %2314 = vmatpush.msra.mxu0 %v1663
    %2315 = vmatpush.msra.mxu0 %v1659
    %2316 = vmatpush.msra.mxu0 %v1655
    %2317 = vmatpush.msra.mxu0 %v1651
    %2318 = vmatpush.msra.mxu0 %v1647
    %2319 = vmatpush.msra.mxu0 %v1643
    %2320 = vmatpush.msra.mxu0 %v1639
    %2321 = vmatpush.msra.mxu0 %v1635
    %2322 = vmatmul.f32.gmra.mxu0 %v1587
    %v2323 = vpop.f32.mrf.mxu0
    %v2324 = vadd.f32 0.0, %v2323
    %2325 = vdwg.mxu0
    %2326 = vmatpush.msra.mxu0 %v1759
    %2327 = vmatpush.msra.mxu0 %v1755
    %2328 = vmatpush.msra.mxu0 %v1751
    %2329 = vmatpush.msra.mxu0 %v1747
    %2330 = vmatpush.msra.mxu0 %v1743
    %2331 = vmatpush.msra.mxu0 %v1739
    %2332 = vmatpush.msra.mxu0 %v1735
    %2333 = vmatpush.msra.mxu0 %v1731
    %2334 = vmatpush.msra.mxu0 %v1727
    %2335 = vmatpush.msra.mxu0 %v1723
    %2336 = vmatpush.msra.mxu0 %v1719
    %2337 = vmatpush.msra.mxu0 %v1715
    %2338 = vmatpush.msra.mxu0 %v1711
    %2339 = vmatpush.msra.mxu0 %v1707
    %2340 = vmatpush.msra.mxu0 %v1703
    %2341 = vmatpush.msra.mxu0 %v1699
    %2342 = vmatmul.f32.gmra.mxu0 %v1589
    %v2343 = vpop.f32.mrf.mxu0
    %v2344 = vadd.f32 %v2324, %v2343
    %2345 = vdwg.mxu0
    %2346 = vmatpush.msra.mxu0 %v1823
    %2347 = vmatpush.msra.mxu0 %v1819
    %2348 = vmatpush.msra.mxu0 %v1815
    %2349 = vmatpush.msra.mxu0 %v1811
    %2350 = vmatpush.msra.mxu0 %v1807
    %2351 = vmatpush.msra.mxu0 %v1803
    %2352 = vmatpush.msra.mxu0 %v1799
    %2353 = vmatpush.msra.mxu0 %v1795
    %2354 = vmatpush.msra.mxu0 %v1791
    %2355 = vmatpush.msra.mxu0 %v1787
    %2356 = vmatpush.msra.mxu0 %v1783
    %2357 = vmatpush.msra.mxu0 %v1779
    %2358 = vmatpush.msra.mxu0 %v1775
    %2359 = vmatpush.msra.mxu0 %v1771
    %2360 = vmatpush.msra.mxu0 %v1767
    %2361 = vmatpush.msra.mxu0 %v1763
    %2362 = vmatmul.f32.gmra.mxu0 %v1591
    %v2363 = vpop.f32.mrf.mxu0
    %v2364 = vadd.f32 %v2344, %v2363
    %2365 = vdwg.mxu0
    %2366 = vmatpush.msra.mxu0 %v1887
    %2367 = vmatpush.msra.mxu0 %v1883
    %2368 = vmatpush.msra.mxu0 %v1879
    %2369 = vmatpush.msra.mxu0 %v1875
    %2370 = vmatpush.msra.mxu0 %v1871
    %2371 = vmatpush.msra.mxu0 %v1867
    %2372 = vmatpush.msra.mxu0 %v1863
    %2373 = vmatpush.msra.mxu0 %v1859
    %2374 = vmatpush.msra.mxu0 %v1855
    %2375 = vmatpush.msra.mxu0 %v1851
    %2376 = vmatpush.msra.mxu0 %v1847
    %2377 = vmatpush.msra.mxu0 %v1843
    %2378 = vmatpush.msra.mxu0 %v1839
    %2379 = vmatpush.msra.mxu0 %v1835
    %2380 = vmatpush.msra.mxu0 %v1831
    %2381 = vmatpush.msra.mxu0 %v1827
    %2382 = vmatmul.f32.gmra.mxu0 %v1593
    %v2383 = vpop.f32.mrf.mxu0
    %v2384 = vadd.f32 %v2364, %v2383
    %2385 = vdwg.mxu0
    %2386 = vmatpush.msra.mxu0 %v1951
    %2387 = vmatpush.msra.mxu0 %v1947
    %2388 = vmatpush.msra.mxu0 %v1943
    %2389 = vmatpush.msra.mxu0 %v1939
    %2390 = vmatpush.msra.mxu0 %v1935
    %2391 = vmatpush.msra.mxu0 %v1931
    %2392 = vmatpush.msra.mxu0 %v1927
    %2393 = vmatpush.msra.mxu0 %v1923
    %2394 = vmatpush.msra.mxu0 %v1919
    %2395 = vmatpush.msra.mxu0 %v1915
    %2396 = vmatpush.msra.mxu0 %v1911
    %2397 = vmatpush.msra.mxu0 %v1907
    %2398 = vmatpush.msra.mxu0 %v1903
    %2399 = vmatpush.msra.mxu0 %v1899
    %2400 = vmatpush.msra.mxu0 %v1895
    %2401 = vmatpush.msra.mxu0 %v1891
    %2402 = vmatmul.f32.gmra.mxu0 %v1595
    %v2403 = vpop.f32.mrf.mxu0
    %v2404 = vadd.f32 %v2384, %v2403
    %2405 = vdwg.mxu0
    %2406 = vmatpush.msra.mxu0 %v2015
    %2407 = vmatpush.msra.mxu0 %v2011
    %2408 = vmatpush.msra.mxu0 %v2007
    %2409 = vmatpush.msra.mxu0 %v2003
    %2410 = vmatpush.msra.mxu0 %v1999
    %2411 = vmatpush.msra.mxu0 %v1995
    %2412 = vmatpush.msra.mxu0 %v1991
    %2413 = vmatpush.msra.mxu0 %v1987
    %2414 = vmatpush.msra.mxu0 %v1983
    %2415 = vmatpush.msra.mxu0 %v1979
    %2416 = vmatpush.msra.mxu0 %v1975
    %2417 = vmatpush.msra.mxu0 %v1971
    %2418 = vmatpush.msra.mxu0 %v1967
    %2419 = vmatpush.msra.mxu0 %v1963
    %2420 = vmatpush.msra.mxu0 %v1959
    %2421 = vmatpush.msra.mxu0 %v1955
    %2422 = vmatmul.f32.gmra.mxu0 %v1597
    %v2423 = vpop.f32.mrf.mxu0
    %v2424 = vadd.f32 %v2404, %v2423
    %2425 = vdwg.mxu0
    %2426 = vmatpush.msra.mxu0 %v2079
    %2427 = vmatpush.msra.mxu0 %v2075
    %2428 = vmatpush.msra.mxu0 %v2071
    %2429 = vmatpush.msra.mxu0 %v2067
    %2430 = vmatpush.msra.mxu0 %v2063
    %2431 = vmatpush.msra.mxu0 %v2059
    %2432 = vmatpush.msra.mxu0 %v2055
    %2433 = vmatpush.msra.mxu0 %v2051
    %2434 = vmatpush.msra.mxu0 %v2047
    %2435 = vmatpush.msra.mxu0 %v2043
    %2436 = vmatpush.msra.mxu0 %v2039
    %2437 = vmatpush.msra.mxu0 %v2035
    %2438 = vmatpush.msra.mxu0 %v2031
    %2439 = vmatpush.msra.mxu0 %v2027
    %2440 = vmatpush.msra.mxu0 %v2023
    %2441 = vmatpush.msra.mxu0 %v2019
    %2442 = vmatmul.f32.gmra.mxu0 %v1599
    %v2443 = vpop.f32.mrf.mxu0
    %v2444 = vadd.f32 %v2424, %v2443
    %2445 = vdwg.mxu0
    %2446 = vmatpush.msra.mxu0 %v2143
    %2447 = vmatpush.msra.mxu0 %v2139
    %2448 = vmatpush.msra.mxu0 %v2135
    %2449 = vmatpush.msra.mxu0 %v2131
    %2450 = vmatpush.msra.mxu0 %v2127
    %2451 = vmatpush.msra.mxu0 %v2123
    %2452 = vmatpush.msra.mxu0 %v2119
    %2453 = vmatpush.msra.mxu0 %v2115
    %2454 = vmatpush.msra.mxu0 %v2111
    %2455 = vmatpush.msra.mxu0 %v2107
    %2456 = vmatpush.msra.mxu0 %v2103
    %2457 = vmatpush.msra.mxu0 %v2099
    %2458 = vmatpush.msra.mxu0 %v2095
    %2459 = vmatpush.msra.mxu0 %v2091
    %2460 = vmatpush.msra.mxu0 %v2087
    %2461 = vmatpush.msra.mxu0 %v2083
    %2462 = vmatmul.f32.gmra.mxu0 %v1601
    %v2463 = vpop.f32.mrf.mxu0
    %v2464 = vadd.f32 %v2444, %v2463
    %2465 = vdwg.mxu0
    %2466 = vmatpush.msra.mxu0 %v1696
    %2467 = vmatpush.msra.mxu0 %v1692
    %2468 = vmatpush.msra.mxu0 %v1688
    %2469 = vmatpush.msra.mxu0 %v1684
    %2470 = vmatpush.msra.mxu0 %v1680
    %2471 = vmatpush.msra.mxu0 %v1676
    %2472 = vmatpush.msra.mxu0 %v1672
    %2473 = vmatpush.msra.mxu0 %v1668
    %2474 = vmatpush.msra.mxu0 %v1664
    %2475 = vmatpush.msra.mxu0 %v1660
    %2476 = vmatpush.msra.mxu0 %v1656
    %2477 = vmatpush.msra.mxu0 %v1652
    %2478 = vmatpush.msra.mxu0 %v1648
    %2479 = vmatpush.msra.mxu0 %v1644
    %2480 = vmatpush.msra.mxu0 %v1640
    %2481 = vmatpush.msra.mxu0 %v1636
    %2482 = vmatmul.f32.gmra.mxu0 %v1587
    %v2483 = vpop.f32.mrf.mxu0
    %v2484 = vadd.f32 0.0, %v2483
    %2485 = vdwg.mxu0
    %2486 = vmatpush.msra.mxu0 %v1760
    %2487 = vmatpush.msra.mxu0 %v1756
    %2488 = vmatpush.msra.mxu0 %v1752
    %2489 = vmatpush.msra.mxu0 %v1748
    %2490 = vmatpush.msra.mxu0 %v1744
    %2491 = vmatpush.msra.mxu0 %v1740
    %2492 = vmatpush.msra.mxu0 %v1736
    %2493 = vmatpush.msra.mxu0 %v1732
    %2494 = vmatpush.msra.mxu0 %v1728
    %2495 = vmatpush.msra.mxu0 %v1724
    %2496 = vmatpush.msra.mxu0 %v1720
    %2497 = vmatpush.msra.mxu0 %v1716
    %2498 = vmatpush.msra.mxu0 %v1712
    %2499 = vmatpush.msra.mxu0 %v1708
    %2500 = vmatpush.msra.mxu0 %v1704
    %2501 = vmatpush.msra.mxu0 %v1700
    %2502 = vmatmul.f32.gmra.mxu0 %v1589
    %v2503 = vpop.f32.mrf.mxu0
    %v2504 = vadd.f32 %v2484, %v2503
    %2505 = vdwg.mxu0
    %2506 = vmatpush.msra.mxu0 %v1824
    %2507 = vmatpush.msra.mxu0 %v1820
    %2508 = vmatpush.msra.mxu0 %v1816
    %2509 = vmatpush.msra.mxu0 %v1812
    %2510 = vmatpush.msra.mxu0 %v1808
    %2511 = vmatpush.msra.mxu0 %v1804
    %2512 = vmatpush.msra.mxu0 %v1800
    %2513 = vmatpush.msra.mxu0 %v1796
    %2514 = vmatpush.msra.mxu0 %v1792
    %2515 = vmatpush.msra.mxu0 %v1788
    %2516 = vmatpush.msra.mxu0 %v1784
    %2517 = vmatpush.msra.mxu0 %v1780
    %2518 = vmatpush.msra.mxu0 %v1776
    %2519 = vmatpush.msra.mxu0 %v1772
    %2520 = vmatpush.msra.mxu0 %v1768
    %2521 = vmatpush.msra.mxu0 %v1764
    %2522 = vmatmul.f32.gmra.mxu0 %v1591
    %v2523 = vpop.f32.mrf.mxu0
    %v2524 = vadd.f32 %v2504, %v2523
    %2525 = vdwg.mxu0
    %2526 = vmatpush.msra.mxu0 %v1888
    %2527 = vmatpush.msra.mxu0 %v1884
    %2528 = vmatpush.msra.mxu0 %v1880
    %2529 = vmatpush.msra.mxu0 %v1876
    %2530 = vmatpush.msra.mxu0 %v1872
    %2531 = vmatpush.msra.mxu0 %v1868
    %2532 = vmatpush.msra.mxu0 %v1864
    %2533 = vmatpush.msra.mxu0 %v1860
    %2534 = vmatpush.msra.mxu0 %v1856
    %2535 = vmatpush.msra.mxu0 %v1852
    %2536 = vmatpush.msra.mxu0 %v1848
    %2537 = vmatpush.msra.mxu0 %v1844
    %2538 = vmatpush.msra.mxu0 %v1840
    %2539 = vmatpush.msra.mxu0 %v1836
    %2540 = vmatpush.msra.mxu0 %v1832
    %2541 = vmatpush.msra.mxu0 %v1828
    %2542 = vmatmul.f32.gmra.mxu0 %v1593
    %v2543 = vpop.f32.mrf.mxu0
    %v2544 = vadd.f32 %v2524, %v2543
    %2545 = vdwg.mxu0
    %2546 = vmatpush.msra.mxu0 %v1952
    %2547 = vmatpush.msra.mxu0 %v1948
    %2548 = vmatpush.msra.mxu0 %v1944
    %2549 = vmatpush.msra.mxu0 %v1940
    %2550 = vmatpush.msra.mxu0 %v1936
    %2551 = vmatpush.msra.mxu0 %v1932
    %2552 = vmatpush.msra.mxu0 %v1928
    %2553 = vmatpush.msra.mxu0 %v1924
    %2554 = vmatpush.msra.mxu0 %v1920
    %2555 = vmatpush.msra.mxu0 %v1916
    %2556 = vmatpush.msra.mxu0 %v1912
    %2557 = vmatpush.msra.mxu0 %v1908
    %2558 = vmatpush.msra.mxu0 %v1904
    %2559 = vmatpush.msra.mxu0 %v1900
    %2560 = vmatpush.msra.mxu0 %v1896
    %2561 = vmatpush.msra.mxu0 %v1892
    %2562 = vmatmul.f32.gmra.mxu0 %v1595
    %v2563 = vpop.f32.mrf.mxu0
    %v2564 = vadd.f32 %v2544, %v2563
    %2565 = vdwg.mxu0
    %2566 = vmatpush.msra.mxu0 %v2016
    %2567 = vmatpush.msra.mxu0 %v2012
    %2568 = vmatpush.msra.mxu0 %v2008
    %2569 = vmatpush.msra.mxu0 %v2004
    %2570 = vmatpush.msra.mxu0 %v2000
    %2571 = vmatpush.msra.mxu0 %v1996
    %2572 = vmatpush.msra.mxu0 %v1992
    %2573 = vmatpush.msra.mxu0 %v1988
    %2574 = vmatpush.msra.mxu0 %v1984
    %2575 = vmatpush.msra.mxu0 %v1980
    %2576 = vmatpush.msra.mxu0 %v1976
    %2577 = vmatpush.msra.mxu0 %v1972
    %2578 = vmatpush.msra.mxu0 %v1968
    %2579 = vmatpush.msra.mxu0 %v1964
    %2580 = vmatpush.msra.mxu0 %v1960
    %2581 = vmatpush.msra.mxu0 %v1956
    %2582 = vmatmul.f32.gmra.mxu0 %v1597
    %v2583 = vpop.f32.mrf.mxu0
    %v2584 = vadd.f32 %v2564, %v2583
    %2585 = vdwg.mxu0
    %2586 = vmatpush.msra.mxu0 %v2080
    %2587 = vmatpush.msra.mxu0 %v2076
    %2588 = vmatpush.msra.mxu0 %v2072
    %2589 = vmatpush.msra.mxu0 %v2068
    %2590 = vmatpush.msra.mxu0 %v2064
    %2591 = vmatpush.msra.mxu0 %v2060
    %2592 = vmatpush.msra.mxu0 %v2056
    %2593 = vmatpush.msra.mxu0 %v2052
    %2594 = vmatpush.msra.mxu0 %v2048
    %2595 = vmatpush.msra.mxu0 %v2044
    %2596 = vmatpush.msra.mxu0 %v2040
    %2597 = vmatpush.msra.mxu0 %v2036
    %2598 = vmatpush.msra.mxu0 %v2032
    %2599 = vmatpush.msra.mxu0 %v2028
    %2600 = vmatpush.msra.mxu0 %v2024
    %2601 = vmatpush.msra.mxu0 %v2020
    %2602 = vmatmul.f32.gmra.mxu0 %v1599
    %v2603 = vpop.f32.mrf.mxu0
    %v2604 = vadd.f32 %v2584, %v2603
    %2605 = vdwg.mxu0
    %2606 = vmatpush.msra.mxu0 %v2144
    %2607 = vmatpush.msra.mxu0 %v2140
    %2608 = vmatpush.msra.mxu0 %v2136
    %2609 = vmatpush.msra.mxu0 %v2132
    %2610 = vmatpush.msra.mxu0 %v2128
    %2611 = vmatpush.msra.mxu0 %v2124
    %2612 = vmatpush.msra.mxu0 %v2120
    %2613 = vmatpush.msra.mxu0 %v2116
    %2614 = vmatpush.msra.mxu0 %v2112
    %2615 = vmatpush.msra.mxu0 %v2108
    %2616 = vmatpush.msra.mxu0 %v2104
    %2617 = vmatpush.msra.mxu0 %v2100
    %2618 = vmatpush.msra.mxu0 %v2096
    %2619 = vmatpush.msra.mxu0 %v2092
    %2620 = vmatpush.msra.mxu0 %v2088
    %2621 = vmatpush.msra.mxu0 %v2084
    %2622 = vmatmul.f32.gmra.mxu0 %v1601
    %v2623 = vpop.f32.mrf.mxu0
    %v2624 = vadd.f32 %v2604, %v2623
    %2625 = vdwg.mxu0
    %2626 = vmatpush.msra.mxu0 %v1697
    %2627 = vmatpush.msra.mxu0 %v1693
    %2628 = vmatpush.msra.mxu0 %v1689
    %2629 = vmatpush.msra.mxu0 %v1685
    %2630 = vmatpush.msra.mxu0 %v1681
    %2631 = vmatpush.msra.mxu0 %v1677
    %2632 = vmatpush.msra.mxu0 %v1673
    %2633 = vmatpush.msra.mxu0 %v1669
    %2634 = vmatpush.msra.mxu0 %v1665
    %2635 = vmatpush.msra.mxu0 %v1661
    %2636 = vmatpush.msra.mxu0 %v1657
    %2637 = vmatpush.msra.mxu0 %v1653
    %2638 = vmatpush.msra.mxu0 %v1649
    %2639 = vmatpush.msra.mxu0 %v1645
    %2640 = vmatpush.msra.mxu0 %v1641
    %2641 = vmatpush.msra.mxu0 %v1637
    %2642 = vmatmul.f32.gmra.mxu0 %v1587
    %v2643 = vpop.f32.mrf.mxu0
    %v2644 = vadd.f32 0.0, %v2643
    %2645 = vdwg.mxu0
    %2646 = vmatpush.msra.mxu0 %v1761
    %2647 = vmatpush.msra.mxu0 %v1757
    %2648 = vmatpush.msra.mxu0 %v1753
    %2649 = vmatpush.msra.mxu0 %v1749
    %2650 = vmatpush.msra.mxu0 %v1745
    %2651 = vmatpush.msra.mxu0 %v1741
    %2652 = vmatpush.msra.mxu0 %v1737
    %2653 = vmatpush.msra.mxu0 %v1733
    %2654 = vmatpush.msra.mxu0 %v1729
    %2655 = vmatpush.msra.mxu0 %v1725
    %2656 = vmatpush.msra.mxu0 %v1721
    %2657 = vmatpush.msra.mxu0 %v1717
    %2658 = vmatpush.msra.mxu0 %v1713
    %2659 = vmatpush.msra.mxu0 %v1709
    %2660 = vmatpush.msra.mxu0 %v1705
    %2661 = vmatpush.msra.mxu0 %v1701
    %2662 = vmatmul.f32.gmra.mxu0 %v1589
    %v2663 = vpop.f32.mrf.mxu0
    %v2664 = vadd.f32 %v2644, %v2663
    %2665 = vdwg.mxu0
    %2666 = vmatpush.msra.mxu0 %v1825
    %2667 = vmatpush.msra.mxu0 %v1821
    %2668 = vmatpush.msra.mxu0 %v1817
    %2669 = vmatpush.msra.mxu0 %v1813
    %2670 = vmatpush.msra.mxu0 %v1809
    %2671 = vmatpush.msra.mxu0 %v1805
    %2672 = vmatpush.msra.mxu0 %v1801
    %2673 = vmatpush.msra.mxu0 %v1797
    %2674 = vmatpush.msra.mxu0 %v1793
    %2675 = vmatpush.msra.mxu0 %v1789
    %2676 = vmatpush.msra.mxu0 %v1785
    %2677 = vmatpush.msra.mxu0 %v1781
    %2678 = vmatpush.msra.mxu0 %v1777
    %2679 = vmatpush.msra.mxu0 %v1773
    %2680 = vmatpush.msra.mxu0 %v1769
    %2681 = vmatpush.msra.mxu0 %v1765
    %2682 = vmatmul.f32.gmra.mxu0 %v1591
    %v2683 = vpop.f32.mrf.mxu0
    %v2684 = vadd.f32 %v2664, %v2683
    %2685 = vdwg.mxu0
    %2686 = vmatpush.msra.mxu0 %v1889
    %2687 = vmatpush.msra.mxu0 %v1885
    %2688 = vmatpush.msra.mxu0 %v1881
    %2689 = vmatpush.msra.mxu0 %v1877
    %2690 = vmatpush.msra.mxu0 %v1873
    %2691 = vmatpush.msra.mxu0 %v1869
    %2692 = vmatpush.msra.mxu0 %v1865
    %2693 = vmatpush.msra.mxu0 %v1861
    %2694 = vmatpush.msra.mxu0 %v1857
    %2695 = vmatpush.msra.mxu0 %v1853
    %2696 = vmatpush.msra.mxu0 %v1849
    %2697 = vmatpush.msra.mxu0 %v1845
    %2698 = vmatpush.msra.mxu0 %v1841
    %2699 = vmatpush.msra.mxu0 %v1837
    %2700 = vmatpush.msra.mxu0 %v1833
    %2701 = vmatpush.msra.mxu0 %v1829
    %2702 = vmatmul.f32.gmra.mxu0 %v1593
    %v2703 = vpop.f32.mrf.mxu0
    %v2704 = vadd.f32 %v2684, %v2703
    %2705 = vdwg.mxu0
    %2706 = vmatpush.msra.mxu0 %v1953
    %2707 = vmatpush.msra.mxu0 %v1949
    %2708 = vmatpush.msra.mxu0 %v1945
    %2709 = vmatpush.msra.mxu0 %v1941
    %2710 = vmatpush.msra.mxu0 %v1937
    %2711 = vmatpush.msra.mxu0 %v1933
    %2712 = vmatpush.msra.mxu0 %v1929
    %2713 = vmatpush.msra.mxu0 %v1925
    %2714 = vmatpush.msra.mxu0 %v1921
    %2715 = vmatpush.msra.mxu0 %v1917
    %2716 = vmatpush.msra.mxu0 %v1913
    %2717 = vmatpush.msra.mxu0 %v1909
    %2718 = vmatpush.msra.mxu0 %v1905
    %2719 = vmatpush.msra.mxu0 %v1901
    %2720 = vmatpush.msra.mxu0 %v1897
    %2721 = vmatpush.msra.mxu0 %v1893
    %2722 = vmatmul.f32.gmra.mxu0 %v1595
    %v2723 = vpop.f32.mrf.mxu0
    %v2724 = vadd.f32 %v2704, %v2723
    %2725 = vdwg.mxu0
    %2726 = vmatpush.msra.mxu0 %v2017
    %2727 = vmatpush.msra.mxu0 %v2013
    %2728 = vmatpush.msra.mxu0 %v2009
    %2729 = vmatpush.msra.mxu0 %v2005
    %2730 = vmatpush.msra.mxu0 %v2001
    %2731 = vmatpush.msra.mxu0 %v1997
    %2732 = vmatpush.msra.mxu0 %v1993
    %2733 = vmatpush.msra.mxu0 %v1989
    %2734 = vmatpush.msra.mxu0 %v1985
    %2735 = vmatpush.msra.mxu0 %v1981
    %2736 = vmatpush.msra.mxu0 %v1977
    %2737 = vmatpush.msra.mxu0 %v1973
    %2738 = vmatpush.msra.mxu0 %v1969
    %2739 = vmatpush.msra.mxu0 %v1965
    %2740 = vmatpush.msra.mxu0 %v1961
    %2741 = vmatpush.msra.mxu0 %v1957
    %2742 = vmatmul.f32.gmra.mxu0 %v1597
    %v2743 = vpop.f32.mrf.mxu0
    %v2744 = vadd.f32 %v2724, %v2743
    %2745 = vdwg.mxu0
    %2746 = vmatpush.msra.mxu0 %v2081
    %2747 = vmatpush.msra.mxu0 %v2077
    %2748 = vmatpush.msra.mxu0 %v2073
    %2749 = vmatpush.msra.mxu0 %v2069
    %2750 = vmatpush.msra.mxu0 %v2065
    %2751 = vmatpush.msra.mxu0 %v2061
    %2752 = vmatpush.msra.mxu0 %v2057
    %2753 = vmatpush.msra.mxu0 %v2053
    %2754 = vmatpush.msra.mxu0 %v2049
    %2755 = vmatpush.msra.mxu0 %v2045
    %2756 = vmatpush.msra.mxu0 %v2041
    %2757 = vmatpush.msra.mxu0 %v2037
    %2758 = vmatpush.msra.mxu0 %v2033
    %2759 = vmatpush.msra.mxu0 %v2029
    %2760 = vmatpush.msra.mxu0 %v2025
    %2761 = vmatpush.msra.mxu0 %v2021
    %2762 = vmatmul.f32.gmra.mxu0 %v1599
    %v2763 = vpop.f32.mrf.mxu0
    %v2764 = vadd.f32 %v2744, %v2763
    %2765 = vdwg.mxu0
    %2766 = vmatpush.msra.mxu0 %v2145
    %2767 = vmatpush.msra.mxu0 %v2141
    %2768 = vmatpush.msra.mxu0 %v2137
    %2769 = vmatpush.msra.mxu0 %v2133
    %2770 = vmatpush.msra.mxu0 %v2129
    %2771 = vmatpush.msra.mxu0 %v2125
    %2772 = vmatpush.msra.mxu0 %v2121
    %2773 = vmatpush.msra.mxu0 %v2117
    %2774 = vmatpush.msra.mxu0 %v2113
    %2775 = vmatpush.msra.mxu0 %v2109
    %2776 = vmatpush.msra.mxu0 %v2105
    %2777 = vmatpush.msra.mxu0 %v2101
    %2778 = vmatpush.msra.mxu0 %v2097
    %2779 = vmatpush.msra.mxu0 %v2093
    %2780 = vmatpush.msra.mxu0 %v2089
    %2781 = vmatpush.msra.mxu0 %v2085
    %2782 = vmatmul.f32.gmra.mxu0 %v1601
    %v2783 = vpop.f32.mrf.mxu0
    %v2784 = vadd.f32 %v2764, %v2783
    %2785 = vdwg.mxu0
    %v2787 = vsel %vm173, %v195, 0
    %2789 = vmatpush.msra.mxu0 0.0
    %2790 = vmatpush.msra.mxu0 0.0
    %2791 = vmatpush.msra.mxu0 0.0
    %2792 = vmatpush.msra.mxu0 0.0
    %2793 = vmatpush.msra.mxu0 0.0
    %2794 = vmatpush.msra.mxu0 0.0
    %2795 = vmatpush.msra.mxu0 0.0
    %2796 = vmatpush.msra.mxu0 0.0
    %2797 = vmatpush.msra.mxu0 %v1630
    %2798 = vmatpush.msra.mxu0 %v1626
    %2799 = vmatpush.msra.mxu0 %v1622
    %2800 = vmatpush.msra.mxu0 %v1618
    %2801 = vmatpush.msra.mxu0 %v1614
    %2802 = vmatpush.msra.mxu0 %v1610
    %2803 = vmatpush.msra.mxu0 %v1606
    %2804 = vmatpush.msra.mxu0 %v1602
    %2805 = vmatmul.f32.gmra.mxu0 %v2787
    %v2806 = vpop.f32.mrf.mxu0
    %v2807 = vadd.f32 %v2304, %v2806
    %2808 = vdwg.mxu0
    %2809 = vmatpush.msra.mxu0 0.0
    %2810 = vmatpush.msra.mxu0 0.0
    %2811 = vmatpush.msra.mxu0 0.0
    %2812 = vmatpush.msra.mxu0 0.0
    %2813 = vmatpush.msra.mxu0 0.0
    %2814 = vmatpush.msra.mxu0 0.0
    %2815 = vmatpush.msra.mxu0 0.0
    %2816 = vmatpush.msra.mxu0 0.0
    %2817 = vmatpush.msra.mxu0 %v1631
    %2818 = vmatpush.msra.mxu0 %v1627
    %2819 = vmatpush.msra.mxu0 %v1623
    %2820 = vmatpush.msra.mxu0 %v1619
    %2821 = vmatpush.msra.mxu0 %v1615
    %2822 = vmatpush.msra.mxu0 %v1611
    %2823 = vmatpush.msra.mxu0 %v1607
    %2824 = vmatpush.msra.mxu0 %v1603
    %2825 = vmatmul.f32.gmra.mxu0 %v2787
    %v2826 = vpop.f32.mrf.mxu0
    %v2827 = vadd.f32 %v2464, %v2826
    %2828 = vdwg.mxu0
    %2829 = vmatpush.msra.mxu0 0.0
    %2830 = vmatpush.msra.mxu0 0.0
    %2831 = vmatpush.msra.mxu0 0.0
    %2832 = vmatpush.msra.mxu0 0.0
    %2833 = vmatpush.msra.mxu0 0.0
    %2834 = vmatpush.msra.mxu0 0.0
    %2835 = vmatpush.msra.mxu0 0.0
    %2836 = vmatpush.msra.mxu0 0.0
    %2837 = vmatpush.msra.mxu0 %v1632
    %2838 = vmatpush.msra.mxu0 %v1628
    %2839 = vmatpush.msra.mxu0 %v1624
    %2840 = vmatpush.msra.mxu0 %v1620
    %2841 = vmatpush.msra.mxu0 %v1616
    %2842 = vmatpush.msra.mxu0 %v1612
    %2843 = vmatpush.msra.mxu0 %v1608
    %2844 = vmatpush.msra.mxu0 %v1604
    %2845 = vmatmul.f32.gmra.mxu0 %v2787
    %v2846 = vpop.f32.mrf.mxu0
    %v2847 = vadd.f32 %v2624, %v2846
    %2848 = vdwg.mxu0
    %2849 = vmatpush.msra.mxu0 0.0
    %2850 = vmatpush.msra.mxu0 0.0
    %2851 = vmatpush.msra.mxu0 0.0
    %2852 = vmatpush.msra.mxu0 0.0
    %2853 = vmatpush.msra.mxu0 0.0
    %2854 = vmatpush.msra.mxu0 0.0
    %2855 = vmatpush.msra.mxu0 0.0
    %2856 = vmatpush.msra.mxu0 0.0
    %2857 = vmatpush.msra.mxu0 %v1633
    %2858 = vmatpush.msra.mxu0 %v1629
    %2859 = vmatpush.msra.mxu0 %v1625
    %2860 = vmatpush.msra.mxu0 %v1621
    %2861 = vmatpush.msra.mxu0 %v1617
    %2862 = vmatpush.msra.mxu0 %v1613
    %2863 = vmatpush.msra.mxu0 %v1609
    %2864 = vmatpush.msra.mxu0 %v1605
    %2865 = vmatmul.f32.gmra.mxu0 %v2787
    %v2866 = vpop.f32.mrf.mxu0
    %v2867 = vadd.f32 %v2784, %v2866
    %2868 = vdwg.mxu0
    %v2869 = vld [vmem:[%s13] sm:$0xf]
    %v2871 = vperm.slane %v2869, 0
    %v2872 = vperm.slane %v2869, 1
    %v2873 = vperm.slane %v2869, 2
    %v2874 = vperm.slane %v2869, 3
    %v2879 = vadd.f32 %v2807, %v2871
    %v2880 = vadd.f32 %v2827, %v2872
    %v2881 = vadd.f32 %v2847, %v2873
    %v2882 = vadd.f32 %v2867, %v2874
    %v2883 = vmax.f32 %v2879, 0.0
    %v2884 = vmax.f32 %v2880, 0.0
    %v2885 = vmax.f32 %v2881, 0.0
    %v2886 = vmax.f32 %v2882, 0.0
    %v2887 = vld [vmem:[%s14] sm:$0xff]
    %v2888 = vld [vmem:[%s14 + $0x8] sm:$0xff]
    %v2889 = vld [vmem:[%s14 + $0x10] sm:$0xff]
    %v2890 = vld [vmem:[%s14 + $0x18] sm:$0xff]
    %v2891 = vld [vmem:[%s14 + $0x20] sm:$0xff]
    %v2892 = vld [vmem:[%s14 + $0x28] sm:$0xff]
    %v2893 = vld [vmem:[%s14 + $0x30] sm:$0xff]
    %v2894 = vld [vmem:[%s14 + $0x38] sm:$0xff]
    %v2895 = vld [vmem:[%s14 + $0x40] sm:$0xff]
    %v2896 = vld [vmem:[%s14 + $0x48] sm:$0xff]
    %v2897 = vld [vmem:[%s14 + $0x50] sm:$0xff]
    %v2898 = vld [vmem:[%s14 + $0x58] sm:$0xff]
    %v2899 = vld [vmem:[%s14 + $0x60] sm:$0xff]
    %v2900 = vld [vmem:[%s14 + $0x68] sm:$0xff]
    %v2901 = vld [vmem:[%s14 + $0x70] sm:$0xff]
    %v2902 = vld [vmem:[%s14 + $0x78] sm:$0xff]
    %v2903 = vld [vmem:[%s14 + $0x80] sm:$0xff]
    %v2904 = vld [vmem:[%s14 + $0x88] sm:$0xff]
    %v2905 = vld [vmem:[%s14 + $0x90] sm:$0xff]
    %v2906 = vld [vmem:[%s14 + $0x98] sm:$0xff]
    %v2907 = vld [vmem:[%s14 + $0xa0] sm:$0xff]
    %v2908 = vld [vmem:[%s14 + $0xa8] sm:$0xff]
    %v2909 = vld [vmem:[%s14 + $0xb0] sm:$0xff]
    %v2910 = vld [vmem:[%s14 + $0xb8] sm:$0xff]
    %v2911 = vld [vmem:[%s14 + $0xc0] sm:$0xff]
    %v2912 = vld [vmem:[%s14 + $0xc8] sm:$0xff]
    %v2913 = vld [vmem:[%s14 + $0xd0] sm:$0xff]
    %v2914 = vld [vmem:[%s14 + $0xd8] sm:$0xff]
    %v2915 = vld [vmem:[%s14 + $0xe0] sm:$0xff]
    %v2916 = vld [vmem:[%s14 + $0xe8] sm:$0xff]
    %v2917 = vld [vmem:[%s14 + $0xf0] sm:$0xff]
    %v2918 = vld [vmem:[%s14 + $0xf8] sm:$0xff]
    %v2919 = vld [vmem:[%s14 + $0x100] sm:$0xff]
    %v2920 = vld [vmem:[%s14 + $0x108] sm:$0xff]
    %v2921 = vld [vmem:[%s14 + $0x110] sm:$0xff]
    %v2922 = vld [vmem:[%s14 + $0x118] sm:$0xff]
    %v2923 = vld [vmem:[%s14 + $0x120] sm:$0xff]
    %v2924 = vld [vmem:[%s14 + $0x128] sm:$0xff]
    %v2925 = vld [vmem:[%s14 + $0x130] sm:$0xff]
    %v2926 = vld [vmem:[%s14 + $0x138] sm:$0xff]
    %v2927 = vld [vmem:[%s14 + $0x140] sm:$0xff]
    %v2928 = vld [vmem:[%s14 + $0x148] sm:$0xff]
    %v2929 = vld [vmem:[%s14 + $0x150] sm:$0xff]
    %v2930 = vld [vmem:[%s14 + $0x158] sm:$0xff]
    %v2931 = vld [vmem:[%s14 + $0x160] sm:$0xff]
    %v2932 = vld [vmem:[%s14 + $0x168] sm:$0xff]
    %v2933 = vld [vmem:[%s14 + $0x170] sm:$0xff]
    %v2934 = vld [vmem:[%s14 + $0x178] sm:$0xff]
    %v2935 = vld [vmem:[%s14 + $0x180] sm:$0xff]
    %v2936 = vld [vmem:[%s14 + $0x188] sm:$0xff]
    %v2937 = vld [vmem:[%s14 + $0x190] sm:$0xff]
    %v2938 = vld [vmem:[%s14 + $0x198] sm:$0xff]
    %v2939 = vld [vmem:[%s14 + $0x1a0] sm:$0xff]
    %v2940 = vld [vmem:[%s14 + $0x1a8] sm:$0xff]
    %v2941 = vld [vmem:[%s14 + $0x1b0] sm:$0xff]
    %v2942 = vld [vmem:[%s14 + $0x1b8] sm:$0xff]
    %v2943 = vld [vmem:[%s14 + $0x1c0] sm:$0xff]
    %v2944 = vld [vmem:[%s14 + $0x1c8] sm:$0xff]
    %v2945 = vld [vmem:[%s14 + $0x1d0] sm:$0xff]
    %v2946 = vld [vmem:[%s14 + $0x1d8] sm:$0xff]
    %v2947 = vld [vmem:[%s14 + $0x1e0] sm:$0xff]
    %v2948 = vld [vmem:[%s14 + $0x1e8] sm:$0xff]
    %v2949 = vld [vmem:[%s14 + $0x1f0] sm:$0xff]
    %v2950 = vld [vmem:[%s14 + $0x1f8] sm:$0xff]
    %v2951 = vld [vmem:[#allocation8] sm:$0x1]
    %v2953 = vperm.slane %v2951, 0
    %2955 = vmatpush.msra.mxu0 %v2902
    %2956 = vmatpush.msra.mxu0 %v2901
    %2957 = vmatpush.msra.mxu0 %v2900
    %2958 = vmatpush.msra.mxu0 %v2899
    %2959 = vmatpush.msra.mxu0 %v2898
    %2960 = vmatpush.msra.mxu0 %v2897
    %2961 = vmatpush.msra.mxu0 %v2896
    %2962 = vmatpush.msra.mxu0 %v2895
    %2963 = vmatpush.msra.mxu0 %v2894
    %2964 = vmatpush.msra.mxu0 %v2893
    %2965 = vmatpush.msra.mxu0 %v2892
    %2966 = vmatpush.msra.mxu0 %v2891
    %2967 = vmatpush.msra.mxu0 %v2890
    %2968 = vmatpush.msra.mxu0 %v2889
    %2969 = vmatpush.msra.mxu0 %v2888
    %2970 = vmatpush.msra.mxu0 %v2887
    %2971 = vmatmul.f32.gmra.mxu0 %v2883
    %v2972 = vpop.f32.mrf.mxu0
    %v2973 = vadd.f32 %v2953, %v2972
    %2974 = vdwg.mxu0
    %2975 = vmatpush.msra.mxu0 %v2918
    %2976 = vmatpush.msra.mxu0 %v2917
    %2977 = vmatpush.msra.mxu0 %v2916
    %2978 = vmatpush.msra.mxu0 %v2915
    %2979 = vmatpush.msra.mxu0 %v2914
    %2980 = vmatpush.msra.mxu0 %v2913
    %2981 = vmatpush.msra.mxu0 %v2912
    %2982 = vmatpush.msra.mxu0 %v2911
    %2983 = vmatpush.msra.mxu0 %v2910
    %2984 = vmatpush.msra.mxu0 %v2909
    %2985 = vmatpush.msra.mxu0 %v2908
    %2986 = vmatpush.msra.mxu0 %v2907
    %2987 = vmatpush.msra.mxu0 %v2906
    %2988 = vmatpush.msra.mxu0 %v2905
    %2989 = vmatpush.msra.mxu0 %v2904
    %2990 = vmatpush.msra.mxu0 %v2903
    %2991 = vmatmul.f32.gmra.mxu0 %v2884
    %v2992 = vpop.f32.mrf.mxu0
    %v2993 = vadd.f32 %v2973, %v2992
    %2994 = vdwg.mxu0
    %2995 = vmatpush.msra.mxu0 %v2934
    %2996 = vmatpush.msra.mxu0 %v2933
    %2997 = vmatpush.msra.mxu0 %v2932
    %2998 = vmatpush.msra.mxu0 %v2931
    %2999 = vmatpush.msra.mxu0 %v2930
    %3000 = vmatpush.msra.mxu0 %v2929
    %3001 = vmatpush.msra.mxu0 %v2928
    %3002 = vmatpush.msra.mxu0 %v2927
    %3003 = vmatpush.msra.mxu0 %v2926
    %3004 = vmatpush.msra.mxu0 %v2925
    %3005 = vmatpush.msra.mxu0 %v2924
    %3006 = vmatpush.msra.mxu0 %v2923
    %3007 = vmatpush.msra.mxu0 %v2922
    %3008 = vmatpush.msra.mxu0 %v2921
    %3009 = vmatpush.msra.mxu0 %v2920
    %3010 = vmatpush.msra.mxu0 %v2919
    %3011 = vmatmul.f32.gmra.mxu0 %v2885
    %v3012 = vpop.f32.mrf.mxu0
    %v3013 = vadd.f32 %v2993, %v3012
    %3014 = vdwg.mxu0
    %3015 = vmatpush.msra.mxu0 %v2950
    %3016 = vmatpush.msra.mxu0 %v2949
    %3017 = vmatpush.msra.mxu0 %v2948
    %3018 = vmatpush.msra.mxu0 %v2947
    %3019 = vmatpush.msra.mxu0 %v2946
    %3020 = vmatpush.msra.mxu0 %v2945
    %3021 = vmatpush.msra.mxu0 %v2944
    %3022 = vmatpush.msra.mxu0 %v2943
    %3023 = vmatpush.msra.mxu0 %v2942
    %3024 = vmatpush.msra.mxu0 %v2941
    %3025 = vmatpush.msra.mxu0 %v2940
    %3026 = vmatpush.msra.mxu0 %v2939
    %3027 = vmatpush.msra.mxu0 %v2938
    %3028 = vmatpush.msra.mxu0 %v2937
    %3029 = vmatpush.msra.mxu0 %v2936
    %3030 = vmatpush.msra.mxu0 %v2935
    %3031 = vmatmul.f32.gmra.mxu0 %v2886
    %v3032 = vpop.f32.mrf.mxu0
    %v3033 = vadd.f32 %v3013, %v3032
    %3034 = vdwg.mxu0
    %v3035 = vmax.f32 %v3033, 0.0
    %v3036 = vld [vmem:[%s16] sm:$0xff]
    %v3037 = vld [vmem:[%s16 + $0x8] sm:$0xff]
    %v3038 = vld [vmem:[%s16 + $0x10] sm:$0xff]
    %v3039 = vld [vmem:[%s16 + $0x18] sm:$0xff]
    %v3040 = vld [vmem:[%s16 + $0x20] sm:$0xff]
    %v3041 = vld [vmem:[%s16 + $0x28] sm:$0xff]
    %v3042 = vld [vmem:[%s16 + $0x30] sm:$0xff]
    %v3043 = vld [vmem:[%s16 + $0x38] sm:$0xff]
    %v3044 = vld [vmem:[%s16 + $0x40] sm:$0xff]
    %v3045 = vld [vmem:[%s16 + $0x48] sm:$0xff]
    %v3046 = vld [vmem:[%s16 + $0x50] sm:$0xff]
    %v3047 = vld [vmem:[%s16 + $0x58] sm:$0xff]
    %v3048 = vld [vmem:[%s16 + $0x60] sm:$0xff]
    %v3049 = vld [vmem:[%s16 + $0x68] sm:$0xff]
    %v3050 = vld [vmem:[%s16 + $0x70] sm:$0xff]
    %v3051 = vld [vmem:[%s16 + $0x78] sm:$0xff]
    %v3052 = vld [vmem:[#allocation2] sm:$0x1]
    %v3054 = vperm.slane %v3052, 0
    %3056 = vmatpush.msra.mxu0 %v3051
    %3057 = vmatpush.msra.mxu0 %v3050
    %3058 = vmatpush.msra.mxu0 %v3049
    %3059 = vmatpush.msra.mxu0 %v3048
    %3060 = vmatpush.msra.mxu0 %v3047
    %3061 = vmatpush.msra.mxu0 %v3046
    %3062 = vmatpush.msra.mxu0 %v3045
    %3063 = vmatpush.msra.mxu0 %v3044
    %3064 = vmatpush.msra.mxu0 %v3043
    %3065 = vmatpush.msra.mxu0 %v3042
    %3066 = vmatpush.msra.mxu0 %v3041
    %3067 = vmatpush.msra.mxu0 %v3040
    %3068 = vmatpush.msra.mxu0 %v3039
    %3069 = vmatpush.msra.mxu0 %v3038
    %3070 = vmatpush.msra.mxu0 %v3037
    %3071 = vmatpush.msra.mxu0 %v3036
    %3072 = vmatmul.f32.gmra.mxu0 %v3035
    %v3073 = vpop.f32.mrf.mxu0
    %v3074 = vadd.f32 %v3054, %v3073
    %3075 = vdwg.mxu0
    %vm3076 = vcmask 7168
    %3077 = vst.msk [vmem:[%s18] sm:$0xff] %vm3076, %v3074
    // Predicated region
    $region90: #{dcnn_forward.1} parent=1 // pred_check
      _
    $region91: #{dcnn_forward.1} parent=1 // pred_check_branch
      %3079 = sbr.rel (0) target = $region93
    $region92: #{dcnn_forward.1} parent=1 // pred_region
      _
    $region93: #{dcnn_forward.1} parent=1 // pred_fallthru
      _
    // Predicated region
    $region94: #{dcnn_forward.1} parent=1 // pred_check
      _
    $region95: #{dcnn_forward.1} parent=1 // pred_check_branch
      %3081 = sbr.rel (0) target = $region97
    $region96: #{dcnn_forward.1} parent=1 // pred_region
      _
    $region97: #{dcnn_forward.1} parent=1 // pred_fallthru
      _
    %3082 = vsyncpa [#allocation4], 1
    %3083 = vsyncpa [#allocation6], 1
    %3084 = vsyncpa [#allocation9], 1

</llo_original>
